<compile_context>
chip_gen: v6e
topology: v6e:2x2x1
jax: 0.10.0
libtpu: 0.0.40
codegen_flags: <defaults>
</compile_context>

<pallas_src>
import functools

import jax
import jax.numpy as jnp
from jax.experimental import pallas as pl
from jax.experimental.pallas import tpu as pltpu


def attention_kernel(*refs, num_heads, has_qkv_bias):
    if has_qkv_bias:
        x_ref, wqkv_ref, bqkv_ref, wproj_h_ref, bproj_ref, o_ref = refs
    else:
        x_ref, wqkv_ref, wproj_h_ref, bproj_ref, o_ref = refs
        bqkv_ref = None

    Bt, N, C = x_ref.shape
    hd = C // num_heads

    # Merge batch rows so the projection matmuls see Bt*N MXU rows.
    x = x_ref[...].reshape(Bt * N, C)

    # qkv projection.  The softmax scale is already folded into the q columns
    # of W_qkv / b_qkv by the wrapper, so no activation scaling happens here.
    qkv = jnp.dot(x, wqkv_ref[...], preferred_element_type=jnp.float32)
    if has_qkv_bias:
        qkv = qkv + bqkv_ref[...]

    # Head-major operands (num_heads*Bt, N, hd), built from lane slices plus a
    # leading-axis stack only (group index g = h*Bt + b).
    def heads(off):
        parts = [qkv[:, off + h * hd: off + (h + 1) * hd].reshape(1, Bt, N, hd)
                 for h in range(num_heads)]
        return jnp.concatenate(parts, axis=0).reshape(num_heads * Bt, N, hd)

    q = heads(0)
    k = heads(C)
    v = heads(2 * C)

    # One batched MXU contraction per stage (no per-head Python loop).
    s = jnp.einsum('gqd,gkd->gqk', q, k,
                   preferred_element_type=jnp.float32)          # (G, N, N)
    s = s - jnp.max(s, axis=-1, keepdims=True)
    e = jnp.exp(s)
    # EUP reciprocal + VPU multiply instead of an (N, N)-wide divide.
    p = e * pl.reciprocal(jnp.sum(e, axis=-1, keepdims=True), approx=True)

    o = jnp.einsum('gqk,gkd->gqd', p, v,
                   preferred_element_type=jnp.float32)          # (G, N, hd)

    # Output projection, batched per head against the (nh, hd, C) weight view
    # and reduced over heads -- avoids the lane-wise concat of head outputs.
    o = o.reshape(num_heads, Bt * N, hd)                        # rows = b*N+n
    yh = jnp.einsum('hrd,hdc->hrc', o, wproj_h_ref[...],
                    preferred_element_type=jnp.float32)         # (nh, Bt*N, C)
    y = jnp.sum(yh, axis=0) + bproj_ref[...]                    # (Bt*N, C)

    o_ref[...] = y.astype(o_ref.dtype).reshape(o_ref.shape)


def attention_pallas(x, params, *, num_heads=8, qkv_bias=False, qk_scale=None,
                     batch_block=None):
    """x: (B, C, H, W) NCHW.  Returns (B, C, H, W)."""
    B, C, H, W = x.shape
    N = H * W
    hd = C // num_heads
    scale = qk_scale if qk_scale is not None else hd ** (-0.5)
    wqkv_t, bqkv, wproj_t, bproj = params        # (C,3C), (3C,), (C,C), (C,)

    # One-time weight preprocessing: fold the softmax scale into the q columns
    # of the qkv projection (and its bias).
    wqkv_t = wqkv_t.at[:, :C].multiply(scale)
    bqkv = bqkv.at[:C].multiply(scale)
    # Head view of the projection weight: rows h*hd:(h+1)*hd -> (nh, hd, C).
    wproj_h = wproj_t.reshape(num_heads, hd, C)

    if batch_block is None:
        # Merge batch elements per grid step so the projections see ~128 MXU
        # rows, but keep >= 2 parallel grid steps when possible (v7x: 2 TCs).
        bt = min(B, max(1, 128 // N)) if N < 128 else 1
        while bt > 1 and (B % bt != 0 or B // bt < 2):
            bt -= 1
        batch_block = max(1, bt)
    assert B % batch_block == 0, "batch_block must divide B"

    # 'n c h w -> n (h w) c': tokens with C on the lane axis.
    x_tok = jnp.transpose(x.reshape(B, C, N), (0, 2, 1))

    in_specs = [
        pl.BlockSpec((batch_block, N, C), lambda b: (b, 0, 0)),      # tokens
        pl.BlockSpec((C, 3 * C), lambda b: (0, 0)),                  # W_qkv^T
    ]
    args = [x_tok, wqkv_t]
    if qkv_bias:
        in_specs.append(pl.BlockSpec((1, 3 * C), lambda b: (0, 0)))  # b_qkv
        args.append(bqkv.reshape(1, 3 * C))
    in_specs += [
        pl.BlockSpec((num_heads, hd, C), lambda b: (0, 0, 0)),       # W_proj heads
        pl.BlockSpec((1, C), lambda b: (0, 0)),                      # b_proj
    ]
    args += [wproj_h, bproj.reshape(1, C)]

    y_tok = pl.pallas_call(
        functools.partial(attention_kernel, num_heads=num_heads,
                          has_qkv_bias=qkv_bias),
        out_shape=jax.ShapeDtypeStruct((B, N, C), x.dtype),
        grid=(B // batch_block,),
        in_specs=in_specs,
        out_specs=pl.BlockSpec((batch_block, N, C), lambda b: (b, 0, 0)),
        compiler_params=pltpu.CompilerParams(
            dimension_semantics=("parallel",)),
    )(*args)

    # 'n (h w) c -> n c h w'
    return jnp.transpose(y_tok, (0, 2, 1)).reshape(B, C, H, W)


# ---------------- parameter construction (plain JAX glue) ----------------

def make_params(key, C, *, qkv_bias=False):
    k0, k1, k2, k3 = jax.random.split(key, 4)
    # PyTorch nn.Linear weight is (out, in); we keep the transposed (in, out)
    # layout so the kernel computes x @ W^T directly.
    wqkv_t = 0.2 * jax.random.normal(k0, (C, 3 * C), dtype=jnp.float32)
    wproj_t = 0.2 * jax.random.normal(k1, (C, C), dtype=jnp.float32)
    bqkv = (0.1 * jax.random.normal(k2, (3 * C,), dtype=jnp.float32)
            if qkv_bias else jnp.zeros((3 * C,), dtype=jnp.float32))
    bproj = 0.1 * jax.random.normal(k3, (C,), dtype=jnp.float32)
    return wqkv_t, bqkv, wproj_t, bproj


# ---------------- pure-JAX reference (correctness check) ----------------

def attention_ref(x, params, *, num_heads=8, qk_scale=None):
    B, C, H, W = x.shape
    N = H * W
    hd = C // num_heads
    scale = qk_scale if qk_scale is not None else hd ** (-0.5)
    wqkv_t, bqkv, wproj_t, bproj = params

    xt = jnp.transpose(x.reshape(B, C, N), (0, 2, 1))      # (B, N, C)
    qkv = xt @ wqkv_t + bqkv                               # (B, N, 3C)
    qkv = qkv.reshape(B, N, 3, num_heads, hd).transpose(2, 0, 3, 1, 4)
    q, k, v = qkv[0], qkv[1], qkv[2]                       # (B, nh, N, hd)

    attn = jnp.einsum('bhnd,bhmd->bhnm', q, k) * scale
    attn = jax.nn.softmax(attn, axis=-1)
    o = jnp.einsum('bhnm,bhmd->bhnd', attn, v)
    o = o.transpose(0, 2, 1, 3).reshape(B, N, C)
    y = o @ wproj_t + bproj
    return jnp.transpose(y, (0, 2, 1)).reshape(B, C, H, W)


if __name__ == "__main__":
    # dim divisible by num_heads=8 -> dim=32, head_dim=4; spatial 8x8 -> N=64.
    B, C, H, W = 2, 32, 8, 8
    num_heads = 8

    key = jax.random.PRNGKey(0)
    kx, kp = jax.random.split(key)
    x = jax.random.normal(kx, (B, C, H, W), dtype=jnp.float32)

    for qkv_bias in (False, True):
        params = make_params(kp, C, qkv_bias=qkv_bias)
        out = jax.block_until_ready(
            attention_pallas(x, params, num_heads=num_heads, qkv_bias=qkv_bias))
        ref = jax.block_until_ready(
            attention_ref(x, params, num_heads=num_heads))
        assert out.shape == (B, C, H, W) and out.dtype == jnp.float32
        err = float(jnp.max(jnp.abs(out - ref)))
        assert jnp.allclose(out, ref, atol=2e-3, rtol=2e-3), err

    print("KERNEL_OK")
</pallas_src>

<mosaic_0001>
module attributes {stable_mosaic.version = 11 : i64} {
  func.func @attention_kernel(%arg0: i32, %arg1: memref<1x64x32xf32, #tpu.memory_space<vmem>>, %arg2: memref<32x96xf32, #tpu.memory_space<vmem>>, %arg3: memref<8x4x32xf32, #tpu.memory_space<vmem>>, %arg4: memref<1x32xf32, #tpu.memory_space<vmem>>, %arg5: memref<1x64x32xf32, #tpu.memory_space<vmem>>) attributes {dimension_semantics = [#tpu.dimension_semantics<parallel>], iteration_bounds = array<i64: 2>, scalar_prefetch = 0 : i64, scratch_operands = 0 : i64, tpu.core_type = #tpu.core_type<tc>, window_params = [{transform_indices = @transform_0, window_bounds = array<i64: 1, 64, 32>}, {pipeline_mode = #tpu.pipeline_mode<synchronous>, transform_indices = @transform_1, window_bounds = array<i64: 32, 96>}, {pipeline_mode = #tpu.pipeline_mode<synchronous>, transform_indices = @transform_2, window_bounds = array<i64: 8, 4, 32>}, {pipeline_mode = #tpu.pipeline_mode<synchronous>, transform_indices = @transform_3, window_bounds = array<i64: 1, 32>}, {transform_indices = @transform_4, window_bounds = array<i64: 1, 64, 32>}]} {
    %c0 = arith.constant 0 : index
    %c0_0 = arith.constant 0 : index
    %c0_1 = arith.constant 0 : index
    %0 = vector.load %arg1[%c0, %c0_0, %c0_1] : memref<1x64x32xf32, #tpu.memory_space<vmem>>, vector<1x64x32xf32>
    %1 = vector.shape_cast %0 : vector<1x64x32xf32> to vector<64x32xf32>
    %c0_2 = arith.constant 0 : index
    %c0_3 = arith.constant 0 : index
    %2 = vector.load %arg2[%c0_2, %c0_3] : memref<32x96xf32, #tpu.memory_space<vmem>>, vector<32x96xf32>
    %cst = arith.constant dense<0.000000e+00> : vector<64x96xf32>
    %3 = tpu.matmul %1, %2, %cst {dimension_numbers = #tpu.dot_dimension_numbers<[1], [0], [0], [1], [0, 0, 1, 1], [], []>} : vector<64x32xf32>, vector<32x96xf32>, vector<64x96xf32> -> vector<64x96xf32>
    %4 = vector.extract_strided_slice %3 {offsets = [0, 0], sizes = [64, 4], strides = [1, 1]} : vector<64x96xf32> to vector<64x4xf32>
    %5 = vector.shape_cast %4 : vector<64x4xf32> to vector<1x1x64x4xf32>
    %6 = vector.extract_strided_slice %3 {offsets = [0, 4], sizes = [64, 4], strides = [1, 1]} : vector<64x96xf32> to vector<64x4xf32>
    %7 = vector.shape_cast %6 : vector<64x4xf32> to vector<1x1x64x4xf32>
    %8 = vector.extract_strided_slice %3 {offsets = [0, 8], sizes = [64, 4], strides = [1, 1]} : vector<64x96xf32> to vector<64x4xf32>
    %9 = vector.shape_cast %8 : vector<64x4xf32> to vector<1x1x64x4xf32>
    %10 = vector.extract_strided_slice %3 {offsets = [0, 12], sizes = [64, 4], strides = [1, 1]} : vector<64x96xf32> to vector<64x4xf32>
    %11 = vector.shape_cast %10 : vector<64x4xf32> to vector<1x1x64x4xf32>
    %12 = vector.extract_strided_slice %3 {offsets = [0, 16], sizes = [64, 4], strides = [1, 1]} : vector<64x96xf32> to vector<64x4xf32>
    %13 = vector.shape_cast %12 : vector<64x4xf32> to vector<1x1x64x4xf32>
    %14 = vector.extract_strided_slice %3 {offsets = [0, 20], sizes = [64, 4], strides = [1, 1]} : vector<64x96xf32> to vector<64x4xf32>
    %15 = vector.shape_cast %14 : vector<64x4xf32> to vector<1x1x64x4xf32>
    %16 = vector.extract_strided_slice %3 {offsets = [0, 24], sizes = [64, 4], strides = [1, 1]} : vector<64x96xf32> to vector<64x4xf32>
    %17 = vector.shape_cast %16 : vector<64x4xf32> to vector<1x1x64x4xf32>
    %18 = vector.extract_strided_slice %3 {offsets = [0, 28], sizes = [64, 4], strides = [1, 1]} : vector<64x96xf32> to vector<64x4xf32>
    %19 = vector.shape_cast %18 : vector<64x4xf32> to vector<1x1x64x4xf32>
    %20 = tpu.concatenate %5, %7, %9, %11, %13, %15, %17, %19 in 0 : vector<1x1x64x4xf32>, vector<1x1x64x4xf32>, vector<1x1x64x4xf32>, vector<1x1x64x4xf32>, vector<1x1x64x4xf32>, vector<1x1x64x4xf32>, vector<1x1x64x4xf32>, vector<1x1x64x4xf32> -> vector<8x1x64x4xf32>
    %21 = vector.shape_cast %20 : vector<8x1x64x4xf32> to vector<8x64x4xf32>
    %22 = vector.extract_strided_slice %3 {offsets = [0, 32], sizes = [64, 4], strides = [1, 1]} : vector<64x96xf32> to vector<64x4xf32>
    %23 = vector.shape_cast %22 : vector<64x4xf32> to vector<1x1x64x4xf32>
    %24 = vector.extract_strided_slice %3 {offsets = [0, 36], sizes = [64, 4], strides = [1, 1]} : vector<64x96xf32> to vector<64x4xf32>
    %25 = vector.shape_cast %24 : vector<64x4xf32> to vector<1x1x64x4xf32>
    %26 = vector.extract_strided_slice %3 {offsets = [0, 40], sizes = [64, 4], strides = [1, 1]} : vector<64x96xf32> to vector<64x4xf32>
    %27 = vector.shape_cast %26 : vector<64x4xf32> to vector<1x1x64x4xf32>
    %28 = vector.extract_strided_slice %3 {offsets = [0, 44], sizes = [64, 4], strides = [1, 1]} : vector<64x96xf32> to vector<64x4xf32>
    %29 = vector.shape_cast %28 : vector<64x4xf32> to vector<1x1x64x4xf32>
    %30 = vector.extract_strided_slice %3 {offsets = [0, 48], sizes = [64, 4], strides = [1, 1]} : vector<64x96xf32> to vector<64x4xf32>
    %31 = vector.shape_cast %30 : vector<64x4xf32> to vector<1x1x64x4xf32>
    %32 = vector.extract_strided_slice %3 {offsets = [0, 52], sizes = [64, 4], strides = [1, 1]} : vector<64x96xf32> to vector<64x4xf32>
    %33 = vector.shape_cast %32 : vector<64x4xf32> to vector<1x1x64x4xf32>
    %34 = vector.extract_strided_slice %3 {offsets = [0, 56], sizes = [64, 4], strides = [1, 1]} : vector<64x96xf32> to vector<64x4xf32>
    %35 = vector.shape_cast %34 : vector<64x4xf32> to vector<1x1x64x4xf32>
    %36 = vector.extract_strided_slice %3 {offsets = [0, 60], sizes = [64, 4], strides = [1, 1]} : vector<64x96xf32> to vector<64x4xf32>
    %37 = vector.shape_cast %36 : vector<64x4xf32> to vector<1x1x64x4xf32>
    %38 = tpu.concatenate %23, %25, %27, %29, %31, %33, %35, %37 in 0 : vector<1x1x64x4xf32>, vector<1x1x64x4xf32>, vector<1x1x64x4xf32>, vector<1x1x64x4xf32>, vector<1x1x64x4xf32>, vector<1x1x64x4xf32>, vector<1x1x64x4xf32>, vector<1x1x64x4xf32> -> vector<8x1x64x4xf32>
    %39 = vector.shape_cast %38 : vector<8x1x64x4xf32> to vector<8x64x4xf32>
    %40 = vector.extract_strided_slice %3 {offsets = [0, 64], sizes = [64, 4], strides = [1, 1]} : vector<64x96xf32> to vector<64x4xf32>
    %41 = vector.shape_cast %40 : vector<64x4xf32> to vector<1x1x64x4xf32>
    %42 = vector.extract_strided_slice %3 {offsets = [0, 68], sizes = [64, 4], strides = [1, 1]} : vector<64x96xf32> to vector<64x4xf32>
    %43 = vector.shape_cast %42 : vector<64x4xf32> to vector<1x1x64x4xf32>
    %44 = vector.extract_strided_slice %3 {offsets = [0, 72], sizes = [64, 4], strides = [1, 1]} : vector<64x96xf32> to vector<64x4xf32>
    %45 = vector.shape_cast %44 : vector<64x4xf32> to vector<1x1x64x4xf32>
    %46 = vector.extract_strided_slice %3 {offsets = [0, 76], sizes = [64, 4], strides = [1, 1]} : vector<64x96xf32> to vector<64x4xf32>
    %47 = vector.shape_cast %46 : vector<64x4xf32> to vector<1x1x64x4xf32>
    %48 = vector.extract_strided_slice %3 {offsets = [0, 80], sizes = [64, 4], strides = [1, 1]} : vector<64x96xf32> to vector<64x4xf32>
    %49 = vector.shape_cast %48 : vector<64x4xf32> to vector<1x1x64x4xf32>
    %50 = vector.extract_strided_slice %3 {offsets = [0, 84], sizes = [64, 4], strides = [1, 1]} : vector<64x96xf32> to vector<64x4xf32>
    %51 = vector.shape_cast %50 : vector<64x4xf32> to vector<1x1x64x4xf32>
    %52 = vector.extract_strided_slice %3 {offsets = [0, 88], sizes = [64, 4], strides = [1, 1]} : vector<64x96xf32> to vector<64x4xf32>
    %53 = vector.shape_cast %52 : vector<64x4xf32> to vector<1x1x64x4xf32>
    %54 = vector.extract_strided_slice %3 {offsets = [0, 92], sizes = [64, 4], strides = [1, 1]} : vector<64x96xf32> to vector<64x4xf32>
    %55 = vector.shape_cast %54 : vector<64x4xf32> to vector<1x1x64x4xf32>
    %56 = tpu.concatenate %41, %43, %45, %47, %49, %51, %53, %55 in 0 : vector<1x1x64x4xf32>, vector<1x1x64x4xf32>, vector<1x1x64x4xf32>, vector<1x1x64x4xf32>, vector<1x1x64x4xf32>, vector<1x1x64x4xf32>, vector<1x1x64x4xf32>, vector<1x1x64x4xf32> -> vector<8x1x64x4xf32>
    %57 = vector.shape_cast %56 : vector<8x1x64x4xf32> to vector<8x64x4xf32>
    "tpu.trace_start"() <{level = 10 : i32, message = "gqd,gkd->gqk"}> : () -> ()
    %cst_4 = arith.constant dense<0.000000e+00> : vector<8x64x64xf32>
    %58 = tpu.matmul %21, %39, %cst_4 {dimension_numbers = #tpu.dot_dimension_numbers<[2], [2], [1], [1], [0, 0, 0, 1, 1, 1], [0], [0]>} : vector<8x64x4xf32>, vector<8x64x4xf32>, vector<8x64x64xf32> -> vector<8x64x64xf32>
    "tpu.trace_stop"() : () -> ()
    %cst_5 = arith.constant dense<0xFF800000> : vector<8x64xf32>
    %59 = vector.multi_reduction <maximumf>, %58, %cst_5 [2] : vector<8x64x64xf32> to vector<8x64xf32>
    %60 = vector.shape_cast %59 : vector<8x64xf32> to vector<8x64x1xf32>
    %61 = vector.broadcast %60 : vector<8x64x1xf32> to vector<8x64x64xf32>
    %62 = arith.subf %58, %61 : vector<8x64x64xf32>
    %63 = math.exp %62 : vector<8x64x64xf32>
    %cst_6 = arith.constant dense<0.000000e+00> : vector<8x64xf32>
    %64 = vector.multi_reduction <add>, %63, %cst_6 [2] : vector<8x64x64xf32> to vector<8x64xf32>
    %65 = vector.shape_cast %64 : vector<8x64xf32> to vector<8x64x1xf32>
    %66 = tpu.reciprocal %65 {approx = true} : vector<8x64x1xf32> -> vector<8x64x1xf32>
    %67 = vector.broadcast %66 : vector<8x64x1xf32> to vector<8x64x64xf32>
    %68 = arith.mulf %63, %67 : vector<8x64x64xf32>
    "tpu.trace_start"() <{level = 10 : i32, message = "gqk,gkd->gqd"}> : () -> ()
    %cst_7 = arith.constant dense<0.000000e+00> : vector<8x64x4xf32>
    %69 = tpu.matmul %68, %57, %cst_7 {dimension_numbers = #tpu.dot_dimension_numbers<[2], [1], [1], [2], [0, 0, 0, 1, 1, 2], [0], [0]>} : vector<8x64x64xf32>, vector<8x64x4xf32>, vector<8x64x4xf32> -> vector<8x64x4xf32>
    "tpu.trace_stop"() : () -> ()
    %c0_8 = arith.constant 0 : index
    %c0_9 = arith.constant 0 : index
    %c0_10 = arith.constant 0 : index
    %70 = vector.load %arg3[%c0_8, %c0_9, %c0_10] : memref<8x4x32xf32, #tpu.memory_space<vmem>>, vector<8x4x32xf32>
    "tpu.trace_start"() <{level = 10 : i32, message = "hrd,hdc->hrc"}> : () -> ()
    %cst_11 = arith.constant dense<0.000000e+00> : vector<8x64x32xf32>
    %71 = tpu.matmul %69, %70, %cst_11 {dimension_numbers = #tpu.dot_dimension_numbers<[2], [1], [1], [2], [0, 0, 0, 1, 1, 2], [0], [0]>} : vector<8x64x4xf32>, vector<8x4x32xf32>, vector<8x64x32xf32> -> vector<8x64x32xf32>
    "tpu.trace_stop"() : () -> ()
    %cst_12 = arith.constant dense<0.000000e+00> : vector<64x32xf32>
    %72 = vector.multi_reduction <add>, %71, %cst_12 [0] : vector<8x64x32xf32> to vector<64x32xf32>
    %c0_13 = arith.constant 0 : index
    %c0_14 = arith.constant 0 : index
    %73 = vector.load %arg4[%c0_13, %c0_14] : memref<1x32xf32, #tpu.memory_space<vmem>>, vector<1x32xf32>
    %74 = vector.broadcast %73 : vector<1x32xf32> to vector<64x32xf32>
    %75 = arith.addf %72, %74 : vector<64x32xf32>
    %76 = vector.shape_cast %75 : vector<64x32xf32> to vector<1x64x32xf32>
    %c0_15 = arith.constant 0 : index
    %c0_16 = arith.constant 0 : index
    %c0_17 = arith.constant 0 : index
    %77 = vector.load %arg5[%c0_15, %c0_16, %c0_17] : memref<1x64x32xf32, #tpu.memory_space<vmem>>, vector<1x64x32xf32>
    tpu.vector_store %arg5[%c0_15, %c0_16, %c0_17], %76 {strides = array<i32>} : memref<1x64x32xf32, #tpu.memory_space<vmem>>, vector<1x64x32xf32>,
    return
  }
  func.func @transform_0(%arg0: i32) -> (i32, i32, i32) {
    %c0_i32 = arith.constant 0 : i32
    %c0_i32_0 = arith.constant 0 : i32
    %c0_i32_1 = arith.constant 0 : i32
    return %arg0, %c0_i32, %c0_i32_0 : i32, i32, i32
  }
  func.func @transform_1(%arg0: i32) -> (i32, i32) {
    %c0_i32 = arith.constant 0 : i32
    %c0_i32_0 = arith.constant 0 : i32
    %c0_i32_1 = arith.constant 0 : i32
    return %c0_i32, %c0_i32_0 : i32, i32
  }
  func.func @transform_2(%arg0: i32) -> (i32, i32, i32) {
    %c0_i32 = arith.constant 0 : i32
    %c0_i32_0 = arith.constant 0 : i32
    %c0_i32_1 = arith.constant 0 : i32
    %c0_i32_2 = arith.constant 0 : i32
    return %c0_i32, %c0_i32_0, %c0_i32_1 : i32, i32, i32
  }
  func.func @transform_3(%arg0: i32) -> (i32, i32) {
    %c0_i32 = arith.constant 0 : i32
    %c0_i32_0 = arith.constant 0 : i32
    %c0_i32_1 = arith.constant 0 : i32
    return %c0_i32, %c0_i32_0 : i32, i32
  }
  func.func @transform_4(%arg0: i32) -> (i32, i32, i32) {
    %c0_i32 = arith.constant 0 : i32
    %c0_i32_0 = arith.constant 0 : i32
    %c0_i32_1 = arith.constant 0 : i32
    return %arg0, %c0_i32, %c0_i32_0 : i32, i32, i32
  }
}

</mosaic_0001>

<llo_original>
// kernel: tpu_custom_call.1
$region0: #{tpu_custom_call.1}
  #allocation0 [shape = 'u32[]', space=smem, size = 0x4, offset = 0x4, fixed_abs, tag = 'smem constant byte address 0x4 - core index']
  #allocation1 [shape = 'u32[144,128]{1,0:T(1,128)}', space=vmem, size = 0x12000, scoped, tag = 'internal scratch']
  %s0 = inlined_call_operand.vmem [shape: f32[2,64,32], index: 0, kind: input, shape index: {}]
  %s1 = inlined_call_operand.vmem [shape: f32[32,96], index: 1, kind: input, shape index: {}]
  %s2 = inlined_call_operand.vmem [shape: f32[8,4,32], index: 2, kind: input, shape index: {}]
  %s3 = inlined_call_operand.vmem [shape: f32[1,32], index: 3, kind: input, shape index: {}]
  %s4 = inlined_call_operand.vmem [shape: f32[2,64,32], index: 4, kind: output, shape index: {}]
  %s5 = sld [smem:[#allocation0]]
  $region49: #{tpu_custom_call.1} parent=0
    _
  %s7 = ssub.s32 1, %s5
  %s8 = scalar_select 0, %s7, %s5
  loop: start=0, step=1, limit=4
  $region2: #{tpu_custom_call.1} parent=0 // loop_pre_header
    _
  $region3: #{tpu_custom_call.1} parent=0 // loop_header
    %s10 = sphi 0, %s14
    %p11 = scmp.ge.s32.totalorder %s10, 4
    %s20 = sphi 0, %s22
    %s23 = sphi 0, %s20
    %s24 = sphi 0, %s23
    %s40 = sphi 0, %s24
    %s44 = sphi 0, %s44
    %s46 = sphi 0, %s44
    %s47 = sphi 0, %s46
    %s61 = sphi 0, %s47
    %s65 = sphi 0, %s65
    %s67 = sphi 0, %s65
    %s68 = sphi 0, %s67
    %s82 = sphi 0, %s68
    %s86 = sphi 0, %s86
    %s88 = sphi 0, %s86
    %s89 = sphi 0, %s88
    %s103 = sphi 0, %s89
    %s109 = sphi 0, %s111
    %s112 = sphi 0, %s109
    %s113 = sphi 0, %s112
    %s129 = sphi 0, %s113
  $region4: #{tpu_custom_call.1} parent=0 // loop_header_branch
    %13 = sbr.rel (%p11) target = $region8
  $region5: #{tpu_custom_call.1} parent=0 // loop_body
    %s15 = ssub.s32 %s10, 1
    %s16 = ssub.s32 %s10, 2
    %s17 = sadd.s32 %s10, 1
    %s18 = ssub.s32 %s10, %s17
    %p19 = scmp.eq.s32.totalorder %s18, 0
    %s21 = sadd.s32 %s20, 1
    %s22 = scalar_select %p19, %s20, %s21
    %p25 = pneg %p19
    %p26 = scmp.eq.s32.totalorder %s10, 1
    %p27 = por %p25, %p26
    %p28 = scmp.ne.s32.totalorder %s20, %s23
    %p29 = scmp.eq.s32.totalorder %s10, 0
    %p30 = por %p28, %p29
    %p31 = scmp.ne.s32.totalorder %s20, %s23
    %p32 = scmp.eq.s32.totalorder %s15, 1
    %p33 = por %p31, %p32
    %p34 = scmp.ne.s32.totalorder %s23, %s24
    %p35 = scmp.eq.s32.totalorder %s15, 0
    %p36 = por %p34, %p35
    %p37 = scmp.ne.s32.totalorder %s23, %s24
    %p38 = scmp.eq.s32.totalorder %s16, 1
    %p39 = por %p37, %p38
    %p41 = scmp.ne.s32.totalorder %s24, %s40
    %p42 = scmp.eq.s32.totalorder %s16, 0
    %p43 = por %p41, %p42
    %s45 = sadd.s32 %s44, 1
    %p48 = scmp.eq.s32.totalorder %s10, 1
    %p49 = scmp.ne.s32.totalorder %s44, %s46
    %p50 = scmp.eq.s32.totalorder %s10, 0
    %p51 = por %p49, %p50
    %p52 = scmp.ne.s32.totalorder %s44, %s46
    %p53 = scmp.eq.s32.totalorder %s15, 1
    %p54 = por %p52, %p53
    %p55 = scmp.ne.s32.totalorder %s46, %s47
    %p56 = scmp.eq.s32.totalorder %s15, 0
    %p57 = por %p55, %p56
    %p58 = scmp.ne.s32.totalorder %s46, %s47
    %p59 = scmp.eq.s32.totalorder %s16, 1
    %p60 = por %p58, %p59
    %p62 = scmp.ne.s32.totalorder %s47, %s61
    %p63 = scmp.eq.s32.totalorder %s16, 0
    %p64 = por %p62, %p63
    %s66 = sadd.s32 %s65, 1
    %p69 = scmp.eq.s32.totalorder %s10, 1
    %p70 = scmp.ne.s32.totalorder %s65, %s67
    %p71 = scmp.eq.s32.totalorder %s10, 0
    %p72 = por %p70, %p71
    %p73 = scmp.ne.s32.totalorder %s65, %s67
    %p74 = scmp.eq.s32.totalorder %s15, 1
    %p75 = por %p73, %p74
    %p76 = scmp.ne.s32.totalorder %s67, %s68
    %p77 = scmp.eq.s32.totalorder %s15, 0
    %p78 = por %p76, %p77
    %p79 = scmp.ne.s32.totalorder %s67, %s68
    %p80 = scmp.eq.s32.totalorder %s16, 1
    %p81 = por %p79, %p80
    %p83 = scmp.ne.s32.totalorder %s68, %s82
    %p84 = scmp.eq.s32.totalorder %s16, 0
    %p85 = por %p83, %p84
    %s87 = sadd.s32 %s86, 1
    %p90 = scmp.eq.s32.totalorder %s10, 1
    %p91 = scmp.ne.s32.totalorder %s86, %s88
    %p92 = scmp.eq.s32.totalorder %s10, 0
    %p93 = por %p91, %p92
    %p94 = scmp.ne.s32.totalorder %s86, %s88
    %p95 = scmp.eq.s32.totalorder %s15, 1
    %p96 = por %p94, %p95
    %p97 = scmp.ne.s32.totalorder %s88, %s89
    %p98 = scmp.eq.s32.totalorder %s15, 0
    %p99 = por %p97, %p98
    %p100 = scmp.ne.s32.totalorder %s88, %s89
    %p101 = scmp.eq.s32.totalorder %s16, 1
    %p102 = por %p100, %p101
    %p104 = scmp.ne.s32.totalorder %s89, %s103
    %p105 = scmp.eq.s32.totalorder %s16, 0
    %p106 = por %p104, %p105
    %s107 = ssub.s32 %s10, %s17
    %p108 = scmp.eq.s32.totalorder %s107, 0
    %s110 = sadd.s32 %s109, 1
    %s111 = scalar_select %p108, %s109, %s110
    %p114 = pneg %p108
    %p115 = scmp.eq.s32.totalorder %s10, 1
    %p116 = por %p114, %p115
    %p117 = scmp.ne.s32.totalorder %s109, %s112
    %p118 = scmp.eq.s32.totalorder %s10, 0
    %p119 = por %p117, %p118
    %p120 = scmp.ne.s32.totalorder %s109, %s112
    %p121 = scmp.eq.s32.totalorder %s15, 1
    %p122 = por %p120, %p121
    %p123 = scmp.ne.s32.totalorder %s112, %s113
    %p124 = scmp.eq.s32.totalorder %s15, 0
    %p125 = por %p123, %p124
    %p126 = scmp.ne.s32.totalorder %s112, %s113
    %p127 = scmp.eq.s32.totalorder %s16, 1
    %p128 = por %p126, %p127
    %p130 = scmp.ne.s32.totalorder %s113, %s129
    %p131 = scmp.eq.s32.totalorder %s16, 0
    %p132 = por %p130, %p131
    %p133 = scmp.le.s32.totalorder 1, %s10
    %p134 = scmp.lt.s32.totalorder %s10, 3
    %p135 = pnand %p133, %p134
    %p136 = pneg %p135
    // Predicated region
    $region9: #{tpu_custom_call.1} parent=5 // pred_check
      _
    $region10: #{tpu_custom_call.1} parent=5 // pred_check_branch
      %138 = sbr.rel (%p135) target = $region12
    $region11: #{tpu_custom_call.1} parent=5 // pred_region
      %s139 = ssub.s32 %s10, 1
      // Predicated region
      $region13: #{tpu_custom_call.1} parent=11 // pred_check
        %p140 = pneg %p57
      $region14: #{tpu_custom_call.1} parent=11 // pred_check_branch
        %142 = sbr.rel (%p140) target = $region16
      $region15: #{tpu_custom_call.1} parent=11 // pred_region
        _
      $region16: #{tpu_custom_call.1} parent=11 // pred_fallthru
        _
      // Predicated region
      $region17: #{tpu_custom_call.1} parent=11 // pred_check
        %p143 = pneg %p78
      $region18: #{tpu_custom_call.1} parent=11 // pred_check_branch
        %145 = sbr.rel (%p143) target = $region20
      $region19: #{tpu_custom_call.1} parent=11 // pred_region
        _
      $region20: #{tpu_custom_call.1} parent=11 // pred_fallthru
        _
      // Predicated region
      $region21: #{tpu_custom_call.1} parent=11 // pred_check
        %p146 = pneg %p99
      $region22: #{tpu_custom_call.1} parent=11 // pred_check_branch
        %148 = sbr.rel (%p146) target = $region24
      $region23: #{tpu_custom_call.1} parent=11 // pred_region
        _
      $region24: #{tpu_custom_call.1} parent=11 // pred_fallthru
        _
    $region12: #{tpu_custom_call.1} parent=5 // pred_fallthru
      _
    %p149 = scmp.lt.s32.totalorder %s10, 2
    // Predicated region
    $region25: #{tpu_custom_call.1} parent=5 // pred_check
      %p150 = pneg %p149
    $region26: #{tpu_custom_call.1} parent=5 // pred_check_branch
      %152 = sbr.rel (%p150) target = $region28
    $region27: #{tpu_custom_call.1} parent=5 // pred_region
      // Predicated region
      $region29: #{tpu_custom_call.1} parent=27 // pred_check
        %p153 = pneg %p30
      $region30: #{tpu_custom_call.1} parent=27 // pred_check_branch
        %155 = sbr.rel (%p153) target = $region32
      $region31: #{tpu_custom_call.1} parent=27 // pred_region
        %p156 = scmp.lt.s32.totalorder %s10, 1
        %s157 = scalar_select %p156, %s10, 1
        %s158 = smul.addr %s157, 8
        %s159 = smul.addr %s158, 8
        %s160 = scalar_lea.vmem %s0, %s159
      $region32: #{tpu_custom_call.1} parent=27 // pred_fallthru
        _
    $region28: #{tpu_custom_call.1} parent=5 // pred_fallthru
      _
    %p161 = scmp.le.s32.totalorder 1, %s10
    %p162 = scmp.lt.s32.totalorder %s10, 3
    %p163 = pnand %p161, %p162
    %p164 = pneg %p163
    // Predicated region
    $region33: #{tpu_custom_call.1} parent=5 // pred_check
      _
    $region34: #{tpu_custom_call.1} parent=5 // pred_check_branch
      %166 = sbr.rel (%p163) target = $region36
    $region35: #{tpu_custom_call.1} parent=5 // pred_region
      %s167 = ssub.s32 %s10, 1
      %p168 = scmp.lt.s32.totalorder %s15, 1
      %s169 = scalar_select %p168, %s15, 1
      %s170 = smul.addr %s169, 8
      %s171 = smul.addr %s170, 8
      %s172 = scalar_lea.vmem %s0, %s171
      %p173 = pneg %p36
      %p174 = pneg %p33
      %p175 = pneg %p57
      %p176 = pneg %p54
      %p177 = pneg %p78
      %p178 = pneg %p75
      %p179 = pneg %p99
      %p180 = pneg %p96
      %p181 = pneg %p125
      %p182 = pneg %p122
      %p183 = scmp.lt.s32.totalorder %s15, 1
      %s184 = scalar_select %p183, %s15, 1
      %s185 = smul.addr %s184, 8
      %s186 = smul.addr %s185, 8
      %s187 = scalar_lea.vmem %s4, %s186
      %p188 = scmp.lt.s32.totalorder %s15, 1
      %s189 = scalar_select %p188, %s15, 1
      %s190 = smul.addr %s189, 8
      %s191 = smul.addr %s190, 8
      %s192 = scalar_lea.vmem %s0, %s191
      %p193 = scmp.lt.s32.totalorder %s15, 1
      %s194 = scalar_select %p193, %s15, 1
      %s195 = smul.addr %s194, 8
      %s196 = smul.addr %s195, 8
      %s197 = scalar_lea.vmem %s4, %s196
      %v198 = vld [vmem:[%s192] sm:$0xff]
      %v199 = vld [vmem:[%s192 + $0x8] sm:$0xff]
      %v200 = vld [vmem:[%s192 + $0x10] sm:$0xff]
      %v201 = vld [vmem:[%s192 + $0x18] sm:$0xff]
      %v202 = vld [vmem:[%s192 + $0x20] sm:$0xff]
      %v203 = vld [vmem:[%s192 + $0x28] sm:$0xff]
      %v204 = vld [vmem:[%s192 + $0x30] sm:$0xff]
      %v205 = vld [vmem:[%s192 + $0x38] sm:$0xff]
      %v206 = vld [vmem:[%s1] sm:$0xff]
      %v207 = vld [vmem:[%s1 + $0x8] sm:$0xff]
      %v208 = vld [vmem:[%s1 + $0x10] sm:$0xff]
      %v209 = vld [vmem:[%s1 + $0x18] sm:$0xff]
      %vm210 = vcmask 261120
      %v212 = vsel %vm210, %v198, 0
      %v215 = vsel %vm210, %v199, 0
      %v218 = vsel %vm210, %v200, 0
      %v221 = vsel %vm210, %v201, 0
      %v224 = vsel %vm210, %v202, 0
      %v227 = vsel %vm210, %v203, 0
      %v230 = vsel %vm210, %v204, 0
      %v233 = vsel %vm210, %v205, 0
      %235 = vmatprep.subr.mxu0 0.0
      %236 = vmatpush1.msra.mxu0 0.0
      %237 = vmatprep.subr.mxu0 0.0
      %238 = vmatpush1.msra.mxu0 0.0
      %239 = vmatprep.subr.mxu0 0.0
      %240 = vmatpush1.msra.mxu0 0.0
      %241 = vmatprep.subr.mxu0 0.0
      %242 = vmatpush1.msra.mxu0 0.0
      %243 = vmatprep.subr.mxu0 0.0
      %244 = vmatpush1.msra.mxu0 0.0
      %245 = vmatprep.subr.mxu0 0.0
      %246 = vmatpush1.msra.mxu0 0.0
      %247 = vmatprep.subr.mxu0 0.0
      %248 = vmatpush1.msra.mxu0 0.0
      %249 = vmatprep.subr.mxu0 0.0
      %250 = vmatpush1.msra.mxu0 0.0
      %251 = vmatprep.subr.mxu0 0.0
      %252 = vmatpush1.msra.mxu0 0.0
      %253 = vmatprep.subr.mxu0 0.0
      %254 = vmatpush1.msra.mxu0 0.0
      %255 = vmatprep.subr.mxu0 0.0
      %256 = vmatpush1.msra.mxu0 0.0
      %257 = vmatprep.subr.mxu0 0.0
      %258 = vmatpush1.msra.mxu0 0.0
      %259 = vmatprep.subr.mxu0 0.0
      %260 = vmatpush1.msra.mxu0 %v209
      %261 = vmatprep.subr.mxu0 0.0
      %262 = vmatpush1.msra.mxu0 %v208
      %263 = vmatprep.subr.mxu0 0.0
      %264 = vmatpush1.msra.mxu0 %v207
      %265 = vmatprep.subr.mxu0 0.0
      %266 = vmatpush1.msra.mxu0 %v206
      %267 = vmatprep.subr.mxu0 0.0
      %268 = vmatpush2.msra.mxu0 0.0
      %269 = vmatprep.subr.mxu0 0.0
      %270 = vmatpush2.msra.mxu0 0.0
      %271 = vmatprep.subr.mxu0 0.0
      %272 = vmatpush2.msra.mxu0 0.0
      %273 = vmatprep.subr.mxu0 0.0
      %274 = vmatpush2.msra.mxu0 0.0
      %275 = vmatprep.subr.mxu0 0.0
      %276 = vmatpush2.msra.mxu0 0.0
      %277 = vmatprep.subr.mxu0 0.0
      %278 = vmatpush2.msra.mxu0 0.0
      %279 = vmatprep.subr.mxu0 0.0
      %280 = vmatpush2.msra.mxu0 0.0
      %281 = vmatprep.subr.mxu0 0.0
      %282 = vmatpush2.msra.mxu0 0.0
      %283 = vmatprep.subr.mxu0 0.0
      %284 = vmatpush2.msra.mxu0 0.0
      %285 = vmatprep.subr.mxu0 0.0
      %286 = vmatpush2.msra.mxu0 0.0
      %287 = vmatprep.subr.mxu0 0.0
      %288 = vmatpush2.msra.mxu0 0.0
      %289 = vmatprep.subr.mxu0 0.0
      %290 = vmatpush2.msra.mxu0 0.0
      %291 = vmatprep.subr.mxu0 0.0
      %292 = vmatpush2.msra.mxu0 0.0
      %293 = vmatprep.subr.mxu0 0.0
      %294 = vmatpush2.msra.mxu0 0.0
      %295 = vmatprep.subr.mxu0 0.0
      %296 = vmatpush2.msra.mxu0 0.0
      %297 = vmatprep.subr.mxu0 0.0
      %298 = vmatpush2.msra.mxu0 0.0
      %299 = vmatprep.mubr.f32.mxu0 0.0
      %300 = vmatmul.mubr.f32.gmra.mxu0 %v212
      %v301 = vpop.f32.mrf.mxu0
      %v302 = vadd.f32 0.0, %v301
      %v303 = vpop.f32.mrf.mxu0
      %304 = vmatprep.mubr.f32.mxu0 0.0
      %305 = vmatmul.mubr.f32.gmra.mxu0 %v215
      %v306 = vpop.f32.mrf.mxu0
      %v307 = vadd.f32 0.0, %v306
      %v308 = vpop.f32.mrf.mxu0
      %309 = vmatprep.mubr.f32.mxu0 0.0
      %310 = vmatmul.mubr.f32.gmra.mxu0 %v218
      %v311 = vpop.f32.mrf.mxu0
      %v312 = vadd.f32 0.0, %v311
      %v313 = vpop.f32.mrf.mxu0
      %314 = vmatprep.mubr.f32.mxu0 0.0
      %315 = vmatmul.mubr.f32.gmra.mxu0 %v221
      %v316 = vpop.f32.mrf.mxu0
      %v317 = vadd.f32 0.0, %v316
      %v318 = vpop.f32.mrf.mxu0
      %319 = vmatprep.mubr.f32.mxu0 0.0
      %320 = vmatmul.mubr.f32.gmra.mxu0 %v224
      %v321 = vpop.f32.mrf.mxu0
      %v322 = vadd.f32 0.0, %v321
      %v323 = vpop.f32.mrf.mxu0
      %324 = vmatprep.mubr.f32.mxu0 0.0
      %325 = vmatmul.mubr.f32.gmra.mxu0 %v227
      %v326 = vpop.f32.mrf.mxu0
      %v327 = vadd.f32 0.0, %v326
      %v328 = vpop.f32.mrf.mxu0
      %329 = vmatprep.mubr.f32.mxu0 0.0
      %330 = vmatmul.mubr.f32.gmra.mxu0 %v230
      %v331 = vpop.f32.mrf.mxu0
      %v332 = vadd.f32 0.0, %v331
      %v333 = vpop.f32.mrf.mxu0
      %334 = vmatprep.mubr.f32.mxu0 0.0
      %335 = vmatmul.mubr.f32.gmra.mxu0 %v233
      %v336 = vpop.f32.mrf.mxu0
      %v337 = vadd.f32 0.0, %v336
      %v338 = vpop.f32.mrf.mxu0
      %339 = vdwg.mxu0
      %348 = vrot.lane.b32.xlu0 %v302, 124
      %v349 = vpop.permute.xlu0 %348
      %350 = vrot.lane.b32.xlu0 %v307, 124
      %v351 = vpop.permute.xlu0 %350
      %352 = vrot.lane.b32.xlu0 %v312, 124
      %v353 = vpop.permute.xlu0 %352
      %354 = vrot.lane.b32.xlu0 %v317, 124
      %v355 = vpop.permute.xlu0 %354
      %356 = vrot.lane.b32.xlu0 %v322, 124
      %v357 = vpop.permute.xlu0 %356
      %358 = vrot.lane.b32.xlu0 %v327, 124
      %v359 = vpop.permute.xlu0 %358
      %360 = vrot.lane.b32.xlu0 %v332, 124
      %v361 = vpop.permute.xlu0 %360
      %362 = vrot.lane.b32.xlu0 %v337, 124
      %v363 = vpop.permute.xlu0 %362
      %364 = vrot.lane.b32.xlu0 %v302, 120
      %v365 = vpop.permute.xlu0 %364
      %366 = vrot.lane.b32.xlu0 %v307, 120
      %v367 = vpop.permute.xlu0 %366
      %368 = vrot.lane.b32.xlu0 %v312, 120
      %v369 = vpop.permute.xlu0 %368
      %370 = vrot.lane.b32.xlu0 %v317, 120
      %v371 = vpop.permute.xlu0 %370
      %372 = vrot.lane.b32.xlu0 %v322, 120
      %v373 = vpop.permute.xlu0 %372
      %374 = vrot.lane.b32.xlu0 %v327, 120
      %v375 = vpop.permute.xlu0 %374
      %376 = vrot.lane.b32.xlu0 %v332, 120
      %v377 = vpop.permute.xlu0 %376
      %378 = vrot.lane.b32.xlu0 %v337, 120
      %v379 = vpop.permute.xlu0 %378
      %380 = vrot.lane.b32.xlu0 %v302, 116
      %v381 = vpop.permute.xlu0 %380
      %382 = vrot.lane.b32.xlu0 %v307, 116
      %v383 = vpop.permute.xlu0 %382
      %384 = vrot.lane.b32.xlu0 %v312, 116
      %v385 = vpop.permute.xlu0 %384
      %386 = vrot.lane.b32.xlu0 %v317, 116
      %v387 = vpop.permute.xlu0 %386
      %388 = vrot.lane.b32.xlu0 %v322, 116
      %v389 = vpop.permute.xlu0 %388
      %390 = vrot.lane.b32.xlu0 %v327, 116
      %v391 = vpop.permute.xlu0 %390
      %392 = vrot.lane.b32.xlu0 %v332, 116
      %v393 = vpop.permute.xlu0 %392
      %394 = vrot.lane.b32.xlu0 %v337, 116
      %v395 = vpop.permute.xlu0 %394
      %396 = vrot.lane.b32.xlu0 %v302, 112
      %v397 = vpop.permute.xlu0 %396
      %398 = vrot.lane.b32.xlu0 %v307, 112
      %v399 = vpop.permute.xlu0 %398
      %400 = vrot.lane.b32.xlu0 %v312, 112
      %v401 = vpop.permute.xlu0 %400
      %402 = vrot.lane.b32.xlu0 %v317, 112
      %v403 = vpop.permute.xlu0 %402
      %404 = vrot.lane.b32.xlu0 %v322, 112
      %v405 = vpop.permute.xlu0 %404
      %406 = vrot.lane.b32.xlu0 %v327, 112
      %v407 = vpop.permute.xlu0 %406
      %408 = vrot.lane.b32.xlu0 %v332, 112
      %v409 = vpop.permute.xlu0 %408
      %410 = vrot.lane.b32.xlu0 %v337, 112
      %v411 = vpop.permute.xlu0 %410
      %412 = vrot.lane.b32.xlu0 %v302, 108
      %v413 = vpop.permute.xlu0 %412
      %414 = vrot.lane.b32.xlu0 %v307, 108
      %v415 = vpop.permute.xlu0 %414
      %416 = vrot.lane.b32.xlu0 %v312, 108
      %v417 = vpop.permute.xlu0 %416
      %418 = vrot.lane.b32.xlu0 %v317, 108
      %v419 = vpop.permute.xlu0 %418
      %420 = vrot.lane.b32.xlu0 %v322, 108
      %v421 = vpop.permute.xlu0 %420
      %422 = vrot.lane.b32.xlu0 %v327, 108
      %v423 = vpop.permute.xlu0 %422
      %424 = vrot.lane.b32.xlu0 %v332, 108
      %v425 = vpop.permute.xlu0 %424
      %426 = vrot.lane.b32.xlu0 %v337, 108
      %v427 = vpop.permute.xlu0 %426
      %428 = vrot.lane.b32.xlu0 %v302, 104
      %v429 = vpop.permute.xlu0 %428
      %430 = vrot.lane.b32.xlu0 %v307, 104
      %v431 = vpop.permute.xlu0 %430
      %432 = vrot.lane.b32.xlu0 %v312, 104
      %v433 = vpop.permute.xlu0 %432
      %434 = vrot.lane.b32.xlu0 %v317, 104
      %v435 = vpop.permute.xlu0 %434
      %436 = vrot.lane.b32.xlu0 %v322, 104
      %v437 = vpop.permute.xlu0 %436
      %438 = vrot.lane.b32.xlu0 %v327, 104
      %v439 = vpop.permute.xlu0 %438
      %440 = vrot.lane.b32.xlu0 %v332, 104
      %v441 = vpop.permute.xlu0 %440
      %442 = vrot.lane.b32.xlu0 %v337, 104
      %v443 = vpop.permute.xlu0 %442
      %444 = vrot.lane.b32.xlu0 %v302, 100
      %v445 = vpop.permute.xlu0 %444
      %446 = vrot.lane.b32.xlu0 %v307, 100
      %v447 = vpop.permute.xlu0 %446
      %448 = vrot.lane.b32.xlu0 %v312, 100
      %v449 = vpop.permute.xlu0 %448
      %450 = vrot.lane.b32.xlu0 %v317, 100
      %v451 = vpop.permute.xlu0 %450
      %452 = vrot.lane.b32.xlu0 %v322, 100
      %v453 = vpop.permute.xlu0 %452
      %454 = vrot.lane.b32.xlu0 %v327, 100
      %v455 = vpop.permute.xlu0 %454
      %456 = vrot.lane.b32.xlu0 %v332, 100
      %v457 = vpop.permute.xlu0 %456
      %458 = vrot.lane.b32.xlu0 %v337, 100
      %v459 = vpop.permute.xlu0 %458
      %460 = vrot.lane.b32.xlu0 %v302, 96
      %v461 = vpop.permute.xlu0 %460
      %462 = vrot.lane.b32.xlu0 %v307, 96
      %v463 = vpop.permute.xlu0 %462
      %464 = vrot.lane.b32.xlu0 %v312, 96
      %v465 = vpop.permute.xlu0 %464
      %466 = vrot.lane.b32.xlu0 %v317, 96
      %v467 = vpop.permute.xlu0 %466
      %468 = vrot.lane.b32.xlu0 %v322, 96
      %v469 = vpop.permute.xlu0 %468
      %470 = vrot.lane.b32.xlu0 %v327, 96
      %v471 = vpop.permute.xlu0 %470
      %472 = vrot.lane.b32.xlu0 %v332, 96
      %v473 = vpop.permute.xlu0 %472
      %474 = vrot.lane.b32.xlu0 %v337, 96
      %v475 = vpop.permute.xlu0 %474
      %vm476 = vcmask 31744
      %v477 = vsel %vm476, %v302, 0
      %v479 = vsel %vm476, %v307, 0
      %v481 = vsel %vm476, %v312, 0
      %v483 = vsel %vm476, %v317, 0
      %v485 = vsel %vm476, %v322, 0
      %v487 = vsel %vm476, %v327, 0
      %v489 = vsel %vm476, %v332, 0
      %v491 = vsel %vm476, %v337, 0
      %v493 = vsel %vm476, %v461, 0
      %v495 = vsel %vm476, %v463, 0
      %v497 = vsel %vm476, %v465, 0
      %v499 = vsel %vm476, %v467, 0
      %v501 = vsel %vm476, %v469, 0
      %v503 = vsel %vm476, %v471, 0
      %v505 = vsel %vm476, %v473, 0
      %v507 = vsel %vm476, %v475, 0
      %509 = vmatprep.subr.mxu0 0.0
      %510 = vmatpush1.xpose.msra.mxu0 0.0
      %511 = vmatprep.subr.mxu0 0.0
      %512 = vmatpush1.xpose.msra.mxu0 0.0
      %513 = vmatprep.subr.mxu0 0.0
      %514 = vmatpush1.xpose.msra.mxu0 0.0
      %515 = vmatprep.subr.mxu0 0.0
      %516 = vmatpush1.xpose.msra.mxu0 0.0
      %517 = vmatprep.subr.mxu0 0.0
      %518 = vmatpush1.xpose.msra.mxu0 0.0
      %519 = vmatprep.subr.mxu0 0.0
      %520 = vmatpush1.xpose.msra.mxu0 0.0
      %521 = vmatprep.subr.mxu0 0.0
      %522 = vmatpush1.xpose.msra.mxu0 0.0
      %523 = vmatprep.subr.mxu0 0.0
      %524 = vmatpush1.xpose.msra.mxu0 0.0
      %525 = vmatprep.subr.mxu0 0.0
      %526 = vmatpush1.xpose.msra.mxu0 %v507
      %527 = vmatprep.subr.mxu0 0.0
      %528 = vmatpush1.xpose.msra.mxu0 %v505
      %529 = vmatprep.subr.mxu0 0.0
      %530 = vmatpush1.xpose.msra.mxu0 %v503
      %531 = vmatprep.subr.mxu0 0.0
      %532 = vmatpush1.xpose.msra.mxu0 %v501
      %533 = vmatprep.subr.mxu0 0.0
      %534 = vmatpush1.xpose.msra.mxu0 %v499
      %535 = vmatprep.subr.mxu0 0.0
      %536 = vmatpush1.xpose.msra.mxu0 %v497
      %537 = vmatprep.subr.mxu0 0.0
      %538 = vmatpush1.xpose.msra.mxu0 %v495
      %539 = vmatprep.subr.mxu0 0.0
      %540 = vmatpush1.xpose.msra.mxu0 %v493
      %541 = vmatprep.subr.mxu0 0.0
      %542 = vmatpush2.xpose.msra.mxu0 0.0
      %543 = vmatprep.subr.mxu0 0.0
      %544 = vmatpush2.xpose.msra.mxu0 0.0
      %545 = vmatprep.subr.mxu0 0.0
      %546 = vmatpush2.xpose.msra.mxu0 0.0
      %547 = vmatprep.subr.mxu0 0.0
      %548 = vmatpush2.xpose.msra.mxu0 0.0
      %549 = vmatprep.subr.mxu0 0.0
      %550 = vmatpush2.xpose.msra.mxu0 0.0
      %551 = vmatprep.subr.mxu0 0.0
      %552 = vmatpush2.xpose.msra.mxu0 0.0
      %553 = vmatprep.subr.mxu0 0.0
      %554 = vmatpush2.xpose.msra.mxu0 0.0
      %555 = vmatprep.subr.mxu0 0.0
      %556 = vmatpush2.xpose.msra.mxu0 0.0
      %557 = vmatprep.subr.mxu0 0.0
      %558 = vmatpush2.xpose.msra.mxu0 0.0
      %559 = vmatprep.subr.mxu0 0.0
      %560 = vmatpush2.xpose.msra.mxu0 0.0
      %561 = vmatprep.subr.mxu0 0.0
      %562 = vmatpush2.xpose.msra.mxu0 0.0
      %563 = vmatprep.subr.mxu0 0.0
      %564 = vmatpush2.xpose.msra.mxu0 0.0
      %565 = vmatprep.subr.mxu0 0.0
      %566 = vmatpush2.xpose.msra.mxu0 0.0
      %567 = vmatprep.subr.mxu0 0.0
      %568 = vmatpush2.xpose.msra.mxu0 0.0
      %569 = vmatprep.subr.mxu0 0.0
      %570 = vmatpush2.xpose.msra.mxu0 0.0
      %571 = vmatprep.subr.mxu0 0.0
      %572 = vmatpush2.xpose.msra.mxu0 0.0
      %573 = vmatprep.mubr.f32.mxu0 0.0
      %574 = vmatmul.mubr.f32.gmra.mxu0 %v477
      %v575 = vpop.f32.mrf.mxu0
      %v576 = vadd.f32 0.0, %v575
      %v577 = vpop.f32.mrf.mxu0
      %578 = vmatprep.mubr.f32.mxu0 0.0
      %579 = vmatmul.mubr.f32.gmra.mxu0 %v479
      %v580 = vpop.f32.mrf.mxu0
      %v581 = vadd.f32 0.0, %v580
      %v582 = vpop.f32.mrf.mxu0
      %583 = vmatprep.mubr.f32.mxu0 0.0
      %584 = vmatmul.mubr.f32.gmra.mxu0 %v481
      %v585 = vpop.f32.mrf.mxu0
      %v586 = vadd.f32 0.0, %v585
      %v587 = vpop.f32.mrf.mxu0
      %588 = vmatprep.mubr.f32.mxu0 0.0
      %589 = vmatmul.mubr.f32.gmra.mxu0 %v483
      %v590 = vpop.f32.mrf.mxu0
      %v591 = vadd.f32 0.0, %v590
      %v592 = vpop.f32.mrf.mxu0
      %593 = vmatprep.mubr.f32.mxu0 0.0
      %594 = vmatmul.mubr.f32.gmra.mxu0 %v485
      %v595 = vpop.f32.mrf.mxu0
      %v596 = vadd.f32 0.0, %v595
      %v597 = vpop.f32.mrf.mxu0
      %598 = vmatprep.mubr.f32.mxu0 0.0
      %599 = vmatmul.mubr.f32.gmra.mxu0 %v487
      %v600 = vpop.f32.mrf.mxu0
      %v601 = vadd.f32 0.0, %v600
      %v602 = vpop.f32.mrf.mxu0
      %603 = vmatprep.mubr.f32.mxu0 0.0
      %604 = vmatmul.mubr.f32.gmra.mxu0 %v489
      %v605 = vpop.f32.mrf.mxu0
      %v606 = vadd.f32 0.0, %v605
      %v607 = vpop.f32.mrf.mxu0
      %608 = vmatprep.mubr.f32.mxu0 0.0
      %609 = vmatmul.mubr.f32.gmra.mxu0 %v491
      %v610 = vpop.f32.mrf.mxu0
      %v611 = vadd.f32 0.0, %v610
      %v612 = vpop.f32.mrf.mxu0
      %613 = vdwg.mxu0
      %614 = vrot.lane.b32.xlu0 %v349, 96
      %v615 = vpop.permute.xlu0 %614
      %616 = vrot.lane.b32.xlu0 %v351, 96
      %v617 = vpop.permute.xlu0 %616
      %618 = vrot.lane.b32.xlu0 %v353, 96
      %v619 = vpop.permute.xlu0 %618
      %620 = vrot.lane.b32.xlu0 %v355, 96
      %v621 = vpop.permute.xlu0 %620
      %622 = vrot.lane.b32.xlu0 %v357, 96
      %v623 = vpop.permute.xlu0 %622
      %624 = vrot.lane.b32.xlu0 %v359, 96
      %v625 = vpop.permute.xlu0 %624
      %626 = vrot.lane.b32.xlu0 %v361, 96
      %v627 = vpop.permute.xlu0 %626
      %628 = vrot.lane.b32.xlu0 %v363, 96
      %v629 = vpop.permute.xlu0 %628
      %v630 = vsel %vm476, %v349, 0
      %v632 = vsel %vm476, %v351, 0
      %v634 = vsel %vm476, %v353, 0
      %v636 = vsel %vm476, %v355, 0
      %v638 = vsel %vm476, %v357, 0
      %v640 = vsel %vm476, %v359, 0
      %v642 = vsel %vm476, %v361, 0
      %v644 = vsel %vm476, %v363, 0
      %v646 = vsel %vm476, %v615, 0
      %v648 = vsel %vm476, %v617, 0
      %v650 = vsel %vm476, %v619, 0
      %v652 = vsel %vm476, %v621, 0
      %v654 = vsel %vm476, %v623, 0
      %v656 = vsel %vm476, %v625, 0
      %v658 = vsel %vm476, %v627, 0
      %v660 = vsel %vm476, %v629, 0
      %662 = vmatprep.subr.mxu0 0.0
      %663 = vmatpush1.xpose.msra.mxu0 0.0
      %664 = vmatprep.subr.mxu0 0.0
      %665 = vmatpush1.xpose.msra.mxu0 0.0
      %666 = vmatprep.subr.mxu0 0.0
      %667 = vmatpush1.xpose.msra.mxu0 0.0
      %668 = vmatprep.subr.mxu0 0.0
      %669 = vmatpush1.xpose.msra.mxu0 0.0
      %670 = vmatprep.subr.mxu0 0.0
      %671 = vmatpush1.xpose.msra.mxu0 0.0
      %672 = vmatprep.subr.mxu0 0.0
      %673 = vmatpush1.xpose.msra.mxu0 0.0
      %674 = vmatprep.subr.mxu0 0.0
      %675 = vmatpush1.xpose.msra.mxu0 0.0
      %676 = vmatprep.subr.mxu0 0.0
      %677 = vmatpush1.xpose.msra.mxu0 0.0
      %678 = vmatprep.subr.mxu0 0.0
      %679 = vmatpush1.xpose.msra.mxu0 %v660
      %680 = vmatprep.subr.mxu0 0.0
      %681 = vmatpush1.xpose.msra.mxu0 %v658
      %682 = vmatprep.subr.mxu0 0.0
      %683 = vmatpush1.xpose.msra.mxu0 %v656
      %684 = vmatprep.subr.mxu0 0.0
      %685 = vmatpush1.xpose.msra.mxu0 %v654
      %686 = vmatprep.subr.mxu0 0.0
      %687 = vmatpush1.xpose.msra.mxu0 %v652
      %688 = vmatprep.subr.mxu0 0.0
      %689 = vmatpush1.xpose.msra.mxu0 %v650
      %690 = vmatprep.subr.mxu0 0.0
      %691 = vmatpush1.xpose.msra.mxu0 %v648
      %692 = vmatprep.subr.mxu0 0.0
      %693 = vmatpush1.xpose.msra.mxu0 %v646
      %694 = vmatprep.subr.mxu0 0.0
      %695 = vmatpush2.xpose.msra.mxu0 0.0
      %696 = vmatprep.subr.mxu0 0.0
      %697 = vmatpush2.xpose.msra.mxu0 0.0
      %698 = vmatprep.subr.mxu0 0.0
      %699 = vmatpush2.xpose.msra.mxu0 0.0
      %700 = vmatprep.subr.mxu0 0.0
      %701 = vmatpush2.xpose.msra.mxu0 0.0
      %702 = vmatprep.subr.mxu0 0.0
      %703 = vmatpush2.xpose.msra.mxu0 0.0
      %704 = vmatprep.subr.mxu0 0.0
      %705 = vmatpush2.xpose.msra.mxu0 0.0
      %706 = vmatprep.subr.mxu0 0.0
      %707 = vmatpush2.xpose.msra.mxu0 0.0
      %708 = vmatprep.subr.mxu0 0.0
      %709 = vmatpush2.xpose.msra.mxu0 0.0
      %710 = vmatprep.subr.mxu0 0.0
      %711 = vmatpush2.xpose.msra.mxu0 0.0
      %712 = vmatprep.subr.mxu0 0.0
      %713 = vmatpush2.xpose.msra.mxu0 0.0
      %714 = vmatprep.subr.mxu0 0.0
      %715 = vmatpush2.xpose.msra.mxu0 0.0
      %716 = vmatprep.subr.mxu0 0.0
      %717 = vmatpush2.xpose.msra.mxu0 0.0
      %718 = vmatprep.subr.mxu0 0.0
      %719 = vmatpush2.xpose.msra.mxu0 0.0
      %720 = vmatprep.subr.mxu0 0.0
      %721 = vmatpush2.xpose.msra.mxu0 0.0
      %722 = vmatprep.subr.mxu0 0.0
      %723 = vmatpush2.xpose.msra.mxu0 0.0
      %724 = vmatprep.subr.mxu0 0.0
      %725 = vmatpush2.xpose.msra.mxu0 0.0
      %726 = vmatprep.mubr.f32.mxu0 0.0
      %727 = vmatmul.mubr.f32.gmra.mxu0 %v630
      %v728 = vpop.f32.mrf.mxu0
      %v729 = vadd.f32 0.0, %v728
      %v730 = vpop.f32.mrf.mxu0
      %731 = vmatprep.mubr.f32.mxu0 0.0
      %732 = vmatmul.mubr.f32.gmra.mxu0 %v632
      %v733 = vpop.f32.mrf.mxu0
      %v734 = vadd.f32 0.0, %v733
      %v735 = vpop.f32.mrf.mxu0
      %736 = vmatprep.mubr.f32.mxu0 0.0
      %737 = vmatmul.mubr.f32.gmra.mxu0 %v634
      %v738 = vpop.f32.mrf.mxu0
      %v739 = vadd.f32 0.0, %v738
      %v740 = vpop.f32.mrf.mxu0
      %741 = vmatprep.mubr.f32.mxu0 0.0
      %742 = vmatmul.mubr.f32.gmra.mxu0 %v636
      %v743 = vpop.f32.mrf.mxu0
      %v744 = vadd.f32 0.0, %v743
      %v745 = vpop.f32.mrf.mxu0
      %746 = vmatprep.mubr.f32.mxu0 0.0
      %747 = vmatmul.mubr.f32.gmra.mxu0 %v638
      %v748 = vpop.f32.mrf.mxu0
      %v749 = vadd.f32 0.0, %v748
      %v750 = vpop.f32.mrf.mxu0
      %751 = vmatprep.mubr.f32.mxu0 0.0
      %752 = vmatmul.mubr.f32.gmra.mxu0 %v640
      %v753 = vpop.f32.mrf.mxu0
      %v754 = vadd.f32 0.0, %v753
      %v755 = vpop.f32.mrf.mxu0
      %756 = vmatprep.mubr.f32.mxu0 0.0
      %757 = vmatmul.mubr.f32.gmra.mxu0 %v642
      %v758 = vpop.f32.mrf.mxu0
      %v759 = vadd.f32 0.0, %v758
      %v760 = vpop.f32.mrf.mxu0
      %761 = vmatprep.mubr.f32.mxu0 0.0
      %762 = vmatmul.mubr.f32.gmra.mxu0 %v644
      %v763 = vpop.f32.mrf.mxu0
      %v764 = vadd.f32 0.0, %v763
      %v765 = vpop.f32.mrf.mxu0
      %766 = vdwg.mxu0
      %767 = vrot.lane.b32.xlu0 %v365, 96
      %v768 = vpop.permute.xlu0 %767
      %769 = vrot.lane.b32.xlu0 %v367, 96
      %v770 = vpop.permute.xlu0 %769
      %771 = vrot.lane.b32.xlu0 %v369, 96
      %v772 = vpop.permute.xlu0 %771
      %773 = vrot.lane.b32.xlu0 %v371, 96
      %v774 = vpop.permute.xlu0 %773
      %775 = vrot.lane.b32.xlu0 %v373, 96
      %v776 = vpop.permute.xlu0 %775
      %777 = vrot.lane.b32.xlu0 %v375, 96
      %v778 = vpop.permute.xlu0 %777
      %779 = vrot.lane.b32.xlu0 %v377, 96
      %v780 = vpop.permute.xlu0 %779
      %781 = vrot.lane.b32.xlu0 %v379, 96
      %v782 = vpop.permute.xlu0 %781
      %v783 = vsel %vm476, %v365, 0
      %v785 = vsel %vm476, %v367, 0
      %v787 = vsel %vm476, %v369, 0
      %v789 = vsel %vm476, %v371, 0
      %v791 = vsel %vm476, %v373, 0
      %v793 = vsel %vm476, %v375, 0
      %v795 = vsel %vm476, %v377, 0
      %v797 = vsel %vm476, %v379, 0
      %v799 = vsel %vm476, %v768, 0
      %v801 = vsel %vm476, %v770, 0
      %v803 = vsel %vm476, %v772, 0
      %v805 = vsel %vm476, %v774, 0
      %v807 = vsel %vm476, %v776, 0
      %v809 = vsel %vm476, %v778, 0
      %v811 = vsel %vm476, %v780, 0
      %v813 = vsel %vm476, %v782, 0
      %815 = vmatprep.subr.mxu0 0.0
      %816 = vmatpush1.xpose.msra.mxu0 0.0
      %817 = vmatprep.subr.mxu0 0.0
      %818 = vmatpush1.xpose.msra.mxu0 0.0
      %819 = vmatprep.subr.mxu0 0.0
      %820 = vmatpush1.xpose.msra.mxu0 0.0
      %821 = vmatprep.subr.mxu0 0.0
      %822 = vmatpush1.xpose.msra.mxu0 0.0
      %823 = vmatprep.subr.mxu0 0.0
      %824 = vmatpush1.xpose.msra.mxu0 0.0
      %825 = vmatprep.subr.mxu0 0.0
      %826 = vmatpush1.xpose.msra.mxu0 0.0
      %827 = vmatprep.subr.mxu0 0.0
      %828 = vmatpush1.xpose.msra.mxu0 0.0
      %829 = vmatprep.subr.mxu0 0.0
      %830 = vmatpush1.xpose.msra.mxu0 0.0
      %831 = vmatprep.subr.mxu0 0.0
      %832 = vmatpush1.xpose.msra.mxu0 %v813
      %833 = vmatprep.subr.mxu0 0.0
      %834 = vmatpush1.xpose.msra.mxu0 %v811
      %835 = vmatprep.subr.mxu0 0.0
      %836 = vmatpush1.xpose.msra.mxu0 %v809
      %837 = vmatprep.subr.mxu0 0.0
      %838 = vmatpush1.xpose.msra.mxu0 %v807
      %839 = vmatprep.subr.mxu0 0.0
      %840 = vmatpush1.xpose.msra.mxu0 %v805
      %841 = vmatprep.subr.mxu0 0.0
      %842 = vmatpush1.xpose.msra.mxu0 %v803
      %843 = vmatprep.subr.mxu0 0.0
      %844 = vmatpush1.xpose.msra.mxu0 %v801
      %845 = vmatprep.subr.mxu0 0.0
      %846 = vmatpush1.xpose.msra.mxu0 %v799
      %847 = vmatprep.subr.mxu0 0.0
      %848 = vmatpush2.xpose.msra.mxu0 0.0
      %849 = vmatprep.subr.mxu0 0.0
      %850 = vmatpush2.xpose.msra.mxu0 0.0
      %851 = vmatprep.subr.mxu0 0.0
      %852 = vmatpush2.xpose.msra.mxu0 0.0
      %853 = vmatprep.subr.mxu0 0.0
      %854 = vmatpush2.xpose.msra.mxu0 0.0
      %855 = vmatprep.subr.mxu0 0.0
      %856 = vmatpush2.xpose.msra.mxu0 0.0
      %857 = vmatprep.subr.mxu0 0.0
      %858 = vmatpush2.xpose.msra.mxu0 0.0
      %859 = vmatprep.subr.mxu0 0.0
      %860 = vmatpush2.xpose.msra.mxu0 0.0
      %861 = vmatprep.subr.mxu0 0.0
      %862 = vmatpush2.xpose.msra.mxu0 0.0
      %863 = vmatprep.subr.mxu0 0.0
      %864 = vmatpush2.xpose.msra.mxu0 0.0
      %865 = vmatprep.subr.mxu0 0.0
      %866 = vmatpush2.xpose.msra.mxu0 0.0
      %867 = vmatprep.subr.mxu0 0.0
      %868 = vmatpush2.xpose.msra.mxu0 0.0
      %869 = vmatprep.subr.mxu0 0.0
      %870 = vmatpush2.xpose.msra.mxu0 0.0
      %871 = vmatprep.subr.mxu0 0.0
      %872 = vmatpush2.xpose.msra.mxu0 0.0
      %873 = vmatprep.subr.mxu0 0.0
      %874 = vmatpush2.xpose.msra.mxu0 0.0
      %875 = vmatprep.subr.mxu0 0.0
      %876 = vmatpush2.xpose.msra.mxu0 0.0
      %877 = vmatprep.subr.mxu0 0.0
      %878 = vmatpush2.xpose.msra.mxu0 0.0
      %879 = vmatprep.mubr.f32.mxu0 0.0
      %880 = vmatmul.mubr.f32.gmra.mxu0 %v783
      %v881 = vpop.f32.mrf.mxu0
      %v882 = vadd.f32 0.0, %v881
      %v883 = vpop.f32.mrf.mxu0
      %884 = vmatprep.mubr.f32.mxu0 0.0
      %885 = vmatmul.mubr.f32.gmra.mxu0 %v785
      %v886 = vpop.f32.mrf.mxu0
      %v887 = vadd.f32 0.0, %v886
      %v888 = vpop.f32.mrf.mxu0
      %889 = vmatprep.mubr.f32.mxu0 0.0
      %890 = vmatmul.mubr.f32.gmra.mxu0 %v787
      %v891 = vpop.f32.mrf.mxu0
      %v892 = vadd.f32 0.0, %v891
      %v893 = vpop.f32.mrf.mxu0
      %894 = vmatprep.mubr.f32.mxu0 0.0
      %895 = vmatmul.mubr.f32.gmra.mxu0 %v789
      %v896 = vpop.f32.mrf.mxu0
      %v897 = vadd.f32 0.0, %v896
      %v898 = vpop.f32.mrf.mxu0
      %899 = vmatprep.mubr.f32.mxu0 0.0
      %900 = vmatmul.mubr.f32.gmra.mxu0 %v791
      %v901 = vpop.f32.mrf.mxu0
      %v902 = vadd.f32 0.0, %v901
      %v903 = vpop.f32.mrf.mxu0
      %904 = vmatprep.mubr.f32.mxu0 0.0
      %905 = vmatmul.mubr.f32.gmra.mxu0 %v793
      %v906 = vpop.f32.mrf.mxu0
      %v907 = vadd.f32 0.0, %v906
      %v908 = vpop.f32.mrf.mxu0
      %909 = vmatprep.mubr.f32.mxu0 0.0
      %910 = vmatmul.mubr.f32.gmra.mxu0 %v795
      %v911 = vpop.f32.mrf.mxu0
      %v912 = vadd.f32 0.0, %v911
      %v913 = vpop.f32.mrf.mxu0
      %914 = vmatprep.mubr.f32.mxu0 0.0
      %915 = vmatmul.mubr.f32.gmra.mxu0 %v797
      %v916 = vpop.f32.mrf.mxu0
      %v917 = vadd.f32 0.0, %v916
      %v918 = vpop.f32.mrf.mxu0
      %919 = vdwg.mxu0
      %920 = vrot.lane.b32.xlu0 %v381, 96
      %v921 = vpop.permute.xlu0 %920
      %922 = vrot.lane.b32.xlu0 %v383, 96
      %v923 = vpop.permute.xlu0 %922
      %924 = vrot.lane.b32.xlu0 %v385, 96
      %v925 = vpop.permute.xlu0 %924
      %926 = vrot.lane.b32.xlu0 %v387, 96
      %v927 = vpop.permute.xlu0 %926
      %928 = vrot.lane.b32.xlu0 %v389, 96
      %v929 = vpop.permute.xlu0 %928
      %930 = vrot.lane.b32.xlu0 %v391, 96
      %v931 = vpop.permute.xlu0 %930
      %932 = vrot.lane.b32.xlu0 %v393, 96
      %v933 = vpop.permute.xlu0 %932
      %934 = vrot.lane.b32.xlu0 %v395, 96
      %v935 = vpop.permute.xlu0 %934
      %v936 = vsel %vm476, %v381, 0
      %v938 = vsel %vm476, %v383, 0
      %v940 = vsel %vm476, %v385, 0
      %v942 = vsel %vm476, %v387, 0
      %v944 = vsel %vm476, %v389, 0
      %v946 = vsel %vm476, %v391, 0
      %v948 = vsel %vm476, %v393, 0
      %v950 = vsel %vm476, %v395, 0
      %v952 = vsel %vm476, %v921, 0
      %v954 = vsel %vm476, %v923, 0
      %v956 = vsel %vm476, %v925, 0
      %v958 = vsel %vm476, %v927, 0
      %v960 = vsel %vm476, %v929, 0
      %v962 = vsel %vm476, %v931, 0
      %v964 = vsel %vm476, %v933, 0
      %v966 = vsel %vm476, %v935, 0
      %968 = vmatprep.subr.mxu0 0.0
      %969 = vmatpush1.xpose.msra.mxu0 0.0
      %970 = vmatprep.subr.mxu0 0.0
      %971 = vmatpush1.xpose.msra.mxu0 0.0
      %972 = vmatprep.subr.mxu0 0.0
      %973 = vmatpush1.xpose.msra.mxu0 0.0
      %974 = vmatprep.subr.mxu0 0.0
      %975 = vmatpush1.xpose.msra.mxu0 0.0
      %976 = vmatprep.subr.mxu0 0.0
      %977 = vmatpush1.xpose.msra.mxu0 0.0
      %978 = vmatprep.subr.mxu0 0.0
      %979 = vmatpush1.xpose.msra.mxu0 0.0
      %980 = vmatprep.subr.mxu0 0.0
      %981 = vmatpush1.xpose.msra.mxu0 0.0
      %982 = vmatprep.subr.mxu0 0.0
      %983 = vmatpush1.xpose.msra.mxu0 0.0
      %984 = vmatprep.subr.mxu0 0.0
      %985 = vmatpush1.xpose.msra.mxu0 %v966
      %986 = vmatprep.subr.mxu0 0.0
      %987 = vmatpush1.xpose.msra.mxu0 %v964
      %988 = vmatprep.subr.mxu0 0.0
      %989 = vmatpush1.xpose.msra.mxu0 %v962
      %990 = vmatprep.subr.mxu0 0.0
      %991 = vmatpush1.xpose.msra.mxu0 %v960
      %992 = vmatprep.subr.mxu0 0.0
      %993 = vmatpush1.xpose.msra.mxu0 %v958
      %994 = vmatprep.subr.mxu0 0.0
      %995 = vmatpush1.xpose.msra.mxu0 %v956
      %996 = vmatprep.subr.mxu0 0.0
      %997 = vmatpush1.xpose.msra.mxu0 %v954
      %998 = vmatprep.subr.mxu0 0.0
      %999 = vmatpush1.xpose.msra.mxu0 %v952
      %1000 = vmatprep.subr.mxu0 0.0
      %1001 = vmatpush2.xpose.msra.mxu0 0.0
      %1002 = vmatprep.subr.mxu0 0.0
      %1003 = vmatpush2.xpose.msra.mxu0 0.0
      %1004 = vmatprep.subr.mxu0 0.0
      %1005 = vmatpush2.xpose.msra.mxu0 0.0
      %1006 = vmatprep.subr.mxu0 0.0
      %1007 = vmatpush2.xpose.msra.mxu0 0.0
      %1008 = vmatprep.subr.mxu0 0.0
      %1009 = vmatpush2.xpose.msra.mxu0 0.0
      %1010 = vmatprep.subr.mxu0 0.0
      %1011 = vmatpush2.xpose.msra.mxu0 0.0
      %1012 = vmatprep.subr.mxu0 0.0
      %1013 = vmatpush2.xpose.msra.mxu0 0.0
      %1014 = vmatprep.subr.mxu0 0.0
      %1015 = vmatpush2.xpose.msra.mxu0 0.0
      %1016 = vmatprep.subr.mxu0 0.0
      %1017 = vmatpush2.xpose.msra.mxu0 0.0
      %1018 = vmatprep.subr.mxu0 0.0
      %1019 = vmatpush2.xpose.msra.mxu0 0.0
      %1020 = vmatprep.subr.mxu0 0.0
      %1021 = vmatpush2.xpose.msra.mxu0 0.0
      %1022 = vmatprep.subr.mxu0 0.0
      %1023 = vmatpush2.xpose.msra.mxu0 0.0
      %1024 = vmatprep.subr.mxu0 0.0
      %1025 = vmatpush2.xpose.msra.mxu0 0.0
      %1026 = vmatprep.subr.mxu0 0.0
      %1027 = vmatpush2.xpose.msra.mxu0 0.0
      %1028 = vmatprep.subr.mxu0 0.0
      %1029 = vmatpush2.xpose.msra.mxu0 0.0
      %1030 = vmatprep.subr.mxu0 0.0
      %1031 = vmatpush2.xpose.msra.mxu0 0.0
      %1032 = vmatprep.mubr.f32.mxu0 0.0
      %1033 = vmatmul.mubr.f32.gmra.mxu0 %v936
      %v1034 = vpop.f32.mrf.mxu0
      %v1035 = vadd.f32 0.0, %v1034
      %v1036 = vpop.f32.mrf.mxu0
      %1037 = vmatprep.mubr.f32.mxu0 0.0
      %1038 = vmatmul.mubr.f32.gmra.mxu0 %v938
      %v1039 = vpop.f32.mrf.mxu0
      %v1040 = vadd.f32 0.0, %v1039
      %v1041 = vpop.f32.mrf.mxu0
      %1042 = vmatprep.mubr.f32.mxu0 0.0
      %1043 = vmatmul.mubr.f32.gmra.mxu0 %v940
      %v1044 = vpop.f32.mrf.mxu0
      %v1045 = vadd.f32 0.0, %v1044
      %v1046 = vpop.f32.mrf.mxu0
      %1047 = vmatprep.mubr.f32.mxu0 0.0
      %1048 = vmatmul.mubr.f32.gmra.mxu0 %v942
      %v1049 = vpop.f32.mrf.mxu0
      %v1050 = vadd.f32 0.0, %v1049
      %v1051 = vpop.f32.mrf.mxu0
      %1052 = vmatprep.mubr.f32.mxu0 0.0
      %1053 = vmatmul.mubr.f32.gmra.mxu0 %v944
      %v1054 = vpop.f32.mrf.mxu0
      %v1055 = vadd.f32 0.0, %v1054
      %v1056 = vpop.f32.mrf.mxu0
      %1057 = vmatprep.mubr.f32.mxu0 0.0
      %1058 = vmatmul.mubr.f32.gmra.mxu0 %v946
      %v1059 = vpop.f32.mrf.mxu0
      %v1060 = vadd.f32 0.0, %v1059
      %v1061 = vpop.f32.mrf.mxu0
      %1062 = vmatprep.mubr.f32.mxu0 0.0
      %1063 = vmatmul.mubr.f32.gmra.mxu0 %v948
      %v1064 = vpop.f32.mrf.mxu0
      %v1065 = vadd.f32 0.0, %v1064
      %v1066 = vpop.f32.mrf.mxu0
      %1067 = vmatprep.mubr.f32.mxu0 0.0
      %1068 = vmatmul.mubr.f32.gmra.mxu0 %v950
      %v1069 = vpop.f32.mrf.mxu0
      %v1070 = vadd.f32 0.0, %v1069
      %v1071 = vpop.f32.mrf.mxu0
      %1072 = vdwg.mxu0
      %1073 = vrot.lane.b32.xlu0 %v397, 96
      %v1074 = vpop.permute.xlu0 %1073
      %1075 = vrot.lane.b32.xlu0 %v399, 96
      %v1076 = vpop.permute.xlu0 %1075
      %1077 = vrot.lane.b32.xlu0 %v401, 96
      %v1078 = vpop.permute.xlu0 %1077
      %1079 = vrot.lane.b32.xlu0 %v403, 96
      %v1080 = vpop.permute.xlu0 %1079
      %1081 = vrot.lane.b32.xlu0 %v405, 96
      %v1082 = vpop.permute.xlu0 %1081
      %1083 = vrot.lane.b32.xlu0 %v407, 96
      %v1084 = vpop.permute.xlu0 %1083
      %1085 = vrot.lane.b32.xlu0 %v409, 96
      %v1086 = vpop.permute.xlu0 %1085
      %1087 = vrot.lane.b32.xlu0 %v411, 96
      %v1088 = vpop.permute.xlu0 %1087
      %v1089 = vsel %vm476, %v397, 0
      %v1091 = vsel %vm476, %v399, 0
      %v1093 = vsel %vm476, %v401, 0
      %v1095 = vsel %vm476, %v403, 0
      %v1097 = vsel %vm476, %v405, 0
      %v1099 = vsel %vm476, %v407, 0
      %v1101 = vsel %vm476, %v409, 0
      %v1103 = vsel %vm476, %v411, 0
      %v1105 = vsel %vm476, %v1074, 0
      %v1107 = vsel %vm476, %v1076, 0
      %v1109 = vsel %vm476, %v1078, 0
      %v1111 = vsel %vm476, %v1080, 0
      %v1113 = vsel %vm476, %v1082, 0
      %v1115 = vsel %vm476, %v1084, 0
      %v1117 = vsel %vm476, %v1086, 0
      %v1119 = vsel %vm476, %v1088, 0
      %1121 = vmatprep.subr.mxu0 0.0
      %1122 = vmatpush1.xpose.msra.mxu0 0.0
      %1123 = vmatprep.subr.mxu0 0.0
      %1124 = vmatpush1.xpose.msra.mxu0 0.0
      %1125 = vmatprep.subr.mxu0 0.0
      %1126 = vmatpush1.xpose.msra.mxu0 0.0
      %1127 = vmatprep.subr.mxu0 0.0
      %1128 = vmatpush1.xpose.msra.mxu0 0.0
      %1129 = vmatprep.subr.mxu0 0.0
      %1130 = vmatpush1.xpose.msra.mxu0 0.0
      %1131 = vmatprep.subr.mxu0 0.0
      %1132 = vmatpush1.xpose.msra.mxu0 0.0
      %1133 = vmatprep.subr.mxu0 0.0
      %1134 = vmatpush1.xpose.msra.mxu0 0.0
      %1135 = vmatprep.subr.mxu0 0.0
      %1136 = vmatpush1.xpose.msra.mxu0 0.0
      %1137 = vmatprep.subr.mxu0 0.0
      %1138 = vmatpush1.xpose.msra.mxu0 %v1119
      %1139 = vmatprep.subr.mxu0 0.0
      %1140 = vmatpush1.xpose.msra.mxu0 %v1117
      %1141 = vmatprep.subr.mxu0 0.0
      %1142 = vmatpush1.xpose.msra.mxu0 %v1115
      %1143 = vmatprep.subr.mxu0 0.0
      %1144 = vmatpush1.xpose.msra.mxu0 %v1113
      %1145 = vmatprep.subr.mxu0 0.0
      %1146 = vmatpush1.xpose.msra.mxu0 %v1111
      %1147 = vmatprep.subr.mxu0 0.0
      %1148 = vmatpush1.xpose.msra.mxu0 %v1109
      %1149 = vmatprep.subr.mxu0 0.0
      %1150 = vmatpush1.xpose.msra.mxu0 %v1107
      %1151 = vmatprep.subr.mxu0 0.0
      %1152 = vmatpush1.xpose.msra.mxu0 %v1105
      %1153 = vmatprep.subr.mxu0 0.0
      %1154 = vmatpush2.xpose.msra.mxu0 0.0
      %1155 = vmatprep.subr.mxu0 0.0
      %1156 = vmatpush2.xpose.msra.mxu0 0.0
      %1157 = vmatprep.subr.mxu0 0.0
      %1158 = vmatpush2.xpose.msra.mxu0 0.0
      %1159 = vmatprep.subr.mxu0 0.0
      %1160 = vmatpush2.xpose.msra.mxu0 0.0
      %1161 = vmatprep.subr.mxu0 0.0
      %1162 = vmatpush2.xpose.msra.mxu0 0.0
      %1163 = vmatprep.subr.mxu0 0.0
      %1164 = vmatpush2.xpose.msra.mxu0 0.0
      %1165 = vmatprep.subr.mxu0 0.0
      %1166 = vmatpush2.xpose.msra.mxu0 0.0
      %1167 = vmatprep.subr.mxu0 0.0
      %1168 = vmatpush2.xpose.msra.mxu0 0.0
      %1169 = vmatprep.subr.mxu0 0.0
      %1170 = vmatpush2.xpose.msra.mxu0 0.0
      %1171 = vmatprep.subr.mxu0 0.0
      %1172 = vmatpush2.xpose.msra.mxu0 0.0
      %1173 = vmatprep.subr.mxu0 0.0
      %1174 = vmatpush2.xpose.msra.mxu0 0.0
      %1175 = vmatprep.subr.mxu0 0.0
      %1176 = vmatpush2.xpose.msra.mxu0 0.0
      %1177 = vmatprep.subr.mxu0 0.0
      %1178 = vmatpush2.xpose.msra.mxu0 0.0
      %1179 = vmatprep.subr.mxu0 0.0
      %1180 = vmatpush2.xpose.msra.mxu0 0.0
      %1181 = vmatprep.subr.mxu0 0.0
      %1182 = vmatpush2.xpose.msra.mxu0 0.0
      %1183 = vmatprep.subr.mxu0 0.0
      %1184 = vmatpush2.xpose.msra.mxu0 0.0
      %1185 = vmatprep.mubr.f32.mxu0 0.0
      %1186 = vmatmul.mubr.f32.gmra.mxu0 %v1089
      %v1187 = vpop.f32.mrf.mxu0
      %v1188 = vadd.f32 0.0, %v1187
      %v1189 = vpop.f32.mrf.mxu0
      %1190 = vmatprep.mubr.f32.mxu0 0.0
      %1191 = vmatmul.mubr.f32.gmra.mxu0 %v1091
      %v1192 = vpop.f32.mrf.mxu0
      %v1193 = vadd.f32 0.0, %v1192
      %v1194 = vpop.f32.mrf.mxu0
      %1195 = vmatprep.mubr.f32.mxu0 0.0
      %1196 = vmatmul.mubr.f32.gmra.mxu0 %v1093
      %v1197 = vpop.f32.mrf.mxu0
      %v1198 = vadd.f32 0.0, %v1197
      %v1199 = vpop.f32.mrf.mxu0
      %1200 = vmatprep.mubr.f32.mxu0 0.0
      %1201 = vmatmul.mubr.f32.gmra.mxu0 %v1095
      %v1202 = vpop.f32.mrf.mxu0
      %v1203 = vadd.f32 0.0, %v1202
      %v1204 = vpop.f32.mrf.mxu0
      %1205 = vmatprep.mubr.f32.mxu0 0.0
      %1206 = vmatmul.mubr.f32.gmra.mxu0 %v1097
      %v1207 = vpop.f32.mrf.mxu0
      %v1208 = vadd.f32 0.0, %v1207
      %v1209 = vpop.f32.mrf.mxu0
      %1210 = vmatprep.mubr.f32.mxu0 0.0
      %1211 = vmatmul.mubr.f32.gmra.mxu0 %v1099
      %v1212 = vpop.f32.mrf.mxu0
      %v1213 = vadd.f32 0.0, %v1212
      %v1214 = vpop.f32.mrf.mxu0
      %1215 = vmatprep.mubr.f32.mxu0 0.0
      %1216 = vmatmul.mubr.f32.gmra.mxu0 %v1101
      %v1217 = vpop.f32.mrf.mxu0
      %v1218 = vadd.f32 0.0, %v1217
      %v1219 = vpop.f32.mrf.mxu0
      %1220 = vmatprep.mubr.f32.mxu0 0.0
      %1221 = vmatmul.mubr.f32.gmra.mxu0 %v1103
      %v1222 = vpop.f32.mrf.mxu0
      %v1223 = vadd.f32 0.0, %v1222
      %v1224 = vpop.f32.mrf.mxu0
      %1225 = vdwg.mxu0
      %1226 = vrot.lane.b32.xlu0 %v413, 96
      %v1227 = vpop.permute.xlu0 %1226
      %1228 = vrot.lane.b32.xlu0 %v415, 96
      %v1229 = vpop.permute.xlu0 %1228
      %1230 = vrot.lane.b32.xlu0 %v417, 96
      %v1231 = vpop.permute.xlu0 %1230
      %1232 = vrot.lane.b32.xlu0 %v419, 96
      %v1233 = vpop.permute.xlu0 %1232
      %1234 = vrot.lane.b32.xlu0 %v421, 96
      %v1235 = vpop.permute.xlu0 %1234
      %1236 = vrot.lane.b32.xlu0 %v423, 96
      %v1237 = vpop.permute.xlu0 %1236
      %1238 = vrot.lane.b32.xlu0 %v425, 96
      %v1239 = vpop.permute.xlu0 %1238
      %1240 = vrot.lane.b32.xlu0 %v427, 96
      %v1241 = vpop.permute.xlu0 %1240
      %v1242 = vsel %vm476, %v413, 0
      %v1244 = vsel %vm476, %v415, 0
      %v1246 = vsel %vm476, %v417, 0
      %v1248 = vsel %vm476, %v419, 0
      %v1250 = vsel %vm476, %v421, 0
      %v1252 = vsel %vm476, %v423, 0
      %v1254 = vsel %vm476, %v425, 0
      %v1256 = vsel %vm476, %v427, 0
      %v1258 = vsel %vm476, %v1227, 0
      %v1260 = vsel %vm476, %v1229, 0
      %v1262 = vsel %vm476, %v1231, 0
      %v1264 = vsel %vm476, %v1233, 0
      %v1266 = vsel %vm476, %v1235, 0
      %v1268 = vsel %vm476, %v1237, 0
      %v1270 = vsel %vm476, %v1239, 0
      %v1272 = vsel %vm476, %v1241, 0
      %1274 = vmatprep.subr.mxu0 0.0
      %1275 = vmatpush1.xpose.msra.mxu0 0.0
      %1276 = vmatprep.subr.mxu0 0.0
      %1277 = vmatpush1.xpose.msra.mxu0 0.0
      %1278 = vmatprep.subr.mxu0 0.0
      %1279 = vmatpush1.xpose.msra.mxu0 0.0
      %1280 = vmatprep.subr.mxu0 0.0
      %1281 = vmatpush1.xpose.msra.mxu0 0.0
      %1282 = vmatprep.subr.mxu0 0.0
      %1283 = vmatpush1.xpose.msra.mxu0 0.0
      %1284 = vmatprep.subr.mxu0 0.0
      %1285 = vmatpush1.xpose.msra.mxu0 0.0
      %1286 = vmatprep.subr.mxu0 0.0
      %1287 = vmatpush1.xpose.msra.mxu0 0.0
      %1288 = vmatprep.subr.mxu0 0.0
      %1289 = vmatpush1.xpose.msra.mxu0 0.0
      %1290 = vmatprep.subr.mxu0 0.0
      %1291 = vmatpush1.xpose.msra.mxu0 %v1272
      %1292 = vmatprep.subr.mxu0 0.0
      %1293 = vmatpush1.xpose.msra.mxu0 %v1270
      %1294 = vmatprep.subr.mxu0 0.0
      %1295 = vmatpush1.xpose.msra.mxu0 %v1268
      %1296 = vmatprep.subr.mxu0 0.0
      %1297 = vmatpush1.xpose.msra.mxu0 %v1266
      %1298 = vmatprep.subr.mxu0 0.0
      %1299 = vmatpush1.xpose.msra.mxu0 %v1264
      %1300 = vmatprep.subr.mxu0 0.0
      %1301 = vmatpush1.xpose.msra.mxu0 %v1262
      %1302 = vmatprep.subr.mxu0 0.0
      %1303 = vmatpush1.xpose.msra.mxu0 %v1260
      %1304 = vmatprep.subr.mxu0 0.0
      %1305 = vmatpush1.xpose.msra.mxu0 %v1258
      %1306 = vmatprep.subr.mxu0 0.0
      %1307 = vmatpush2.xpose.msra.mxu0 0.0
      %1308 = vmatprep.subr.mxu0 0.0
      %1309 = vmatpush2.xpose.msra.mxu0 0.0
      %1310 = vmatprep.subr.mxu0 0.0
      %1311 = vmatpush2.xpose.msra.mxu0 0.0
      %1312 = vmatprep.subr.mxu0 0.0
      %1313 = vmatpush2.xpose.msra.mxu0 0.0
      %1314 = vmatprep.subr.mxu0 0.0
      %1315 = vmatpush2.xpose.msra.mxu0 0.0
      %1316 = vmatprep.subr.mxu0 0.0
      %1317 = vmatpush2.xpose.msra.mxu0 0.0
      %1318 = vmatprep.subr.mxu0 0.0
      %1319 = vmatpush2.xpose.msra.mxu0 0.0
      %1320 = vmatprep.subr.mxu0 0.0
      %1321 = vmatpush2.xpose.msra.mxu0 0.0
      %1322 = vmatprep.subr.mxu0 0.0
      %1323 = vmatpush2.xpose.msra.mxu0 0.0
      %1324 = vmatprep.subr.mxu0 0.0
      %1325 = vmatpush2.xpose.msra.mxu0 0.0
      %1326 = vmatprep.subr.mxu0 0.0
      %1327 = vmatpush2.xpose.msra.mxu0 0.0
      %1328 = vmatprep.subr.mxu0 0.0
      %1329 = vmatpush2.xpose.msra.mxu0 0.0
      %1330 = vmatprep.subr.mxu0 0.0
      %1331 = vmatpush2.xpose.msra.mxu0 0.0
      %1332 = vmatprep.subr.mxu0 0.0
      %1333 = vmatpush2.xpose.msra.mxu0 0.0
      %1334 = vmatprep.subr.mxu0 0.0
      %1335 = vmatpush2.xpose.msra.mxu0 0.0
      %1336 = vmatprep.subr.mxu0 0.0
      %1337 = vmatpush2.xpose.msra.mxu0 0.0
      %1338 = vmatprep.mubr.f32.mxu0 0.0
      %1339 = vmatmul.mubr.f32.gmra.mxu0 %v1242
      %v1340 = vpop.f32.mrf.mxu0
      %v1341 = vadd.f32 0.0, %v1340
      %v1342 = vpop.f32.mrf.mxu0
      %1343 = vmatprep.mubr.f32.mxu0 0.0
      %1344 = vmatmul.mubr.f32.gmra.mxu0 %v1244
      %v1345 = vpop.f32.mrf.mxu0
      %v1346 = vadd.f32 0.0, %v1345
      %v1347 = vpop.f32.mrf.mxu0
      %1348 = vmatprep.mubr.f32.mxu0 0.0
      %1349 = vmatmul.mubr.f32.gmra.mxu0 %v1246
      %v1350 = vpop.f32.mrf.mxu0
      %v1351 = vadd.f32 0.0, %v1350
      %v1352 = vpop.f32.mrf.mxu0
      %1353 = vmatprep.mubr.f32.mxu0 0.0
      %1354 = vmatmul.mubr.f32.gmra.mxu0 %v1248
      %v1355 = vpop.f32.mrf.mxu0
      %v1356 = vadd.f32 0.0, %v1355
      %v1357 = vpop.f32.mrf.mxu0
      %1358 = vmatprep.mubr.f32.mxu0 0.0
      %1359 = vmatmul.mubr.f32.gmra.mxu0 %v1250
      %v1360 = vpop.f32.mrf.mxu0
      %v1361 = vadd.f32 0.0, %v1360
      %v1362 = vpop.f32.mrf.mxu0
      %1363 = vmatprep.mubr.f32.mxu0 0.0
      %1364 = vmatmul.mubr.f32.gmra.mxu0 %v1252
      %v1365 = vpop.f32.mrf.mxu0
      %v1366 = vadd.f32 0.0, %v1365
      %v1367 = vpop.f32.mrf.mxu0
      %1368 = vmatprep.mubr.f32.mxu0 0.0
      %1369 = vmatmul.mubr.f32.gmra.mxu0 %v1254
      %v1370 = vpop.f32.mrf.mxu0
      %v1371 = vadd.f32 0.0, %v1370
      %v1372 = vpop.f32.mrf.mxu0
      %1373 = vmatprep.mubr.f32.mxu0 0.0
      %1374 = vmatmul.mubr.f32.gmra.mxu0 %v1256
      %v1375 = vpop.f32.mrf.mxu0
      %v1376 = vadd.f32 0.0, %v1375
      %v1377 = vpop.f32.mrf.mxu0
      %1378 = vdwg.mxu0
      %1379 = vrot.lane.b32.xlu0 %v429, 96
      %v1380 = vpop.permute.xlu0 %1379
      %1381 = vrot.lane.b32.xlu0 %v431, 96
      %v1382 = vpop.permute.xlu0 %1381
      %1383 = vrot.lane.b32.xlu0 %v433, 96
      %v1384 = vpop.permute.xlu0 %1383
      %1385 = vrot.lane.b32.xlu0 %v435, 96
      %v1386 = vpop.permute.xlu0 %1385
      %1387 = vrot.lane.b32.xlu0 %v437, 96
      %v1388 = vpop.permute.xlu0 %1387
      %1389 = vrot.lane.b32.xlu0 %v439, 96
      %v1390 = vpop.permute.xlu0 %1389
      %1391 = vrot.lane.b32.xlu0 %v441, 96
      %v1392 = vpop.permute.xlu0 %1391
      %1393 = vrot.lane.b32.xlu0 %v443, 96
      %v1394 = vpop.permute.xlu0 %1393
      %v1395 = vsel %vm476, %v429, 0
      %v1397 = vsel %vm476, %v431, 0
      %v1399 = vsel %vm476, %v433, 0
      %v1401 = vsel %vm476, %v435, 0
      %v1403 = vsel %vm476, %v437, 0
      %v1405 = vsel %vm476, %v439, 0
      %v1407 = vsel %vm476, %v441, 0
      %v1409 = vsel %vm476, %v443, 0
      %v1411 = vsel %vm476, %v1380, 0
      %v1413 = vsel %vm476, %v1382, 0
      %v1415 = vsel %vm476, %v1384, 0
      %v1417 = vsel %vm476, %v1386, 0
      %v1419 = vsel %vm476, %v1388, 0
      %v1421 = vsel %vm476, %v1390, 0
      %v1423 = vsel %vm476, %v1392, 0
      %v1425 = vsel %vm476, %v1394, 0
      %1427 = vmatprep.subr.mxu0 0.0
      %1428 = vmatpush1.xpose.msra.mxu0 0.0
      %1429 = vmatprep.subr.mxu0 0.0
      %1430 = vmatpush1.xpose.msra.mxu0 0.0
      %1431 = vmatprep.subr.mxu0 0.0
      %1432 = vmatpush1.xpose.msra.mxu0 0.0
      %1433 = vmatprep.subr.mxu0 0.0
      %1434 = vmatpush1.xpose.msra.mxu0 0.0
      %1435 = vmatprep.subr.mxu0 0.0
      %1436 = vmatpush1.xpose.msra.mxu0 0.0
      %1437 = vmatprep.subr.mxu0 0.0
      %1438 = vmatpush1.xpose.msra.mxu0 0.0
      %1439 = vmatprep.subr.mxu0 0.0
      %1440 = vmatpush1.xpose.msra.mxu0 0.0
      %1441 = vmatprep.subr.mxu0 0.0
      %1442 = vmatpush1.xpose.msra.mxu0 0.0
      %1443 = vmatprep.subr.mxu0 0.0
      %1444 = vmatpush1.xpose.msra.mxu0 %v1425
      %1445 = vmatprep.subr.mxu0 0.0
      %1446 = vmatpush1.xpose.msra.mxu0 %v1423
      %1447 = vmatprep.subr.mxu0 0.0
      %1448 = vmatpush1.xpose.msra.mxu0 %v1421
      %1449 = vmatprep.subr.mxu0 0.0
      %1450 = vmatpush1.xpose.msra.mxu0 %v1419
      %1451 = vmatprep.subr.mxu0 0.0
      %1452 = vmatpush1.xpose.msra.mxu0 %v1417
      %1453 = vmatprep.subr.mxu0 0.0
      %1454 = vmatpush1.xpose.msra.mxu0 %v1415
      %1455 = vmatprep.subr.mxu0 0.0
      %1456 = vmatpush1.xpose.msra.mxu0 %v1413
      %1457 = vmatprep.subr.mxu0 0.0
      %1458 = vmatpush1.xpose.msra.mxu0 %v1411
      %1459 = vmatprep.subr.mxu0 0.0
      %1460 = vmatpush2.xpose.msra.mxu0 0.0
      %1461 = vmatprep.subr.mxu0 0.0
      %1462 = vmatpush2.xpose.msra.mxu0 0.0
      %1463 = vmatprep.subr.mxu0 0.0
      %1464 = vmatpush2.xpose.msra.mxu0 0.0
      %1465 = vmatprep.subr.mxu0 0.0
      %1466 = vmatpush2.xpose.msra.mxu0 0.0
      %1467 = vmatprep.subr.mxu0 0.0
      %1468 = vmatpush2.xpose.msra.mxu0 0.0
      %1469 = vmatprep.subr.mxu0 0.0
      %1470 = vmatpush2.xpose.msra.mxu0 0.0
      %1471 = vmatprep.subr.mxu0 0.0
      %1472 = vmatpush2.xpose.msra.mxu0 0.0
      %1473 = vmatprep.subr.mxu0 0.0
      %1474 = vmatpush2.xpose.msra.mxu0 0.0
      %1475 = vmatprep.subr.mxu0 0.0
      %1476 = vmatpush2.xpose.msra.mxu0 0.0
      %1477 = vmatprep.subr.mxu0 0.0
      %1478 = vmatpush2.xpose.msra.mxu0 0.0
      %1479 = vmatprep.subr.mxu0 0.0
      %1480 = vmatpush2.xpose.msra.mxu0 0.0
      %1481 = vmatprep.subr.mxu0 0.0
      %1482 = vmatpush2.xpose.msra.mxu0 0.0
      %1483 = vmatprep.subr.mxu0 0.0
      %1484 = vmatpush2.xpose.msra.mxu0 0.0
      %1485 = vmatprep.subr.mxu0 0.0
      %1486 = vmatpush2.xpose.msra.mxu0 0.0
      %1487 = vmatprep.subr.mxu0 0.0
      %1488 = vmatpush2.xpose.msra.mxu0 0.0
      %1489 = vmatprep.subr.mxu0 0.0
      %1490 = vmatpush2.xpose.msra.mxu0 0.0
      %1491 = vmatprep.mubr.f32.mxu0 0.0
      %1492 = vmatmul.mubr.f32.gmra.mxu0 %v1395
      %v1493 = vpop.f32.mrf.mxu0
      %v1494 = vadd.f32 0.0, %v1493
      %v1495 = vpop.f32.mrf.mxu0
      %1496 = vmatprep.mubr.f32.mxu0 0.0
      %1497 = vmatmul.mubr.f32.gmra.mxu0 %v1397
      %v1498 = vpop.f32.mrf.mxu0
      %v1499 = vadd.f32 0.0, %v1498
      %v1500 = vpop.f32.mrf.mxu0
      %1501 = vmatprep.mubr.f32.mxu0 0.0
      %1502 = vmatmul.mubr.f32.gmra.mxu0 %v1399
      %v1503 = vpop.f32.mrf.mxu0
      %v1504 = vadd.f32 0.0, %v1503
      %v1505 = vpop.f32.mrf.mxu0
      %1506 = vmatprep.mubr.f32.mxu0 0.0
      %1507 = vmatmul.mubr.f32.gmra.mxu0 %v1401
      %v1508 = vpop.f32.mrf.mxu0
      %v1509 = vadd.f32 0.0, %v1508
      %v1510 = vpop.f32.mrf.mxu0
      %1511 = vmatprep.mubr.f32.mxu0 0.0
      %1512 = vmatmul.mubr.f32.gmra.mxu0 %v1403
      %v1513 = vpop.f32.mrf.mxu0
      %v1514 = vadd.f32 0.0, %v1513
      %v1515 = vpop.f32.mrf.mxu0
      %1516 = vmatprep.mubr.f32.mxu0 0.0
      %1517 = vmatmul.mubr.f32.gmra.mxu0 %v1405
      %v1518 = vpop.f32.mrf.mxu0
      %v1519 = vadd.f32 0.0, %v1518
      %v1520 = vpop.f32.mrf.mxu0
      %1521 = vmatprep.mubr.f32.mxu0 0.0
      %1522 = vmatmul.mubr.f32.gmra.mxu0 %v1407
      %v1523 = vpop.f32.mrf.mxu0
      %v1524 = vadd.f32 0.0, %v1523
      %v1525 = vpop.f32.mrf.mxu0
      %1526 = vmatprep.mubr.f32.mxu0 0.0
      %1527 = vmatmul.mubr.f32.gmra.mxu0 %v1409
      %v1528 = vpop.f32.mrf.mxu0
      %v1529 = vadd.f32 0.0, %v1528
      %v1530 = vpop.f32.mrf.mxu0
      %1531 = vdwg.mxu0
      %1532 = vrot.lane.b32.xlu0 %v445, 96
      %v1533 = vpop.permute.xlu0 %1532
      %1534 = vrot.lane.b32.xlu0 %v447, 96
      %v1535 = vpop.permute.xlu0 %1534
      %1536 = vrot.lane.b32.xlu0 %v449, 96
      %v1537 = vpop.permute.xlu0 %1536
      %1538 = vrot.lane.b32.xlu0 %v451, 96
      %v1539 = vpop.permute.xlu0 %1538
      %1540 = vrot.lane.b32.xlu0 %v453, 96
      %v1541 = vpop.permute.xlu0 %1540
      %1542 = vrot.lane.b32.xlu0 %v455, 96
      %v1543 = vpop.permute.xlu0 %1542
      %1544 = vrot.lane.b32.xlu0 %v457, 96
      %v1545 = vpop.permute.xlu0 %1544
      %1546 = vrot.lane.b32.xlu0 %v459, 96
      %v1547 = vpop.permute.xlu0 %1546
      %v1548 = vsel %vm476, %v445, 0
      %v1550 = vsel %vm476, %v447, 0
      %v1552 = vsel %vm476, %v449, 0
      %v1554 = vsel %vm476, %v451, 0
      %v1556 = vsel %vm476, %v453, 0
      %v1558 = vsel %vm476, %v455, 0
      %v1560 = vsel %vm476, %v457, 0
      %v1562 = vsel %vm476, %v459, 0
      %v1564 = vsel %vm476, %v1533, 0
      %v1566 = vsel %vm476, %v1535, 0
      %v1568 = vsel %vm476, %v1537, 0
      %v1570 = vsel %vm476, %v1539, 0
      %v1572 = vsel %vm476, %v1541, 0
      %v1574 = vsel %vm476, %v1543, 0
      %v1576 = vsel %vm476, %v1545, 0
      %v1578 = vsel %vm476, %v1547, 0
      %1580 = vmatprep.subr.mxu0 0.0
      %1581 = vmatpush1.xpose.msra.mxu0 0.0
      %1582 = vmatprep.subr.mxu0 0.0
      %1583 = vmatpush1.xpose.msra.mxu0 0.0
      %1584 = vmatprep.subr.mxu0 0.0
      %1585 = vmatpush1.xpose.msra.mxu0 0.0
      %1586 = vmatprep.subr.mxu0 0.0
      %1587 = vmatpush1.xpose.msra.mxu0 0.0
      %1588 = vmatprep.subr.mxu0 0.0
      %1589 = vmatpush1.xpose.msra.mxu0 0.0
      %1590 = vmatprep.subr.mxu0 0.0
      %1591 = vmatpush1.xpose.msra.mxu0 0.0
      %1592 = vmatprep.subr.mxu0 0.0
      %1593 = vmatpush1.xpose.msra.mxu0 0.0
      %1594 = vmatprep.subr.mxu0 0.0
      %1595 = vmatpush1.xpose.msra.mxu0 0.0
      %1596 = vmatprep.subr.mxu0 0.0
      %1597 = vmatpush1.xpose.msra.mxu0 %v1578
      %1598 = vmatprep.subr.mxu0 0.0
      %1599 = vmatpush1.xpose.msra.mxu0 %v1576
      %1600 = vmatprep.subr.mxu0 0.0
      %1601 = vmatpush1.xpose.msra.mxu0 %v1574
      %1602 = vmatprep.subr.mxu0 0.0
      %1603 = vmatpush1.xpose.msra.mxu0 %v1572
      %1604 = vmatprep.subr.mxu0 0.0
      %1605 = vmatpush1.xpose.msra.mxu0 %v1570
      %1606 = vmatprep.subr.mxu0 0.0
      %1607 = vmatpush1.xpose.msra.mxu0 %v1568
      %1608 = vmatprep.subr.mxu0 0.0
      %1609 = vmatpush1.xpose.msra.mxu0 %v1566
      %1610 = vmatprep.subr.mxu0 0.0
      %1611 = vmatpush1.xpose.msra.mxu0 %v1564
      %1612 = vmatprep.subr.mxu0 0.0
      %1613 = vmatpush2.xpose.msra.mxu0 0.0
      %1614 = vmatprep.subr.mxu0 0.0
      %1615 = vmatpush2.xpose.msra.mxu0 0.0
      %1616 = vmatprep.subr.mxu0 0.0
      %1617 = vmatpush2.xpose.msra.mxu0 0.0
      %1618 = vmatprep.subr.mxu0 0.0
      %1619 = vmatpush2.xpose.msra.mxu0 0.0
      %1620 = vmatprep.subr.mxu0 0.0
      %1621 = vmatpush2.xpose.msra.mxu0 0.0
      %1622 = vmatprep.subr.mxu0 0.0
      %1623 = vmatpush2.xpose.msra.mxu0 0.0
      %1624 = vmatprep.subr.mxu0 0.0
      %1625 = vmatpush2.xpose.msra.mxu0 0.0
      %1626 = vmatprep.subr.mxu0 0.0
      %1627 = vmatpush2.xpose.msra.mxu0 0.0
      %1628 = vmatprep.subr.mxu0 0.0
      %1629 = vmatpush2.xpose.msra.mxu0 0.0
      %1630 = vmatprep.subr.mxu0 0.0
      %1631 = vmatpush2.xpose.msra.mxu0 0.0
      %1632 = vmatprep.subr.mxu0 0.0
      %1633 = vmatpush2.xpose.msra.mxu0 0.0
      %1634 = vmatprep.subr.mxu0 0.0
      %1635 = vmatpush2.xpose.msra.mxu0 0.0
      %1636 = vmatprep.subr.mxu0 0.0
      %1637 = vmatpush2.xpose.msra.mxu0 0.0
      %1638 = vmatprep.subr.mxu0 0.0
      %1639 = vmatpush2.xpose.msra.mxu0 0.0
      %1640 = vmatprep.subr.mxu0 0.0
      %1641 = vmatpush2.xpose.msra.mxu0 0.0
      %1642 = vmatprep.subr.mxu0 0.0
      %1643 = vmatpush2.xpose.msra.mxu0 0.0
      %1644 = vmatprep.mubr.f32.mxu0 0.0
      %1645 = vmatmul.mubr.f32.gmra.mxu0 %v1548
      %v1646 = vpop.f32.mrf.mxu0
      %v1647 = vadd.f32 0.0, %v1646
      %v1648 = vpop.f32.mrf.mxu0
      %1649 = vmatprep.mubr.f32.mxu0 0.0
      %1650 = vmatmul.mubr.f32.gmra.mxu0 %v1550
      %v1651 = vpop.f32.mrf.mxu0
      %v1652 = vadd.f32 0.0, %v1651
      %v1653 = vpop.f32.mrf.mxu0
      %1654 = vmatprep.mubr.f32.mxu0 0.0
      %1655 = vmatmul.mubr.f32.gmra.mxu0 %v1552
      %v1656 = vpop.f32.mrf.mxu0
      %v1657 = vadd.f32 0.0, %v1656
      %v1658 = vpop.f32.mrf.mxu0
      %1659 = vmatprep.mubr.f32.mxu0 0.0
      %1660 = vmatmul.mubr.f32.gmra.mxu0 %v1554
      %v1661 = vpop.f32.mrf.mxu0
      %v1662 = vadd.f32 0.0, %v1661
      %v1663 = vpop.f32.mrf.mxu0
      %1664 = vmatprep.mubr.f32.mxu0 0.0
      %1665 = vmatmul.mubr.f32.gmra.mxu0 %v1556
      %v1666 = vpop.f32.mrf.mxu0
      %v1667 = vadd.f32 0.0, %v1666
      %v1668 = vpop.f32.mrf.mxu0
      %1669 = vmatprep.mubr.f32.mxu0 0.0
      %1670 = vmatmul.mubr.f32.gmra.mxu0 %v1558
      %v1671 = vpop.f32.mrf.mxu0
      %v1672 = vadd.f32 0.0, %v1671
      %v1673 = vpop.f32.mrf.mxu0
      %1674 = vmatprep.mubr.f32.mxu0 0.0
      %1675 = vmatmul.mubr.f32.gmra.mxu0 %v1560
      %v1676 = vpop.f32.mrf.mxu0
      %v1677 = vadd.f32 0.0, %v1676
      %v1678 = vpop.f32.mrf.mxu0
      %1679 = vmatprep.mubr.f32.mxu0 0.0
      %1680 = vmatmul.mubr.f32.gmra.mxu0 %v1562
      %v1681 = vpop.f32.mrf.mxu0
      %v1682 = vadd.f32 0.0, %v1681
      %v1683 = vpop.f32.mrf.mxu0
      %1684 = vdwg.mxu0
      %vm1685 = vcmask 523264
      %v1686 = vsel %vm1685, %v576, -inf
      %1687 = vmax.xlane.f32.xlu0 %v1686
      %v1688 = vpop.xlane.xlu0 %1687
      %v1689 = vsel %vm1685, %v581, -inf
      %1690 = vmax.xlane.f32.xlu0 %v1689
      %v1691 = vpop.xlane.xlu0 %1690
      %v1692 = vsel %vm1685, %v586, -inf
      %1693 = vmax.xlane.f32.xlu0 %v1692
      %v1694 = vpop.xlane.xlu0 %1693
      %v1695 = vsel %vm1685, %v591, -inf
      %1696 = vmax.xlane.f32.xlu0 %v1695
      %v1697 = vpop.xlane.xlu0 %1696
      %v1698 = vsel %vm1685, %v596, -inf
      %1699 = vmax.xlane.f32.xlu0 %v1698
      %v1700 = vpop.xlane.xlu0 %1699
      %v1701 = vsel %vm1685, %v601, -inf
      %1702 = vmax.xlane.f32.xlu0 %v1701
      %v1703 = vpop.xlane.xlu0 %1702
      %v1704 = vsel %vm1685, %v606, -inf
      %1705 = vmax.xlane.f32.xlu0 %v1704
      %v1706 = vpop.xlane.xlu0 %1705
      %v1707 = vsel %vm1685, %v611, -inf
      %1708 = vmax.xlane.f32.xlu0 %v1707
      %v1709 = vpop.xlane.xlu0 %1708
      %v1710 = vsel %vm1685, %v729, -inf
      %1711 = vmax.xlane.f32.xlu0 %v1710
      %v1712 = vpop.xlane.xlu0 %1711
      %v1713 = vsel %vm1685, %v734, -inf
      %1714 = vmax.xlane.f32.xlu0 %v1713
      %v1715 = vpop.xlane.xlu0 %1714
      %v1716 = vsel %vm1685, %v739, -inf
      %1717 = vmax.xlane.f32.xlu0 %v1716
      %v1718 = vpop.xlane.xlu0 %1717
      %v1719 = vsel %vm1685, %v744, -inf
      %1720 = vmax.xlane.f32.xlu0 %v1719
      %v1721 = vpop.xlane.xlu0 %1720
      %v1722 = vsel %vm1685, %v749, -inf
      %1723 = vmax.xlane.f32.xlu0 %v1722
      %v1724 = vpop.xlane.xlu0 %1723
      %v1725 = vsel %vm1685, %v754, -inf
      %1726 = vmax.xlane.f32.xlu0 %v1725
      %v1727 = vpop.xlane.xlu0 %1726
      %v1728 = vsel %vm1685, %v759, -inf
      %1729 = vmax.xlane.f32.xlu0 %v1728
      %v1730 = vpop.xlane.xlu0 %1729
      %v1731 = vsel %vm1685, %v764, -inf
      %1732 = vmax.xlane.f32.xlu0 %v1731
      %v1733 = vpop.xlane.xlu0 %1732
      %v1734 = vsel %vm1685, %v882, -inf
      %1735 = vmax.xlane.f32.xlu0 %v1734
      %v1736 = vpop.xlane.xlu0 %1735
      %v1737 = vsel %vm1685, %v887, -inf
      %1738 = vmax.xlane.f32.xlu0 %v1737
      %v1739 = vpop.xlane.xlu0 %1738
      %v1740 = vsel %vm1685, %v892, -inf
      %1741 = vmax.xlane.f32.xlu0 %v1740
      %v1742 = vpop.xlane.xlu0 %1741
      %v1743 = vsel %vm1685, %v897, -inf
      %1744 = vmax.xlane.f32.xlu0 %v1743
      %v1745 = vpop.xlane.xlu0 %1744
      %v1746 = vsel %vm1685, %v902, -inf
      %1747 = vmax.xlane.f32.xlu0 %v1746
      %v1748 = vpop.xlane.xlu0 %1747
      %v1749 = vsel %vm1685, %v907, -inf
      %1750 = vmax.xlane.f32.xlu0 %v1749
      %v1751 = vpop.xlane.xlu0 %1750
      %v1752 = vsel %vm1685, %v912, -inf
      %1753 = vmax.xlane.f32.xlu0 %v1752
      %v1754 = vpop.xlane.xlu0 %1753
      %v1755 = vsel %vm1685, %v917, -inf
      %1756 = vmax.xlane.f32.xlu0 %v1755
      %v1757 = vpop.xlane.xlu0 %1756
      %v1758 = vsel %vm1685, %v1035, -inf
      %1759 = vmax.xlane.f32.xlu0 %v1758
      %v1760 = vpop.xlane.xlu0 %1759
      %v1761 = vsel %vm1685, %v1040, -inf
      %1762 = vmax.xlane.f32.xlu0 %v1761
      %v1763 = vpop.xlane.xlu0 %1762
      %v1764 = vsel %vm1685, %v1045, -inf
      %1765 = vmax.xlane.f32.xlu0 %v1764
      %v1766 = vpop.xlane.xlu0 %1765
      %v1767 = vsel %vm1685, %v1050, -inf
      %1768 = vmax.xlane.f32.xlu0 %v1767
      %v1769 = vpop.xlane.xlu0 %1768
      %v1770 = vsel %vm1685, %v1055, -inf
      %1771 = vmax.xlane.f32.xlu0 %v1770
      %v1772 = vpop.xlane.xlu0 %1771
      %v1773 = vsel %vm1685, %v1060, -inf
      %1774 = vmax.xlane.f32.xlu0 %v1773
      %v1775 = vpop.xlane.xlu0 %1774
      %v1776 = vsel %vm1685, %v1065, -inf
      %1777 = vmax.xlane.f32.xlu0 %v1776
      %v1778 = vpop.xlane.xlu0 %1777
      %v1779 = vsel %vm1685, %v1070, -inf
      %1780 = vmax.xlane.f32.xlu0 %v1779
      %v1781 = vpop.xlane.xlu0 %1780
      %v1782 = vsel %vm1685, %v1188, -inf
      %1783 = vmax.xlane.f32.xlu0 %v1782
      %v1784 = vpop.xlane.xlu0 %1783
      %v1785 = vsel %vm1685, %v1193, -inf
      %1786 = vmax.xlane.f32.xlu0 %v1785
      %v1787 = vpop.xlane.xlu0 %1786
      %v1788 = vsel %vm1685, %v1198, -inf
      %1789 = vmax.xlane.f32.xlu0 %v1788
      %v1790 = vpop.xlane.xlu0 %1789
      %v1791 = vsel %vm1685, %v1203, -inf
      %1792 = vmax.xlane.f32.xlu0 %v1791
      %v1793 = vpop.xlane.xlu0 %1792
      %v1794 = vsel %vm1685, %v1208, -inf
      %1795 = vmax.xlane.f32.xlu0 %v1794
      %v1796 = vpop.xlane.xlu0 %1795
      %v1797 = vsel %vm1685, %v1213, -inf
      %1798 = vmax.xlane.f32.xlu0 %v1797
      %v1799 = vpop.xlane.xlu0 %1798
      %v1800 = vsel %vm1685, %v1218, -inf
      %1801 = vmax.xlane.f32.xlu0 %v1800
      %v1802 = vpop.xlane.xlu0 %1801
      %v1803 = vsel %vm1685, %v1223, -inf
      %1804 = vmax.xlane.f32.xlu0 %v1803
      %v1805 = vpop.xlane.xlu0 %1804
      %v1806 = vsel %vm1685, %v1341, -inf
      %1807 = vmax.xlane.f32.xlu0 %v1806
      %v1808 = vpop.xlane.xlu0 %1807
      %v1809 = vsel %vm1685, %v1346, -inf
      %1810 = vmax.xlane.f32.xlu0 %v1809
      %v1811 = vpop.xlane.xlu0 %1810
      %v1812 = vsel %vm1685, %v1351, -inf
      %1813 = vmax.xlane.f32.xlu0 %v1812
      %v1814 = vpop.xlane.xlu0 %1813
      %v1815 = vsel %vm1685, %v1356, -inf
      %1816 = vmax.xlane.f32.xlu0 %v1815
      %v1817 = vpop.xlane.xlu0 %1816
      %v1818 = vsel %vm1685, %v1361, -inf
      %1819 = vmax.xlane.f32.xlu0 %v1818
      %v1820 = vpop.xlane.xlu0 %1819
      %v1821 = vsel %vm1685, %v1366, -inf
      %1822 = vmax.xlane.f32.xlu0 %v1821
      %v1823 = vpop.xlane.xlu0 %1822
      %v1824 = vsel %vm1685, %v1371, -inf
      %1825 = vmax.xlane.f32.xlu0 %v1824
      %v1826 = vpop.xlane.xlu0 %1825
      %v1827 = vsel %vm1685, %v1376, -inf
      %1828 = vmax.xlane.f32.xlu0 %v1827
      %v1829 = vpop.xlane.xlu0 %1828
      %v1830 = vsel %vm1685, %v1494, -inf
      %1831 = vmax.xlane.f32.xlu0 %v1830
      %v1832 = vpop.xlane.xlu0 %1831
      %v1833 = vsel %vm1685, %v1499, -inf
      %1834 = vmax.xlane.f32.xlu0 %v1833
      %v1835 = vpop.xlane.xlu0 %1834
      %v1836 = vsel %vm1685, %v1504, -inf
      %1837 = vmax.xlane.f32.xlu0 %v1836
      %v1838 = vpop.xlane.xlu0 %1837
      %v1839 = vsel %vm1685, %v1509, -inf
      %1840 = vmax.xlane.f32.xlu0 %v1839
      %v1841 = vpop.xlane.xlu0 %1840
      %v1842 = vsel %vm1685, %v1514, -inf
      %1843 = vmax.xlane.f32.xlu0 %v1842
      %v1844 = vpop.xlane.xlu0 %1843
      %v1845 = vsel %vm1685, %v1519, -inf
      %1846 = vmax.xlane.f32.xlu0 %v1845
      %v1847 = vpop.xlane.xlu0 %1846
      %v1848 = vsel %vm1685, %v1524, -inf
      %1849 = vmax.xlane.f32.xlu0 %v1848
      %v1850 = vpop.xlane.xlu0 %1849
      %v1851 = vsel %vm1685, %v1529, -inf
      %1852 = vmax.xlane.f32.xlu0 %v1851
      %v1853 = vpop.xlane.xlu0 %1852
      %v1854 = vsel %vm1685, %v1647, -inf
      %1855 = vmax.xlane.f32.xlu0 %v1854
      %v1856 = vpop.xlane.xlu0 %1855
      %v1857 = vsel %vm1685, %v1652, -inf
      %1858 = vmax.xlane.f32.xlu0 %v1857
      %v1859 = vpop.xlane.xlu0 %1858
      %v1860 = vsel %vm1685, %v1657, -inf
      %1861 = vmax.xlane.f32.xlu0 %v1860
      %v1862 = vpop.xlane.xlu0 %1861
      %v1863 = vsel %vm1685, %v1662, -inf
      %1864 = vmax.xlane.f32.xlu0 %v1863
      %v1865 = vpop.xlane.xlu0 %1864
      %v1866 = vsel %vm1685, %v1667, -inf
      %1867 = vmax.xlane.f32.xlu0 %v1866
      %v1868 = vpop.xlane.xlu0 %1867
      %v1869 = vsel %vm1685, %v1672, -inf
      %1870 = vmax.xlane.f32.xlu0 %v1869
      %v1871 = vpop.xlane.xlu0 %1870
      %v1872 = vsel %vm1685, %v1677, -inf
      %1873 = vmax.xlane.f32.xlu0 %v1872
      %v1874 = vpop.xlane.xlu0 %1873
      %v1875 = vsel %vm1685, %v1682, -inf
      %1876 = vmax.xlane.f32.xlu0 %v1875
      %v1877 = vpop.xlane.xlu0 %1876
      %v1878 = vsub.f32 %v576, %v1688
      %v1879 = vsub.f32 %v581, %v1691
      %v1880 = vsub.f32 %v586, %v1694
      %v1881 = vsub.f32 %v591, %v1697
      %v1882 = vsub.f32 %v596, %v1700
      %v1883 = vsub.f32 %v601, %v1703
      %v1884 = vsub.f32 %v606, %v1706
      %v1885 = vsub.f32 %v611, %v1709
      %v1886 = vsub.f32 %v729, %v1712
      %v1887 = vsub.f32 %v734, %v1715
      %v1888 = vsub.f32 %v739, %v1718
      %v1889 = vsub.f32 %v744, %v1721
      %v1890 = vsub.f32 %v749, %v1724
      %v1891 = vsub.f32 %v754, %v1727
      %v1892 = vsub.f32 %v759, %v1730
      %v1893 = vsub.f32 %v764, %v1733
      %v1894 = vsub.f32 %v882, %v1736
      %v1895 = vsub.f32 %v887, %v1739
      %v1896 = vsub.f32 %v892, %v1742
      %v1897 = vsub.f32 %v897, %v1745
      %v1898 = vsub.f32 %v902, %v1748
      %v1899 = vsub.f32 %v907, %v1751
      %v1900 = vsub.f32 %v912, %v1754
      %v1901 = vsub.f32 %v917, %v1757
      %v1902 = vsub.f32 %v1035, %v1760
      %v1903 = vsub.f32 %v1040, %v1763
      %v1904 = vsub.f32 %v1045, %v1766
      %v1905 = vsub.f32 %v1050, %v1769
      %v1906 = vsub.f32 %v1055, %v1772
      %v1907 = vsub.f32 %v1060, %v1775
      %v1908 = vsub.f32 %v1065, %v1778
      %v1909 = vsub.f32 %v1070, %v1781
      %v1910 = vsub.f32 %v1188, %v1784
      %v1911 = vsub.f32 %v1193, %v1787
      %v1912 = vsub.f32 %v1198, %v1790
      %v1913 = vsub.f32 %v1203, %v1793
      %v1914 = vsub.f32 %v1208, %v1796
      %v1915 = vsub.f32 %v1213, %v1799
      %v1916 = vsub.f32 %v1218, %v1802
      %v1917 = vsub.f32 %v1223, %v1805
      %v1918 = vsub.f32 %v1341, %v1808
      %v1919 = vsub.f32 %v1346, %v1811
      %v1920 = vsub.f32 %v1351, %v1814
      %v1921 = vsub.f32 %v1356, %v1817
      %v1922 = vsub.f32 %v1361, %v1820
      %v1923 = vsub.f32 %v1366, %v1823
      %v1924 = vsub.f32 %v1371, %v1826
      %v1925 = vsub.f32 %v1376, %v1829
      %v1926 = vsub.f32 %v1494, %v1832
      %v1927 = vsub.f32 %v1499, %v1835
      %v1928 = vsub.f32 %v1504, %v1838
      %v1929 = vsub.f32 %v1509, %v1841
      %v1930 = vsub.f32 %v1514, %v1844
      %v1931 = vsub.f32 %v1519, %v1847
      %v1932 = vsub.f32 %v1524, %v1850
      %v1933 = vsub.f32 %v1529, %v1853
      %v1934 = vsub.f32 %v1647, %v1856
      %v1935 = vsub.f32 %v1652, %v1859
      %v1936 = vsub.f32 %v1657, %v1862
      %v1937 = vsub.f32 %v1662, %v1865
      %v1938 = vsub.f32 %v1667, %v1868
      %v1939 = vsub.f32 %v1672, %v1871
      %v1940 = vsub.f32 %v1677, %v1874
      %v1941 = vsub.f32 %v1682, %v1877
      %v1942 = vmul.f32 %v1878, 1.442695
      %v1943 = vpow.pop %v1942
      %v1944 = vmul.f32 %v1879, 1.442695
      %v1945 = vpow.pop %v1944
      %v1946 = vmul.f32 %v1880, 1.442695
      %v1947 = vpow.pop %v1946
      %v1948 = vmul.f32 %v1881, 1.442695
      %v1949 = vpow.pop %v1948
      %v1950 = vmul.f32 %v1882, 1.442695
      %v1951 = vpow.pop %v1950
      %v1952 = vmul.f32 %v1883, 1.442695
      %v1953 = vpow.pop %v1952
      %v1954 = vmul.f32 %v1884, 1.442695
      %v1955 = vpow.pop %v1954
      %v1956 = vmul.f32 %v1885, 1.442695
      %v1957 = vpow.pop %v1956
      %v1958 = vmul.f32 %v1886, 1.442695
      %v1959 = vpow.pop %v1958
      %v1960 = vmul.f32 %v1887, 1.442695
      %v1961 = vpow.pop %v1960
      %v1962 = vmul.f32 %v1888, 1.442695
      %v1963 = vpow.pop %v1962
      %v1964 = vmul.f32 %v1889, 1.442695
      %v1965 = vpow.pop %v1964
      %v1966 = vmul.f32 %v1890, 1.442695
      %v1967 = vpow.pop %v1966
      %v1968 = vmul.f32 %v1891, 1.442695
      %v1969 = vpow.pop %v1968
      %v1970 = vmul.f32 %v1892, 1.442695
      %v1971 = vpow.pop %v1970
      %v1972 = vmul.f32 %v1893, 1.442695
      %v1973 = vpow.pop %v1972
      %v1974 = vmul.f32 %v1894, 1.442695
      %v1975 = vpow.pop %v1974
      %v1976 = vmul.f32 %v1895, 1.442695
      %v1977 = vpow.pop %v1976
      %v1978 = vmul.f32 %v1896, 1.442695
      %v1979 = vpow.pop %v1978
      %v1980 = vmul.f32 %v1897, 1.442695
      %v1981 = vpow.pop %v1980
      %v1982 = vmul.f32 %v1898, 1.442695
      %v1983 = vpow.pop %v1982
      %v1984 = vmul.f32 %v1899, 1.442695
      %v1985 = vpow.pop %v1984
      %v1986 = vmul.f32 %v1900, 1.442695
      %v1987 = vpow.pop %v1986
      %v1988 = vmul.f32 %v1901, 1.442695
      %v1989 = vpow.pop %v1988
      %v1990 = vmul.f32 %v1902, 1.442695
      %v1991 = vpow.pop %v1990
      %v1992 = vmul.f32 %v1903, 1.442695
      %v1993 = vpow.pop %v1992
      %v1994 = vmul.f32 %v1904, 1.442695
      %v1995 = vpow.pop %v1994
      %v1996 = vmul.f32 %v1905, 1.442695
      %v1997 = vpow.pop %v1996
      %v1998 = vmul.f32 %v1906, 1.442695
      %v1999 = vpow.pop %v1998
      %v2000 = vmul.f32 %v1907, 1.442695
      %v2001 = vpow.pop %v2000
      %v2002 = vmul.f32 %v1908, 1.442695
      %v2003 = vpow.pop %v2002
      %v2004 = vmul.f32 %v1909, 1.442695
      %v2005 = vpow.pop %v2004
      %v2006 = vmul.f32 %v1910, 1.442695
      %v2007 = vpow.pop %v2006
      %v2008 = vmul.f32 %v1911, 1.442695
      %v2009 = vpow.pop %v2008
      %v2010 = vmul.f32 %v1912, 1.442695
      %v2011 = vpow.pop %v2010
      %v2012 = vmul.f32 %v1913, 1.442695
      %v2013 = vpow.pop %v2012
      %v2014 = vmul.f32 %v1914, 1.442695
      %v2015 = vpow.pop %v2014
      %v2016 = vmul.f32 %v1915, 1.442695
      %v2017 = vpow.pop %v2016
      %v2018 = vmul.f32 %v1916, 1.442695
      %v2019 = vpow.pop %v2018
      %v2020 = vmul.f32 %v1917, 1.442695
      %v2021 = vpow.pop %v2020
      %v2022 = vmul.f32 %v1918, 1.442695
      %v2023 = vpow.pop %v2022
      %v2024 = vmul.f32 %v1919, 1.442695
      %v2025 = vpow.pop %v2024
      %v2026 = vmul.f32 %v1920, 1.442695
      %v2027 = vpow.pop %v2026
      %v2028 = vmul.f32 %v1921, 1.442695
      %v2029 = vpow.pop %v2028
      %v2030 = vmul.f32 %v1922, 1.442695
      %v2031 = vpow.pop %v2030
      %v2032 = vmul.f32 %v1923, 1.442695
      %v2033 = vpow.pop %v2032
      %v2034 = vmul.f32 %v1924, 1.442695
      %v2035 = vpow.pop %v2034
      %v2036 = vmul.f32 %v1925, 1.442695
      %v2037 = vpow.pop %v2036
      %v2038 = vmul.f32 %v1926, 1.442695
      %v2039 = vpow.pop %v2038
      %v2040 = vmul.f32 %v1927, 1.442695
      %v2041 = vpow.pop %v2040
      %v2042 = vmul.f32 %v1928, 1.442695
      %v2043 = vpow.pop %v2042
      %v2044 = vmul.f32 %v1929, 1.442695
      %v2045 = vpow.pop %v2044
      %v2046 = vmul.f32 %v1930, 1.442695
      %v2047 = vpow.pop %v2046
      %v2048 = vmul.f32 %v1931, 1.442695
      %v2049 = vpow.pop %v2048
      %v2050 = vmul.f32 %v1932, 1.442695
      %v2051 = vpow.pop %v2050
      %v2052 = vmul.f32 %v1933, 1.442695
      %v2053 = vpow.pop %v2052
      %v2054 = vmul.f32 %v1934, 1.442695
      %v2055 = vpow.pop %v2054
      %v2056 = vmul.f32 %v1935, 1.442695
      %v2057 = vpow.pop %v2056
      %v2058 = vmul.f32 %v1936, 1.442695
      %v2059 = vpow.pop %v2058
      %v2060 = vmul.f32 %v1937, 1.442695
      %v2061 = vpow.pop %v2060
      %v2062 = vmul.f32 %v1938, 1.442695
      %v2063 = vpow.pop %v2062
      %v2064 = vmul.f32 %v1939, 1.442695
      %v2065 = vpow.pop %v2064
      %v2066 = vmul.f32 %v1940, 1.442695
      %v2067 = vpow.pop %v2066
      %v2068 = vmul.f32 %v1941, 1.442695
      %v2069 = vpow.pop %v2068
      %v2070 = vsel %vm1685, %v1943, 0.0
      %2071 = vadd.xlane.f32.xlu0 %v2070
      %v2072 = vpop.xlane.xlu0 %2071
      %v2073 = vsel %vm1685, %v1945, 0.0
      %2074 = vadd.xlane.f32.xlu0 %v2073
      %v2075 = vpop.xlane.xlu0 %2074
      %v2076 = vsel %vm1685, %v1947, 0.0
      %2077 = vadd.xlane.f32.xlu0 %v2076
      %v2078 = vpop.xlane.xlu0 %2077
      %v2079 = vsel %vm1685, %v1949, 0.0
      %2080 = vadd.xlane.f32.xlu0 %v2079
      %v2081 = vpop.xlane.xlu0 %2080
      %v2082 = vsel %vm1685, %v1951, 0.0
      %2083 = vadd.xlane.f32.xlu0 %v2082
      %v2084 = vpop.xlane.xlu0 %2083
      %v2085 = vsel %vm1685, %v1953, 0.0
      %2086 = vadd.xlane.f32.xlu0 %v2085
      %v2087 = vpop.xlane.xlu0 %2086
      %v2088 = vsel %vm1685, %v1955, 0.0
      %2089 = vadd.xlane.f32.xlu0 %v2088
      %v2090 = vpop.xlane.xlu0 %2089
      %v2091 = vsel %vm1685, %v1957, 0.0
      %2092 = vadd.xlane.f32.xlu0 %v2091
      %v2093 = vpop.xlane.xlu0 %2092
      %v2094 = vsel %vm1685, %v1959, 0.0
      %2095 = vadd.xlane.f32.xlu0 %v2094
      %v2096 = vpop.xlane.xlu0 %2095
      %v2097 = vsel %vm1685, %v1961, 0.0
      %2098 = vadd.xlane.f32.xlu0 %v2097
      %v2099 = vpop.xlane.xlu0 %2098
      %v2100 = vsel %vm1685, %v1963, 0.0
      %2101 = vadd.xlane.f32.xlu0 %v2100
      %v2102 = vpop.xlane.xlu0 %2101
      %v2103 = vsel %vm1685, %v1965, 0.0
      %2104 = vadd.xlane.f32.xlu0 %v2103
      %v2105 = vpop.xlane.xlu0 %2104
      %v2106 = vsel %vm1685, %v1967, 0.0
      %2107 = vadd.xlane.f32.xlu0 %v2106
      %v2108 = vpop.xlane.xlu0 %2107
      %v2109 = vsel %vm1685, %v1969, 0.0
      %2110 = vadd.xlane.f32.xlu0 %v2109
      %v2111 = vpop.xlane.xlu0 %2110
      %v2112 = vsel %vm1685, %v1971, 0.0
      %2113 = vadd.xlane.f32.xlu0 %v2112
      %v2114 = vpop.xlane.xlu0 %2113
      %v2115 = vsel %vm1685, %v1973, 0.0
      %2116 = vadd.xlane.f32.xlu0 %v2115
      %v2117 = vpop.xlane.xlu0 %2116
      %v2118 = vsel %vm1685, %v1975, 0.0
      %2119 = vadd.xlane.f32.xlu0 %v2118
      %v2120 = vpop.xlane.xlu0 %2119
      %v2121 = vsel %vm1685, %v1977, 0.0
      %2122 = vadd.xlane.f32.xlu0 %v2121
      %v2123 = vpop.xlane.xlu0 %2122
      %v2124 = vsel %vm1685, %v1979, 0.0
      %2125 = vadd.xlane.f32.xlu0 %v2124
      %v2126 = vpop.xlane.xlu0 %2125
      %v2127 = vsel %vm1685, %v1981, 0.0
      %2128 = vadd.xlane.f32.xlu0 %v2127
      %v2129 = vpop.xlane.xlu0 %2128
      %v2130 = vsel %vm1685, %v1983, 0.0
      %2131 = vadd.xlane.f32.xlu0 %v2130
      %v2132 = vpop.xlane.xlu0 %2131
      %v2133 = vsel %vm1685, %v1985, 0.0
      %2134 = vadd.xlane.f32.xlu0 %v2133
      %v2135 = vpop.xlane.xlu0 %2134
      %v2136 = vsel %vm1685, %v1987, 0.0
      %2137 = vadd.xlane.f32.xlu0 %v2136
      %v2138 = vpop.xlane.xlu0 %2137
      %v2139 = vsel %vm1685, %v1989, 0.0
      %2140 = vadd.xlane.f32.xlu0 %v2139
      %v2141 = vpop.xlane.xlu0 %2140
      %v2142 = vsel %vm1685, %v1991, 0.0
      %2143 = vadd.xlane.f32.xlu0 %v2142
      %v2144 = vpop.xlane.xlu0 %2143
      %v2145 = vsel %vm1685, %v1993, 0.0
      %2146 = vadd.xlane.f32.xlu0 %v2145
      %v2147 = vpop.xlane.xlu0 %2146
      %v2148 = vsel %vm1685, %v1995, 0.0
      %2149 = vadd.xlane.f32.xlu0 %v2148
      %v2150 = vpop.xlane.xlu0 %2149
      %v2151 = vsel %vm1685, %v1997, 0.0
      %2152 = vadd.xlane.f32.xlu0 %v2151
      %v2153 = vpop.xlane.xlu0 %2152
      %v2154 = vsel %vm1685, %v1999, 0.0
      %2155 = vadd.xlane.f32.xlu0 %v2154
      %v2156 = vpop.xlane.xlu0 %2155
      %v2157 = vsel %vm1685, %v2001, 0.0
      %2158 = vadd.xlane.f32.xlu0 %v2157
      %v2159 = vpop.xlane.xlu0 %2158
      %v2160 = vsel %vm1685, %v2003, 0.0
      %2161 = vadd.xlane.f32.xlu0 %v2160
      %v2162 = vpop.xlane.xlu0 %2161
      %v2163 = vsel %vm1685, %v2005, 0.0
      %2164 = vadd.xlane.f32.xlu0 %v2163
      %v2165 = vpop.xlane.xlu0 %2164
      %v2166 = vsel %vm1685, %v2007, 0.0
      %2167 = vadd.xlane.f32.xlu0 %v2166
      %v2168 = vpop.xlane.xlu0 %2167
      %v2169 = vsel %vm1685, %v2009, 0.0
      %2170 = vadd.xlane.f32.xlu0 %v2169
      %v2171 = vpop.xlane.xlu0 %2170
      %v2172 = vsel %vm1685, %v2011, 0.0
      %2173 = vadd.xlane.f32.xlu0 %v2172
      %v2174 = vpop.xlane.xlu0 %2173
      %v2175 = vsel %vm1685, %v2013, 0.0
      %2176 = vadd.xlane.f32.xlu0 %v2175
      %v2177 = vpop.xlane.xlu0 %2176
      %v2178 = vsel %vm1685, %v2015, 0.0
      %2179 = vadd.xlane.f32.xlu0 %v2178
      %v2180 = vpop.xlane.xlu0 %2179
      %v2181 = vsel %vm1685, %v2017, 0.0
      %2182 = vadd.xlane.f32.xlu0 %v2181
      %v2183 = vpop.xlane.xlu0 %2182
      %v2184 = vsel %vm1685, %v2019, 0.0
      %2185 = vadd.xlane.f32.xlu0 %v2184
      %v2186 = vpop.xlane.xlu0 %2185
      %v2187 = vsel %vm1685, %v2021, 0.0
      %2188 = vadd.xlane.f32.xlu0 %v2187
      %v2189 = vpop.xlane.xlu0 %2188
      %v2190 = vsel %vm1685, %v2023, 0.0
      %2191 = vadd.xlane.f32.xlu0 %v2190
      %v2192 = vpop.xlane.xlu0 %2191
      %v2193 = vsel %vm1685, %v2025, 0.0
      %2194 = vadd.xlane.f32.xlu0 %v2193
      %v2195 = vpop.xlane.xlu0 %2194
      %v2196 = vsel %vm1685, %v2027, 0.0
      %2197 = vadd.xlane.f32.xlu0 %v2196
      %v2198 = vpop.xlane.xlu0 %2197
      %v2199 = vsel %vm1685, %v2029, 0.0
      %2200 = vadd.xlane.f32.xlu0 %v2199
      %v2201 = vpop.xlane.xlu0 %2200
      %v2202 = vsel %vm1685, %v2031, 0.0
      %2203 = vadd.xlane.f32.xlu0 %v2202
      %v2204 = vpop.xlane.xlu0 %2203
      %v2205 = vsel %vm1685, %v2033, 0.0
      %2206 = vadd.xlane.f32.xlu0 %v2205
      %v2207 = vpop.xlane.xlu0 %2206
      %v2208 = vsel %vm1685, %v2035, 0.0
      %2209 = vadd.xlane.f32.xlu0 %v2208
      %v2210 = vpop.xlane.xlu0 %2209
      %v2211 = vsel %vm1685, %v2037, 0.0
      %2212 = vadd.xlane.f32.xlu0 %v2211
      %v2213 = vpop.xlane.xlu0 %2212
      %v2214 = vsel %vm1685, %v2039, 0.0
      %2215 = vadd.xlane.f32.xlu0 %v2214
      %v2216 = vpop.xlane.xlu0 %2215
      %v2217 = vsel %vm1685, %v2041, 0.0
      %2218 = vadd.xlane.f32.xlu0 %v2217
      %v2219 = vpop.xlane.xlu0 %2218
      %v2220 = vsel %vm1685, %v2043, 0.0
      %2221 = vadd.xlane.f32.xlu0 %v2220
      %v2222 = vpop.xlane.xlu0 %2221
      %v2223 = vsel %vm1685, %v2045, 0.0
      %2224 = vadd.xlane.f32.xlu0 %v2223
      %v2225 = vpop.xlane.xlu0 %2224
      %v2226 = vsel %vm1685, %v2047, 0.0
      %2227 = vadd.xlane.f32.xlu0 %v2226
      %v2228 = vpop.xlane.xlu0 %2227
      %v2229 = vsel %vm1685, %v2049, 0.0
      %2230 = vadd.xlane.f32.xlu0 %v2229
      %v2231 = vpop.xlane.xlu0 %2230
      %v2232 = vsel %vm1685, %v2051, 0.0
      %2233 = vadd.xlane.f32.xlu0 %v2232
      %v2234 = vpop.xlane.xlu0 %2233
      %v2235 = vsel %vm1685, %v2053, 0.0
      %2236 = vadd.xlane.f32.xlu0 %v2235
      %v2237 = vpop.xlane.xlu0 %2236
      %v2238 = vsel %vm1685, %v2055, 0.0
      %2239 = vadd.xlane.f32.xlu0 %v2238
      %v2240 = vpop.xlane.xlu0 %2239
      %v2241 = vsel %vm1685, %v2057, 0.0
      %2242 = vadd.xlane.f32.xlu0 %v2241
      %v2243 = vpop.xlane.xlu0 %2242
      %v2244 = vsel %vm1685, %v2059, 0.0
      %2245 = vadd.xlane.f32.xlu0 %v2244
      %v2246 = vpop.xlane.xlu0 %2245
      %v2247 = vsel %vm1685, %v2061, 0.0
      %2248 = vadd.xlane.f32.xlu0 %v2247
      %v2249 = vpop.xlane.xlu0 %2248
      %v2250 = vsel %vm1685, %v2063, 0.0
      %2251 = vadd.xlane.f32.xlu0 %v2250
      %v2252 = vpop.xlane.xlu0 %2251
      %v2253 = vsel %vm1685, %v2065, 0.0
      %2254 = vadd.xlane.f32.xlu0 %v2253
      %v2255 = vpop.xlane.xlu0 %2254
      %v2256 = vsel %vm1685, %v2067, 0.0
      %2257 = vadd.xlane.f32.xlu0 %v2256
      %v2258 = vpop.xlane.xlu0 %2257
      %v2259 = vsel %vm1685, %v2069, 0.0
      %2260 = vadd.xlane.f32.xlu0 %v2259
      %v2261 = vpop.xlane.xlu0 %2260
      %v2262 = vrcp.pop %v2072
      %v2263 = vrcp.pop %v2075
      %v2264 = vrcp.pop %v2078
      %v2265 = vrcp.pop %v2081
      %v2266 = vrcp.pop %v2084
      %v2267 = vrcp.pop %v2087
      %v2268 = vrcp.pop %v2090
      %v2269 = vrcp.pop %v2093
      %v2270 = vrcp.pop %v2096
      %v2271 = vrcp.pop %v2099
      %v2272 = vrcp.pop %v2102
      %v2273 = vrcp.pop %v2105
      %v2274 = vrcp.pop %v2108
      %v2275 = vrcp.pop %v2111
      %v2276 = vrcp.pop %v2114
      %v2277 = vrcp.pop %v2117
      %v2278 = vrcp.pop %v2120
      %v2279 = vrcp.pop %v2123
      %v2280 = vrcp.pop %v2126
      %v2281 = vrcp.pop %v2129
      %v2282 = vrcp.pop %v2132
      %v2283 = vrcp.pop %v2135
      %v2284 = vrcp.pop %v2138
      %v2285 = vrcp.pop %v2141
      %v2286 = vrcp.pop %v2144
      %v2287 = vrcp.pop %v2147
      %v2288 = vrcp.pop %v2150
      %v2289 = vrcp.pop %v2153
      %v2290 = vrcp.pop %v2156
      %v2291 = vrcp.pop %v2159
      %v2292 = vrcp.pop %v2162
      %v2293 = vrcp.pop %v2165
      %v2294 = vrcp.pop %v2168
      %v2295 = vrcp.pop %v2171
      %v2296 = vrcp.pop %v2174
      %v2297 = vrcp.pop %v2177
      %v2298 = vrcp.pop %v2180
      %v2299 = vrcp.pop %v2183
      %v2300 = vrcp.pop %v2186
      %v2301 = vrcp.pop %v2189
      %v2302 = vrcp.pop %v2192
      %v2303 = vrcp.pop %v2195
      %v2304 = vrcp.pop %v2198
      %v2305 = vrcp.pop %v2201
      %v2306 = vrcp.pop %v2204
      %v2307 = vrcp.pop %v2207
      %v2308 = vrcp.pop %v2210
      %v2309 = vrcp.pop %v2213
      %v2310 = vrcp.pop %v2216
      %v2311 = vrcp.pop %v2219
      %v2312 = vrcp.pop %v2222
      %v2313 = vrcp.pop %v2225
      %v2314 = vrcp.pop %v2228
      %v2315 = vrcp.pop %v2231
      %v2316 = vrcp.pop %v2234
      %v2317 = vrcp.pop %v2237
      %v2318 = vrcp.pop %v2240
      %v2319 = vrcp.pop %v2243
      %v2320 = vrcp.pop %v2246
      %v2321 = vrcp.pop %v2249
      %v2322 = vrcp.pop %v2252
      %v2323 = vrcp.pop %v2255
      %v2324 = vrcp.pop %v2258
      %v2325 = vrcp.pop %v2261
      %v2326 = vmul.f32 %v1943, %v2262
      %v2327 = vmul.f32 %v1945, %v2263
      %v2328 = vmul.f32 %v1947, %v2264
      %v2329 = vmul.f32 %v1949, %v2265
      %v2330 = vmul.f32 %v1951, %v2266
      %v2331 = vmul.f32 %v1953, %v2267
      %v2332 = vmul.f32 %v1955, %v2268
      %v2333 = vmul.f32 %v1957, %v2269
      %v2334 = vmul.f32 %v1959, %v2270
      %v2335 = vmul.f32 %v1961, %v2271
      %v2336 = vmul.f32 %v1963, %v2272
      %v2337 = vmul.f32 %v1965, %v2273
      %v2338 = vmul.f32 %v1967, %v2274
      %v2339 = vmul.f32 %v1969, %v2275
      %v2340 = vmul.f32 %v1971, %v2276
      %v2341 = vmul.f32 %v1973, %v2277
      %v2342 = vmul.f32 %v1975, %v2278
      %v2343 = vmul.f32 %v1977, %v2279
      %v2344 = vmul.f32 %v1979, %v2280
      %v2345 = vmul.f32 %v1981, %v2281
      %v2346 = vmul.f32 %v1983, %v2282
      %v2347 = vmul.f32 %v1985, %v2283
      %v2348 = vmul.f32 %v1987, %v2284
      %v2349 = vmul.f32 %v1989, %v2285
      %v2350 = vmul.f32 %v1991, %v2286
      %v2351 = vmul.f32 %v1993, %v2287
      %v2352 = vmul.f32 %v1995, %v2288
      %v2353 = vmul.f32 %v1997, %v2289
      %v2354 = vmul.f32 %v1999, %v2290
      %v2355 = vmul.f32 %v2001, %v2291
      %v2356 = vmul.f32 %v2003, %v2292
      %v2357 = vmul.f32 %v2005, %v2293
      %v2358 = vmul.f32 %v2007, %v2294
      %v2359 = vmul.f32 %v2009, %v2295
      %v2360 = vmul.f32 %v2011, %v2296
      %v2361 = vmul.f32 %v2013, %v2297
      %v2362 = vmul.f32 %v2015, %v2298
      %v2363 = vmul.f32 %v2017, %v2299
      %v2364 = vmul.f32 %v2019, %v2300
      %v2365 = vmul.f32 %v2021, %v2301
      %v2366 = vmul.f32 %v2023, %v2302
      %v2367 = vmul.f32 %v2025, %v2303
      %v2368 = vmul.f32 %v2027, %v2304
      %v2369 = vmul.f32 %v2029, %v2305
      %v2370 = vmul.f32 %v2031, %v2306
      %v2371 = vmul.f32 %v2033, %v2307
      %v2372 = vmul.f32 %v2035, %v2308
      %v2373 = vmul.f32 %v2037, %v2309
      %v2374 = vmul.f32 %v2039, %v2310
      %v2375 = vmul.f32 %v2041, %v2311
      %v2376 = vmul.f32 %v2043, %v2312
      %v2377 = vmul.f32 %v2045, %v2313
      %v2378 = vmul.f32 %v2047, %v2314
      %v2379 = vmul.f32 %v2049, %v2315
      %v2380 = vmul.f32 %v2051, %v2316
      %v2381 = vmul.f32 %v2053, %v2317
      %v2382 = vmul.f32 %v2055, %v2318
      %v2383 = vmul.f32 %v2057, %v2319
      %v2384 = vmul.f32 %v2059, %v2320
      %v2385 = vmul.f32 %v2061, %v2321
      %v2386 = vmul.f32 %v2063, %v2322
      %v2387 = vmul.f32 %v2065, %v2323
      %v2388 = vmul.f32 %v2067, %v2324
      %v2389 = vmul.f32 %v2069, %v2325
      %2390 = vrot.lane.b32.xlu0 %v302, 64
      %v2391 = vpop.permute.xlu0 %2390
      %2392 = vrot.lane.b32.xlu0 %v307, 64
      %v2393 = vpop.permute.xlu0 %2392
      %2394 = vrot.lane.b32.xlu0 %v312, 64
      %v2395 = vpop.permute.xlu0 %2394
      %2396 = vrot.lane.b32.xlu0 %v317, 64
      %v2397 = vpop.permute.xlu0 %2396
      %2398 = vrot.lane.b32.xlu0 %v322, 64
      %v2399 = vpop.permute.xlu0 %2398
      %2400 = vrot.lane.b32.xlu0 %v327, 64
      %v2401 = vpop.permute.xlu0 %2400
      %2402 = vrot.lane.b32.xlu0 %v332, 64
      %v2403 = vpop.permute.xlu0 %2402
      %2404 = vrot.lane.b32.xlu0 %v337, 64
      %v2405 = vpop.permute.xlu0 %2404
      %v2415 = vsel %vm1685, %v2326, 0
      %v2418 = vsel %vm1685, %v2327, 0
      %v2421 = vsel %vm1685, %v2328, 0
      %v2424 = vsel %vm1685, %v2329, 0
      %v2427 = vsel %vm1685, %v2330, 0
      %v2430 = vsel %vm1685, %v2331, 0
      %v2433 = vsel %vm1685, %v2332, 0
      %v2436 = vsel %vm1685, %v2333, 0
      %2438 = vmatprep.subr.mxu0 0.0
      %2439 = vmatpush1.msra.mxu0 0.0
      %2440 = vmatprep.subr.mxu0 0.0
      %2441 = vmatpush1.msra.mxu0 0.0
      %2442 = vmatprep.subr.mxu0 0.0
      %2443 = vmatpush1.msra.mxu0 0.0
      %2444 = vmatprep.subr.mxu0 0.0
      %2445 = vmatpush1.msra.mxu0 0.0
      %2446 = vmatprep.subr.mxu0 0.0
      %2447 = vmatpush1.msra.mxu0 0.0
      %2448 = vmatprep.subr.mxu0 0.0
      %2449 = vmatpush1.msra.mxu0 0.0
      %2450 = vmatprep.subr.mxu0 0.0
      %2451 = vmatpush1.msra.mxu0 0.0
      %2452 = vmatprep.subr.mxu0 0.0
      %2453 = vmatpush1.msra.mxu0 0.0
      %2454 = vmatprep.subr.mxu0 0.0
      %2455 = vmatpush1.msra.mxu0 %v2405
      %2456 = vmatprep.subr.mxu0 0.0
      %2457 = vmatpush1.msra.mxu0 %v2403
      %2458 = vmatprep.subr.mxu0 0.0
      %2459 = vmatpush1.msra.mxu0 %v2401
      %2460 = vmatprep.subr.mxu0 0.0
      %2461 = vmatpush1.msra.mxu0 %v2399
      %2462 = vmatprep.subr.mxu0 0.0
      %2463 = vmatpush1.msra.mxu0 %v2397
      %2464 = vmatprep.subr.mxu0 0.0
      %2465 = vmatpush1.msra.mxu0 %v2395
      %2466 = vmatprep.subr.mxu0 0.0
      %2467 = vmatpush1.msra.mxu0 %v2393
      %2468 = vmatprep.subr.mxu0 0.0
      %2469 = vmatpush1.msra.mxu0 %v2391
      %2470 = vmatprep.subr.mxu0 0.0
      %2471 = vmatpush2.msra.mxu0 0.0
      %2472 = vmatprep.subr.mxu0 0.0
      %2473 = vmatpush2.msra.mxu0 0.0
      %2474 = vmatprep.subr.mxu0 0.0
      %2475 = vmatpush2.msra.mxu0 0.0
      %2476 = vmatprep.subr.mxu0 0.0
      %2477 = vmatpush2.msra.mxu0 0.0
      %2478 = vmatprep.subr.mxu0 0.0
      %2479 = vmatpush2.msra.mxu0 0.0
      %2480 = vmatprep.subr.mxu0 0.0
      %2481 = vmatpush2.msra.mxu0 0.0
      %2482 = vmatprep.subr.mxu0 0.0
      %2483 = vmatpush2.msra.mxu0 0.0
      %2484 = vmatprep.subr.mxu0 0.0
      %2485 = vmatpush2.msra.mxu0 0.0
      %2486 = vmatprep.subr.mxu0 0.0
      %2487 = vmatpush2.msra.mxu0 0.0
      %2488 = vmatprep.subr.mxu0 0.0
      %2489 = vmatpush2.msra.mxu0 0.0
      %2490 = vmatprep.subr.mxu0 0.0
      %2491 = vmatpush2.msra.mxu0 0.0
      %2492 = vmatprep.subr.mxu0 0.0
      %2493 = vmatpush2.msra.mxu0 0.0
      %2494 = vmatprep.subr.mxu0 0.0
      %2495 = vmatpush2.msra.mxu0 0.0
      %2496 = vmatprep.subr.mxu0 0.0
      %2497 = vmatpush2.msra.mxu0 0.0
      %2498 = vmatprep.subr.mxu0 0.0
      %2499 = vmatpush2.msra.mxu0 0.0
      %2500 = vmatprep.subr.mxu0 0.0
      %2501 = vmatpush2.msra.mxu0 0.0
      %2502 = vmatprep.mubr.f32.mxu0 0.0
      %2503 = vmatmul.mubr.f32.gmra.mxu0 %v2415
      %v2504 = vpop.f32.mrf.mxu0
      %v2505 = vadd.f32 0.0, %v2504
      %v2506 = vpop.f32.mrf.mxu0
      %2507 = vmatprep.mubr.f32.mxu0 0.0
      %2508 = vmatmul.mubr.f32.gmra.mxu0 %v2418
      %v2509 = vpop.f32.mrf.mxu0
      %v2510 = vadd.f32 0.0, %v2509
      %v2511 = vpop.f32.mrf.mxu0
      %2512 = vmatprep.mubr.f32.mxu0 0.0
      %2513 = vmatmul.mubr.f32.gmra.mxu0 %v2421
      %v2514 = vpop.f32.mrf.mxu0
      %v2515 = vadd.f32 0.0, %v2514
      %v2516 = vpop.f32.mrf.mxu0
      %2517 = vmatprep.mubr.f32.mxu0 0.0
      %2518 = vmatmul.mubr.f32.gmra.mxu0 %v2424
      %v2519 = vpop.f32.mrf.mxu0
      %v2520 = vadd.f32 0.0, %v2519
      %v2521 = vpop.f32.mrf.mxu0
      %2522 = vmatprep.mubr.f32.mxu0 0.0
      %2523 = vmatmul.mubr.f32.gmra.mxu0 %v2427
      %v2524 = vpop.f32.mrf.mxu0
      %v2525 = vadd.f32 0.0, %v2524
      %v2526 = vpop.f32.mrf.mxu0
      %2527 = vmatprep.mubr.f32.mxu0 0.0
      %2528 = vmatmul.mubr.f32.gmra.mxu0 %v2430
      %v2529 = vpop.f32.mrf.mxu0
      %v2530 = vadd.f32 0.0, %v2529
      %v2531 = vpop.f32.mrf.mxu0
      %2532 = vmatprep.mubr.f32.mxu0 0.0
      %2533 = vmatmul.mubr.f32.gmra.mxu0 %v2433
      %v2534 = vpop.f32.mrf.mxu0
      %v2535 = vadd.f32 0.0, %v2534
      %v2536 = vpop.f32.mrf.mxu0
      %2537 = vmatprep.mubr.f32.mxu0 0.0
      %2538 = vmatmul.mubr.f32.gmra.mxu0 %v2436
      %v2539 = vpop.f32.mrf.mxu0
      %v2540 = vadd.f32 0.0, %v2539
      %v2541 = vpop.f32.mrf.mxu0
      %2542 = vdwg.mxu0
      %2543 = vrot.lane.b32.xlu0 %v349, 64
      %v2544 = vpop.permute.xlu0 %2543
      %2545 = vrot.lane.b32.xlu0 %v351, 64
      %v2546 = vpop.permute.xlu0 %2545
      %2547 = vrot.lane.b32.xlu0 %v353, 64
      %v2548 = vpop.permute.xlu0 %2547
      %2549 = vrot.lane.b32.xlu0 %v355, 64
      %v2550 = vpop.permute.xlu0 %2549
      %2551 = vrot.lane.b32.xlu0 %v357, 64
      %v2552 = vpop.permute.xlu0 %2551
      %2553 = vrot.lane.b32.xlu0 %v359, 64
      %v2554 = vpop.permute.xlu0 %2553
      %2555 = vrot.lane.b32.xlu0 %v361, 64
      %v2556 = vpop.permute.xlu0 %2555
      %2557 = vrot.lane.b32.xlu0 %v363, 64
      %v2558 = vpop.permute.xlu0 %2557
      %v2568 = vsel %vm1685, %v2334, 0
      %v2571 = vsel %vm1685, %v2335, 0
      %v2574 = vsel %vm1685, %v2336, 0
      %v2577 = vsel %vm1685, %v2337, 0
      %v2580 = vsel %vm1685, %v2338, 0
      %v2583 = vsel %vm1685, %v2339, 0
      %v2586 = vsel %vm1685, %v2340, 0
      %v2589 = vsel %vm1685, %v2341, 0
      %2591 = vmatprep.subr.mxu0 0.0
      %2592 = vmatpush1.msra.mxu0 0.0
      %2593 = vmatprep.subr.mxu0 0.0
      %2594 = vmatpush1.msra.mxu0 0.0
      %2595 = vmatprep.subr.mxu0 0.0
      %2596 = vmatpush1.msra.mxu0 0.0
      %2597 = vmatprep.subr.mxu0 0.0
      %2598 = vmatpush1.msra.mxu0 0.0
      %2599 = vmatprep.subr.mxu0 0.0
      %2600 = vmatpush1.msra.mxu0 0.0
      %2601 = vmatprep.subr.mxu0 0.0
      %2602 = vmatpush1.msra.mxu0 0.0
      %2603 = vmatprep.subr.mxu0 0.0
      %2604 = vmatpush1.msra.mxu0 0.0
      %2605 = vmatprep.subr.mxu0 0.0
      %2606 = vmatpush1.msra.mxu0 0.0
      %2607 = vmatprep.subr.mxu0 0.0
      %2608 = vmatpush1.msra.mxu0 %v2558
      %2609 = vmatprep.subr.mxu0 0.0
      %2610 = vmatpush1.msra.mxu0 %v2556
      %2611 = vmatprep.subr.mxu0 0.0
      %2612 = vmatpush1.msra.mxu0 %v2554
      %2613 = vmatprep.subr.mxu0 0.0
      %2614 = vmatpush1.msra.mxu0 %v2552
      %2615 = vmatprep.subr.mxu0 0.0
      %2616 = vmatpush1.msra.mxu0 %v2550
      %2617 = vmatprep.subr.mxu0 0.0
      %2618 = vmatpush1.msra.mxu0 %v2548
      %2619 = vmatprep.subr.mxu0 0.0
      %2620 = vmatpush1.msra.mxu0 %v2546
      %2621 = vmatprep.subr.mxu0 0.0
      %2622 = vmatpush1.msra.mxu0 %v2544
      %2623 = vmatprep.subr.mxu0 0.0
      %2624 = vmatpush2.msra.mxu0 0.0
      %2625 = vmatprep.subr.mxu0 0.0
      %2626 = vmatpush2.msra.mxu0 0.0
      %2627 = vmatprep.subr.mxu0 0.0
      %2628 = vmatpush2.msra.mxu0 0.0
      %2629 = vmatprep.subr.mxu0 0.0
      %2630 = vmatpush2.msra.mxu0 0.0
      %2631 = vmatprep.subr.mxu0 0.0
      %2632 = vmatpush2.msra.mxu0 0.0
      %2633 = vmatprep.subr.mxu0 0.0
      %2634 = vmatpush2.msra.mxu0 0.0
      %2635 = vmatprep.subr.mxu0 0.0
      %2636 = vmatpush2.msra.mxu0 0.0
      %2637 = vmatprep.subr.mxu0 0.0
      %2638 = vmatpush2.msra.mxu0 0.0
      %2639 = vmatprep.subr.mxu0 0.0
      %2640 = vmatpush2.msra.mxu0 0.0
      %2641 = vmatprep.subr.mxu0 0.0
      %2642 = vmatpush2.msra.mxu0 0.0
      %2643 = vmatprep.subr.mxu0 0.0
      %2644 = vmatpush2.msra.mxu0 0.0
      %2645 = vmatprep.subr.mxu0 0.0
      %2646 = vmatpush2.msra.mxu0 0.0
      %2647 = vmatprep.subr.mxu0 0.0
      %2648 = vmatpush2.msra.mxu0 0.0
      %2649 = vmatprep.subr.mxu0 0.0
      %2650 = vmatpush2.msra.mxu0 0.0
      %2651 = vmatprep.subr.mxu0 0.0
      %2652 = vmatpush2.msra.mxu0 0.0
      %2653 = vmatprep.subr.mxu0 0.0
      %2654 = vmatpush2.msra.mxu0 0.0
      %2655 = vmatprep.mubr.f32.mxu0 0.0
      %2656 = vmatmul.mubr.f32.gmra.mxu0 %v2568
      %v2657 = vpop.f32.mrf.mxu0
      %v2658 = vadd.f32 0.0, %v2657
      %v2659 = vpop.f32.mrf.mxu0
      %2660 = vmatprep.mubr.f32.mxu0 0.0
      %2661 = vmatmul.mubr.f32.gmra.mxu0 %v2571
      %v2662 = vpop.f32.mrf.mxu0
      %v2663 = vadd.f32 0.0, %v2662
      %v2664 = vpop.f32.mrf.mxu0
      %2665 = vmatprep.mubr.f32.mxu0 0.0
      %2666 = vmatmul.mubr.f32.gmra.mxu0 %v2574
      %v2667 = vpop.f32.mrf.mxu0
      %v2668 = vadd.f32 0.0, %v2667
      %v2669 = vpop.f32.mrf.mxu0
      %2670 = vmatprep.mubr.f32.mxu0 0.0
      %2671 = vmatmul.mubr.f32.gmra.mxu0 %v2577
      %v2672 = vpop.f32.mrf.mxu0
      %v2673 = vadd.f32 0.0, %v2672
      %v2674 = vpop.f32.mrf.mxu0
      %2675 = vmatprep.mubr.f32.mxu0 0.0
      %2676 = vmatmul.mubr.f32.gmra.mxu0 %v2580
      %v2677 = vpop.f32.mrf.mxu0
      %v2678 = vadd.f32 0.0, %v2677
      %v2679 = vpop.f32.mrf.mxu0
      %2680 = vmatprep.mubr.f32.mxu0 0.0
      %2681 = vmatmul.mubr.f32.gmra.mxu0 %v2583
      %v2682 = vpop.f32.mrf.mxu0
      %v2683 = vadd.f32 0.0, %v2682
      %v2684 = vpop.f32.mrf.mxu0
      %2685 = vmatprep.mubr.f32.mxu0 0.0
      %2686 = vmatmul.mubr.f32.gmra.mxu0 %v2586
      %v2687 = vpop.f32.mrf.mxu0
      %v2688 = vadd.f32 0.0, %v2687
      %v2689 = vpop.f32.mrf.mxu0
      %2690 = vmatprep.mubr.f32.mxu0 0.0
      %2691 = vmatmul.mubr.f32.gmra.mxu0 %v2589
      %v2692 = vpop.f32.mrf.mxu0
      %v2693 = vadd.f32 0.0, %v2692
      %v2694 = vpop.f32.mrf.mxu0
      %2695 = vdwg.mxu0
      %2696 = vrot.lane.b32.xlu0 %v365, 64
      %v2697 = vpop.permute.xlu0 %2696
      %2698 = vrot.lane.b32.xlu0 %v367, 64
      %v2699 = vpop.permute.xlu0 %2698
      %2700 = vrot.lane.b32.xlu0 %v369, 64
      %v2701 = vpop.permute.xlu0 %2700
      %2702 = vrot.lane.b32.xlu0 %v371, 64
      %v2703 = vpop.permute.xlu0 %2702
      %2704 = vrot.lane.b32.xlu0 %v373, 64
      %v2705 = vpop.permute.xlu0 %2704
      %2706 = vrot.lane.b32.xlu0 %v375, 64
      %v2707 = vpop.permute.xlu0 %2706
      %2708 = vrot.lane.b32.xlu0 %v377, 64
      %v2709 = vpop.permute.xlu0 %2708
      %2710 = vrot.lane.b32.xlu0 %v379, 64
      %v2711 = vpop.permute.xlu0 %2710
      %v2721 = vsel %vm1685, %v2342, 0
      %v2724 = vsel %vm1685, %v2343, 0
      %v2727 = vsel %vm1685, %v2344, 0
      %v2730 = vsel %vm1685, %v2345, 0
      %v2733 = vsel %vm1685, %v2346, 0
      %v2736 = vsel %vm1685, %v2347, 0
      %v2739 = vsel %vm1685, %v2348, 0
      %v2742 = vsel %vm1685, %v2349, 0
      %2744 = vmatprep.subr.mxu0 0.0
      %2745 = vmatpush1.msra.mxu0 0.0
      %2746 = vmatprep.subr.mxu0 0.0
      %2747 = vmatpush1.msra.mxu0 0.0
      %2748 = vmatprep.subr.mxu0 0.0
      %2749 = vmatpush1.msra.mxu0 0.0
      %2750 = vmatprep.subr.mxu0 0.0
      %2751 = vmatpush1.msra.mxu0 0.0
      %2752 = vmatprep.subr.mxu0 0.0
      %2753 = vmatpush1.msra.mxu0 0.0
      %2754 = vmatprep.subr.mxu0 0.0
      %2755 = vmatpush1.msra.mxu0 0.0
      %2756 = vmatprep.subr.mxu0 0.0
      %2757 = vmatpush1.msra.mxu0 0.0
      %2758 = vmatprep.subr.mxu0 0.0
      %2759 = vmatpush1.msra.mxu0 0.0
      %2760 = vmatprep.subr.mxu0 0.0
      %2761 = vmatpush1.msra.mxu0 %v2711
      %2762 = vmatprep.subr.mxu0 0.0
      %2763 = vmatpush1.msra.mxu0 %v2709
      %2764 = vmatprep.subr.mxu0 0.0
      %2765 = vmatpush1.msra.mxu0 %v2707
      %2766 = vmatprep.subr.mxu0 0.0
      %2767 = vmatpush1.msra.mxu0 %v2705
      %2768 = vmatprep.subr.mxu0 0.0
      %2769 = vmatpush1.msra.mxu0 %v2703
      %2770 = vmatprep.subr.mxu0 0.0
      %2771 = vmatpush1.msra.mxu0 %v2701
      %2772 = vmatprep.subr.mxu0 0.0
      %2773 = vmatpush1.msra.mxu0 %v2699
      %2774 = vmatprep.subr.mxu0 0.0
      %2775 = vmatpush1.msra.mxu0 %v2697
      %2776 = vmatprep.subr.mxu0 0.0
      %2777 = vmatpush2.msra.mxu0 0.0
      %2778 = vmatprep.subr.mxu0 0.0
      %2779 = vmatpush2.msra.mxu0 0.0
      %2780 = vmatprep.subr.mxu0 0.0
      %2781 = vmatpush2.msra.mxu0 0.0
      %2782 = vmatprep.subr.mxu0 0.0
      %2783 = vmatpush2.msra.mxu0 0.0
      %2784 = vmatprep.subr.mxu0 0.0
      %2785 = vmatpush2.msra.mxu0 0.0
      %2786 = vmatprep.subr.mxu0 0.0
      %2787 = vmatpush2.msra.mxu0 0.0
      %2788 = vmatprep.subr.mxu0 0.0
      %2789 = vmatpush2.msra.mxu0 0.0
      %2790 = vmatprep.subr.mxu0 0.0
      %2791 = vmatpush2.msra.mxu0 0.0
      %2792 = vmatprep.subr.mxu0 0.0
      %2793 = vmatpush2.msra.mxu0 0.0
      %2794 = vmatprep.subr.mxu0 0.0
      %2795 = vmatpush2.msra.mxu0 0.0
      %2796 = vmatprep.subr.mxu0 0.0
      %2797 = vmatpush2.msra.mxu0 0.0
      %2798 = vmatprep.subr.mxu0 0.0
      %2799 = vmatpush2.msra.mxu0 0.0
      %2800 = vmatprep.subr.mxu0 0.0
      %2801 = vmatpush2.msra.mxu0 0.0
      %2802 = vmatprep.subr.mxu0 0.0
      %2803 = vmatpush2.msra.mxu0 0.0
      %2804 = vmatprep.subr.mxu0 0.0
      %2805 = vmatpush2.msra.mxu0 0.0
      %2806 = vmatprep.subr.mxu0 0.0
      %2807 = vmatpush2.msra.mxu0 0.0
      %2808 = vmatprep.mubr.f32.mxu0 0.0
      %2809 = vmatmul.mubr.f32.gmra.mxu0 %v2721
      %v2810 = vpop.f32.mrf.mxu0
      %v2811 = vadd.f32 0.0, %v2810
      %v2812 = vpop.f32.mrf.mxu0
      %2813 = vmatprep.mubr.f32.mxu0 0.0
      %2814 = vmatmul.mubr.f32.gmra.mxu0 %v2724
      %v2815 = vpop.f32.mrf.mxu0
      %v2816 = vadd.f32 0.0, %v2815
      %v2817 = vpop.f32.mrf.mxu0
      %2818 = vmatprep.mubr.f32.mxu0 0.0
      %2819 = vmatmul.mubr.f32.gmra.mxu0 %v2727
      %v2820 = vpop.f32.mrf.mxu0
      %v2821 = vadd.f32 0.0, %v2820
      %v2822 = vpop.f32.mrf.mxu0
      %2823 = vmatprep.mubr.f32.mxu0 0.0
      %2824 = vmatmul.mubr.f32.gmra.mxu0 %v2730
      %v2825 = vpop.f32.mrf.mxu0
      %v2826 = vadd.f32 0.0, %v2825
      %v2827 = vpop.f32.mrf.mxu0
      %2828 = vmatprep.mubr.f32.mxu0 0.0
      %2829 = vmatmul.mubr.f32.gmra.mxu0 %v2733
      %v2830 = vpop.f32.mrf.mxu0
      %v2831 = vadd.f32 0.0, %v2830
      %v2832 = vpop.f32.mrf.mxu0
      %2833 = vmatprep.mubr.f32.mxu0 0.0
      %2834 = vmatmul.mubr.f32.gmra.mxu0 %v2736
      %v2835 = vpop.f32.mrf.mxu0
      %v2836 = vadd.f32 0.0, %v2835
      %v2837 = vpop.f32.mrf.mxu0
      %2838 = vmatprep.mubr.f32.mxu0 0.0
      %2839 = vmatmul.mubr.f32.gmra.mxu0 %v2739
      %v2840 = vpop.f32.mrf.mxu0
      %v2841 = vadd.f32 0.0, %v2840
      %v2842 = vpop.f32.mrf.mxu0
      %2843 = vmatprep.mubr.f32.mxu0 0.0
      %2844 = vmatmul.mubr.f32.gmra.mxu0 %v2742
      %v2845 = vpop.f32.mrf.mxu0
      %v2846 = vadd.f32 0.0, %v2845
      %v2847 = vpop.f32.mrf.mxu0
      %2848 = vdwg.mxu0
      %2849 = vrot.lane.b32.xlu0 %v381, 64
      %v2850 = vpop.permute.xlu0 %2849
      %2851 = vrot.lane.b32.xlu0 %v383, 64
      %v2852 = vpop.permute.xlu0 %2851
      %2853 = vrot.lane.b32.xlu0 %v385, 64
      %v2854 = vpop.permute.xlu0 %2853
      %2855 = vrot.lane.b32.xlu0 %v387, 64
      %v2856 = vpop.permute.xlu0 %2855
      %2857 = vrot.lane.b32.xlu0 %v389, 64
      %v2858 = vpop.permute.xlu0 %2857
      %2859 = vrot.lane.b32.xlu0 %v391, 64
      %v2860 = vpop.permute.xlu0 %2859
      %2861 = vrot.lane.b32.xlu0 %v393, 64
      %v2862 = vpop.permute.xlu0 %2861
      %2863 = vrot.lane.b32.xlu0 %v395, 64
      %v2864 = vpop.permute.xlu0 %2863
      %v2874 = vsel %vm1685, %v2350, 0
      %v2877 = vsel %vm1685, %v2351, 0
      %v2880 = vsel %vm1685, %v2352, 0
      %v2883 = vsel %vm1685, %v2353, 0
      %v2886 = vsel %vm1685, %v2354, 0
      %v2889 = vsel %vm1685, %v2355, 0
      %v2892 = vsel %vm1685, %v2356, 0
      %v2895 = vsel %vm1685, %v2357, 0
      %2897 = vmatprep.subr.mxu0 0.0
      %2898 = vmatpush1.msra.mxu0 0.0
      %2899 = vmatprep.subr.mxu0 0.0
      %2900 = vmatpush1.msra.mxu0 0.0
      %2901 = vmatprep.subr.mxu0 0.0
      %2902 = vmatpush1.msra.mxu0 0.0
      %2903 = vmatprep.subr.mxu0 0.0
      %2904 = vmatpush1.msra.mxu0 0.0
      %2905 = vmatprep.subr.mxu0 0.0
      %2906 = vmatpush1.msra.mxu0 0.0
      %2907 = vmatprep.subr.mxu0 0.0
      %2908 = vmatpush1.msra.mxu0 0.0
      %2909 = vmatprep.subr.mxu0 0.0
      %2910 = vmatpush1.msra.mxu0 0.0
      %2911 = vmatprep.subr.mxu0 0.0
      %2912 = vmatpush1.msra.mxu0 0.0
      %2913 = vmatprep.subr.mxu0 0.0
      %2914 = vmatpush1.msra.mxu0 %v2864
      %2915 = vmatprep.subr.mxu0 0.0
      %2916 = vmatpush1.msra.mxu0 %v2862
      %2917 = vmatprep.subr.mxu0 0.0
      %2918 = vmatpush1.msra.mxu0 %v2860
      %2919 = vmatprep.subr.mxu0 0.0
      %2920 = vmatpush1.msra.mxu0 %v2858
      %2921 = vmatprep.subr.mxu0 0.0
      %2922 = vmatpush1.msra.mxu0 %v2856
      %2923 = vmatprep.subr.mxu0 0.0
      %2924 = vmatpush1.msra.mxu0 %v2854
      %2925 = vmatprep.subr.mxu0 0.0
      %2926 = vmatpush1.msra.mxu0 %v2852
      %2927 = vmatprep.subr.mxu0 0.0
      %2928 = vmatpush1.msra.mxu0 %v2850
      %2929 = vmatprep.subr.mxu0 0.0
      %2930 = vmatpush2.msra.mxu0 0.0
      %2931 = vmatprep.subr.mxu0 0.0
      %2932 = vmatpush2.msra.mxu0 0.0
      %2933 = vmatprep.subr.mxu0 0.0
      %2934 = vmatpush2.msra.mxu0 0.0
      %2935 = vmatprep.subr.mxu0 0.0
      %2936 = vmatpush2.msra.mxu0 0.0
      %2937 = vmatprep.subr.mxu0 0.0
      %2938 = vmatpush2.msra.mxu0 0.0
      %2939 = vmatprep.subr.mxu0 0.0
      %2940 = vmatpush2.msra.mxu0 0.0
      %2941 = vmatprep.subr.mxu0 0.0
      %2942 = vmatpush2.msra.mxu0 0.0
      %2943 = vmatprep.subr.mxu0 0.0
      %2944 = vmatpush2.msra.mxu0 0.0
      %2945 = vmatprep.subr.mxu0 0.0
      %2946 = vmatpush2.msra.mxu0 0.0
      %2947 = vmatprep.subr.mxu0 0.0
      %2948 = vmatpush2.msra.mxu0 0.0
      %2949 = vmatprep.subr.mxu0 0.0
      %2950 = vmatpush2.msra.mxu0 0.0
      %2951 = vmatprep.subr.mxu0 0.0
      %2952 = vmatpush2.msra.mxu0 0.0
      %2953 = vmatprep.subr.mxu0 0.0
      %2954 = vmatpush2.msra.mxu0 0.0
      %2955 = vmatprep.subr.mxu0 0.0
      %2956 = vmatpush2.msra.mxu0 0.0
      %2957 = vmatprep.subr.mxu0 0.0
      %2958 = vmatpush2.msra.mxu0 0.0
      %2959 = vmatprep.subr.mxu0 0.0
      %2960 = vmatpush2.msra.mxu0 0.0
      %2961 = vmatprep.mubr.f32.mxu0 0.0
      %2962 = vmatmul.mubr.f32.gmra.mxu0 %v2874
      %v2963 = vpop.f32.mrf.mxu0
      %v2964 = vadd.f32 0.0, %v2963
      %v2965 = vpop.f32.mrf.mxu0
      %2966 = vmatprep.mubr.f32.mxu0 0.0
      %2967 = vmatmul.mubr.f32.gmra.mxu0 %v2877
      %v2968 = vpop.f32.mrf.mxu0
      %v2969 = vadd.f32 0.0, %v2968
      %v2970 = vpop.f32.mrf.mxu0
      %2971 = vmatprep.mubr.f32.mxu0 0.0
      %2972 = vmatmul.mubr.f32.gmra.mxu0 %v2880
      %v2973 = vpop.f32.mrf.mxu0
      %v2974 = vadd.f32 0.0, %v2973
      %v2975 = vpop.f32.mrf.mxu0
      %2976 = vmatprep.mubr.f32.mxu0 0.0
      %2977 = vmatmul.mubr.f32.gmra.mxu0 %v2883
      %v2978 = vpop.f32.mrf.mxu0
      %v2979 = vadd.f32 0.0, %v2978
      %v2980 = vpop.f32.mrf.mxu0
      %2981 = vmatprep.mubr.f32.mxu0 0.0
      %2982 = vmatmul.mubr.f32.gmra.mxu0 %v2886
      %v2983 = vpop.f32.mrf.mxu0
      %v2984 = vadd.f32 0.0, %v2983
      %v2985 = vpop.f32.mrf.mxu0
      %2986 = vmatprep.mubr.f32.mxu0 0.0
      %2987 = vmatmul.mubr.f32.gmra.mxu0 %v2889
      %v2988 = vpop.f32.mrf.mxu0
      %v2989 = vadd.f32 0.0, %v2988
      %v2990 = vpop.f32.mrf.mxu0
      %2991 = vmatprep.mubr.f32.mxu0 0.0
      %2992 = vmatmul.mubr.f32.gmra.mxu0 %v2892
      %v2993 = vpop.f32.mrf.mxu0
      %v2994 = vadd.f32 0.0, %v2993
      %v2995 = vpop.f32.mrf.mxu0
      %2996 = vmatprep.mubr.f32.mxu0 0.0
      %2997 = vmatmul.mubr.f32.gmra.mxu0 %v2895
      %v2998 = vpop.f32.mrf.mxu0
      %v2999 = vadd.f32 0.0, %v2998
      %v3000 = vpop.f32.mrf.mxu0
      %3001 = vdwg.mxu0
      %3002 = vrot.lane.b32.xlu0 %v397, 64
      %v3003 = vpop.permute.xlu0 %3002
      %3004 = vrot.lane.b32.xlu0 %v399, 64
      %v3005 = vpop.permute.xlu0 %3004
      %3006 = vrot.lane.b32.xlu0 %v401, 64
      %v3007 = vpop.permute.xlu0 %3006
      %3008 = vrot.lane.b32.xlu0 %v403, 64
      %v3009 = vpop.permute.xlu0 %3008
      %3010 = vrot.lane.b32.xlu0 %v405, 64
      %v3011 = vpop.permute.xlu0 %3010
      %3012 = vrot.lane.b32.xlu0 %v407, 64
      %v3013 = vpop.permute.xlu0 %3012
      %3014 = vrot.lane.b32.xlu0 %v409, 64
      %v3015 = vpop.permute.xlu0 %3014
      %3016 = vrot.lane.b32.xlu0 %v411, 64
      %v3017 = vpop.permute.xlu0 %3016
      %v3027 = vsel %vm1685, %v2358, 0
      %v3030 = vsel %vm1685, %v2359, 0
      %v3033 = vsel %vm1685, %v2360, 0
      %v3036 = vsel %vm1685, %v2361, 0
      %v3039 = vsel %vm1685, %v2362, 0
      %v3042 = vsel %vm1685, %v2363, 0
      %v3045 = vsel %vm1685, %v2364, 0
      %v3048 = vsel %vm1685, %v2365, 0
      %3050 = vmatprep.subr.mxu0 0.0
      %3051 = vmatpush1.msra.mxu0 0.0
      %3052 = vmatprep.subr.mxu0 0.0
      %3053 = vmatpush1.msra.mxu0 0.0
      %3054 = vmatprep.subr.mxu0 0.0
      %3055 = vmatpush1.msra.mxu0 0.0
      %3056 = vmatprep.subr.mxu0 0.0
      %3057 = vmatpush1.msra.mxu0 0.0
      %3058 = vmatprep.subr.mxu0 0.0
      %3059 = vmatpush1.msra.mxu0 0.0
      %3060 = vmatprep.subr.mxu0 0.0
      %3061 = vmatpush1.msra.mxu0 0.0
      %3062 = vmatprep.subr.mxu0 0.0
      %3063 = vmatpush1.msra.mxu0 0.0
      %3064 = vmatprep.subr.mxu0 0.0
      %3065 = vmatpush1.msra.mxu0 0.0
      %3066 = vmatprep.subr.mxu0 0.0
      %3067 = vmatpush1.msra.mxu0 %v3017
      %3068 = vmatprep.subr.mxu0 0.0
      %3069 = vmatpush1.msra.mxu0 %v3015
      %3070 = vmatprep.subr.mxu0 0.0
      %3071 = vmatpush1.msra.mxu0 %v3013
      %3072 = vmatprep.subr.mxu0 0.0
      %3073 = vmatpush1.msra.mxu0 %v3011
      %3074 = vmatprep.subr.mxu0 0.0
      %3075 = vmatpush1.msra.mxu0 %v3009
      %3076 = vmatprep.subr.mxu0 0.0
      %3077 = vmatpush1.msra.mxu0 %v3007
      %3078 = vmatprep.subr.mxu0 0.0
      %3079 = vmatpush1.msra.mxu0 %v3005
      %3080 = vmatprep.subr.mxu0 0.0
      %3081 = vmatpush1.msra.mxu0 %v3003
      %3082 = vmatprep.subr.mxu0 0.0
      %3083 = vmatpush2.msra.mxu0 0.0
      %3084 = vmatprep.subr.mxu0 0.0
      %3085 = vmatpush2.msra.mxu0 0.0
      %3086 = vmatprep.subr.mxu0 0.0
      %3087 = vmatpush2.msra.mxu0 0.0
      %3088 = vmatprep.subr.mxu0 0.0
      %3089 = vmatpush2.msra.mxu0 0.0
      %3090 = vmatprep.subr.mxu0 0.0
      %3091 = vmatpush2.msra.mxu0 0.0
      %3092 = vmatprep.subr.mxu0 0.0
      %3093 = vmatpush2.msra.mxu0 0.0
      %3094 = vmatprep.subr.mxu0 0.0
      %3095 = vmatpush2.msra.mxu0 0.0
      %3096 = vmatprep.subr.mxu0 0.0
      %3097 = vmatpush2.msra.mxu0 0.0
      %3098 = vmatprep.subr.mxu0 0.0
      %3099 = vmatpush2.msra.mxu0 0.0
      %3100 = vmatprep.subr.mxu0 0.0
      %3101 = vmatpush2.msra.mxu0 0.0
      %3102 = vmatprep.subr.mxu0 0.0
      %3103 = vmatpush2.msra.mxu0 0.0
      %3104 = vmatprep.subr.mxu0 0.0
      %3105 = vmatpush2.msra.mxu0 0.0
      %3106 = vmatprep.subr.mxu0 0.0
      %3107 = vmatpush2.msra.mxu0 0.0
      %3108 = vmatprep.subr.mxu0 0.0
      %3109 = vmatpush2.msra.mxu0 0.0
      %3110 = vmatprep.subr.mxu0 0.0
      %3111 = vmatpush2.msra.mxu0 0.0
      %3112 = vmatprep.subr.mxu0 0.0
      %3113 = vmatpush2.msra.mxu0 0.0
      %3114 = vmatprep.mubr.f32.mxu0 0.0
      %3115 = vmatmul.mubr.f32.gmra.mxu0 %v3027
      %v3116 = vpop.f32.mrf.mxu0
      %v3117 = vadd.f32 0.0, %v3116
      %v3118 = vpop.f32.mrf.mxu0
      %3119 = vmatprep.mubr.f32.mxu0 0.0
      %3120 = vmatmul.mubr.f32.gmra.mxu0 %v3030
      %v3121 = vpop.f32.mrf.mxu0
      %v3122 = vadd.f32 0.0, %v3121
      %v3123 = vpop.f32.mrf.mxu0
      %3124 = vmatprep.mubr.f32.mxu0 0.0
      %3125 = vmatmul.mubr.f32.gmra.mxu0 %v3033
      %v3126 = vpop.f32.mrf.mxu0
      %v3127 = vadd.f32 0.0, %v3126
      %v3128 = vpop.f32.mrf.mxu0
      %3129 = vmatprep.mubr.f32.mxu0 0.0
      %3130 = vmatmul.mubr.f32.gmra.mxu0 %v3036
      %v3131 = vpop.f32.mrf.mxu0
      %v3132 = vadd.f32 0.0, %v3131
      %v3133 = vpop.f32.mrf.mxu0
      %3134 = vmatprep.mubr.f32.mxu0 0.0
      %3135 = vmatmul.mubr.f32.gmra.mxu0 %v3039
      %v3136 = vpop.f32.mrf.mxu0
      %v3137 = vadd.f32 0.0, %v3136
      %v3138 = vpop.f32.mrf.mxu0
      %3139 = vmatprep.mubr.f32.mxu0 0.0
      %3140 = vmatmul.mubr.f32.gmra.mxu0 %v3042
      %v3141 = vpop.f32.mrf.mxu0
      %v3142 = vadd.f32 0.0, %v3141
      %v3143 = vpop.f32.mrf.mxu0
      %3144 = vmatprep.mubr.f32.mxu0 0.0
      %3145 = vmatmul.mubr.f32.gmra.mxu0 %v3045
      %v3146 = vpop.f32.mrf.mxu0
      %v3147 = vadd.f32 0.0, %v3146
      %v3148 = vpop.f32.mrf.mxu0
      %3149 = vmatprep.mubr.f32.mxu0 0.0
      %3150 = vmatmul.mubr.f32.gmra.mxu0 %v3048
      %v3151 = vpop.f32.mrf.mxu0
      %v3152 = vadd.f32 0.0, %v3151
      %v3153 = vpop.f32.mrf.mxu0
      %3154 = vdwg.mxu0
      %3155 = vrot.lane.b32.xlu0 %v413, 64
      %v3156 = vpop.permute.xlu0 %3155
      %3157 = vrot.lane.b32.xlu0 %v415, 64
      %v3158 = vpop.permute.xlu0 %3157
      %3159 = vrot.lane.b32.xlu0 %v417, 64
      %v3160 = vpop.permute.xlu0 %3159
      %3161 = vrot.lane.b32.xlu0 %v419, 64
      %v3162 = vpop.permute.xlu0 %3161
      %3163 = vrot.lane.b32.xlu0 %v421, 64
      %v3164 = vpop.permute.xlu0 %3163
      %3165 = vrot.lane.b32.xlu0 %v423, 64
      %v3166 = vpop.permute.xlu0 %3165
      %3167 = vrot.lane.b32.xlu0 %v425, 64
      %v3168 = vpop.permute.xlu0 %3167
      %3169 = vrot.lane.b32.xlu0 %v427, 64
      %v3170 = vpop.permute.xlu0 %3169
      %v3180 = vsel %vm1685, %v2366, 0
      %v3183 = vsel %vm1685, %v2367, 0
      %v3186 = vsel %vm1685, %v2368, 0
      %v3189 = vsel %vm1685, %v2369, 0
      %v3192 = vsel %vm1685, %v2370, 0
      %v3195 = vsel %vm1685, %v2371, 0
      %v3198 = vsel %vm1685, %v2372, 0
      %v3201 = vsel %vm1685, %v2373, 0
      %3203 = vmatprep.subr.mxu0 0.0
      %3204 = vmatpush1.msra.mxu0 0.0
      %3205 = vmatprep.subr.mxu0 0.0
      %3206 = vmatpush1.msra.mxu0 0.0
      %3207 = vmatprep.subr.mxu0 0.0
      %3208 = vmatpush1.msra.mxu0 0.0
      %3209 = vmatprep.subr.mxu0 0.0
      %3210 = vmatpush1.msra.mxu0 0.0
      %3211 = vmatprep.subr.mxu0 0.0
      %3212 = vmatpush1.msra.mxu0 0.0
      %3213 = vmatprep.subr.mxu0 0.0
      %3214 = vmatpush1.msra.mxu0 0.0
      %3215 = vmatprep.subr.mxu0 0.0
      %3216 = vmatpush1.msra.mxu0 0.0
      %3217 = vmatprep.subr.mxu0 0.0
      %3218 = vmatpush1.msra.mxu0 0.0
      %3219 = vmatprep.subr.mxu0 0.0
      %3220 = vmatpush1.msra.mxu0 %v3170
      %3221 = vmatprep.subr.mxu0 0.0
      %3222 = vmatpush1.msra.mxu0 %v3168
      %3223 = vmatprep.subr.mxu0 0.0
      %3224 = vmatpush1.msra.mxu0 %v3166
      %3225 = vmatprep.subr.mxu0 0.0
      %3226 = vmatpush1.msra.mxu0 %v3164
      %3227 = vmatprep.subr.mxu0 0.0
      %3228 = vmatpush1.msra.mxu0 %v3162
      %3229 = vmatprep.subr.mxu0 0.0
      %3230 = vmatpush1.msra.mxu0 %v3160
      %3231 = vmatprep.subr.mxu0 0.0
      %3232 = vmatpush1.msra.mxu0 %v3158
      %3233 = vmatprep.subr.mxu0 0.0
      %3234 = vmatpush1.msra.mxu0 %v3156
      %3235 = vmatprep.subr.mxu0 0.0
      %3236 = vmatpush2.msra.mxu0 0.0
      %3237 = vmatprep.subr.mxu0 0.0
      %3238 = vmatpush2.msra.mxu0 0.0
      %3239 = vmatprep.subr.mxu0 0.0
      %3240 = vmatpush2.msra.mxu0 0.0
      %3241 = vmatprep.subr.mxu0 0.0
      %3242 = vmatpush2.msra.mxu0 0.0
      %3243 = vmatprep.subr.mxu0 0.0
      %3244 = vmatpush2.msra.mxu0 0.0
      %3245 = vmatprep.subr.mxu0 0.0
      %3246 = vmatpush2.msra.mxu0 0.0
      %3247 = vmatprep.subr.mxu0 0.0
      %3248 = vmatpush2.msra.mxu0 0.0
      %3249 = vmatprep.subr.mxu0 0.0
      %3250 = vmatpush2.msra.mxu0 0.0
      %3251 = vmatprep.subr.mxu0 0.0
      %3252 = vmatpush2.msra.mxu0 0.0
      %3253 = vmatprep.subr.mxu0 0.0
      %3254 = vmatpush2.msra.mxu0 0.0
      %3255 = vmatprep.subr.mxu0 0.0
      %3256 = vmatpush2.msra.mxu0 0.0
      %3257 = vmatprep.subr.mxu0 0.0
      %3258 = vmatpush2.msra.mxu0 0.0
      %3259 = vmatprep.subr.mxu0 0.0
      %3260 = vmatpush2.msra.mxu0 0.0
      %3261 = vmatprep.subr.mxu0 0.0
      %3262 = vmatpush2.msra.mxu0 0.0
      %3263 = vmatprep.subr.mxu0 0.0
      %3264 = vmatpush2.msra.mxu0 0.0
      %3265 = vmatprep.subr.mxu0 0.0
      %3266 = vmatpush2.msra.mxu0 0.0
      %3267 = vmatprep.mubr.f32.mxu0 0.0
      %3268 = vmatmul.mubr.f32.gmra.mxu0 %v3180
      %v3269 = vpop.f32.mrf.mxu0
      %v3270 = vadd.f32 0.0, %v3269
      %v3271 = vpop.f32.mrf.mxu0
      %3272 = vmatprep.mubr.f32.mxu0 0.0
      %3273 = vmatmul.mubr.f32.gmra.mxu0 %v3183
      %v3274 = vpop.f32.mrf.mxu0
      %v3275 = vadd.f32 0.0, %v3274
      %v3276 = vpop.f32.mrf.mxu0
      %3277 = vmatprep.mubr.f32.mxu0 0.0
      %3278 = vmatmul.mubr.f32.gmra.mxu0 %v3186
      %v3279 = vpop.f32.mrf.mxu0
      %v3280 = vadd.f32 0.0, %v3279
      %v3281 = vpop.f32.mrf.mxu0
      %3282 = vmatprep.mubr.f32.mxu0 0.0
      %3283 = vmatmul.mubr.f32.gmra.mxu0 %v3189
      %v3284 = vpop.f32.mrf.mxu0
      %v3285 = vadd.f32 0.0, %v3284
      %v3286 = vpop.f32.mrf.mxu0
      %3287 = vmatprep.mubr.f32.mxu0 0.0
      %3288 = vmatmul.mubr.f32.gmra.mxu0 %v3192
      %v3289 = vpop.f32.mrf.mxu0
      %v3290 = vadd.f32 0.0, %v3289
      %v3291 = vpop.f32.mrf.mxu0
      %3292 = vmatprep.mubr.f32.mxu0 0.0
      %3293 = vmatmul.mubr.f32.gmra.mxu0 %v3195
      %v3294 = vpop.f32.mrf.mxu0
      %v3295 = vadd.f32 0.0, %v3294
      %v3296 = vpop.f32.mrf.mxu0
      %3297 = vmatprep.mubr.f32.mxu0 0.0
      %3298 = vmatmul.mubr.f32.gmra.mxu0 %v3198
      %v3299 = vpop.f32.mrf.mxu0
      %v3300 = vadd.f32 0.0, %v3299
      %v3301 = vpop.f32.mrf.mxu0
      %3302 = vmatprep.mubr.f32.mxu0 0.0
      %3303 = vmatmul.mubr.f32.gmra.mxu0 %v3201
      %v3304 = vpop.f32.mrf.mxu0
      %v3305 = vadd.f32 0.0, %v3304
      %v3306 = vpop.f32.mrf.mxu0
      %3307 = vdwg.mxu0
      %3308 = vrot.lane.b32.xlu0 %v429, 64
      %v3309 = vpop.permute.xlu0 %3308
      %3310 = vrot.lane.b32.xlu0 %v431, 64
      %v3311 = vpop.permute.xlu0 %3310
      %3312 = vrot.lane.b32.xlu0 %v433, 64
      %v3313 = vpop.permute.xlu0 %3312
      %3314 = vrot.lane.b32.xlu0 %v435, 64
      %v3315 = vpop.permute.xlu0 %3314
      %3316 = vrot.lane.b32.xlu0 %v437, 64
      %v3317 = vpop.permute.xlu0 %3316
      %3318 = vrot.lane.b32.xlu0 %v439, 64
      %v3319 = vpop.permute.xlu0 %3318
      %3320 = vrot.lane.b32.xlu0 %v441, 64
      %v3321 = vpop.permute.xlu0 %3320
      %3322 = vrot.lane.b32.xlu0 %v443, 64
      %v3323 = vpop.permute.xlu0 %3322
      %v3333 = vsel %vm1685, %v2374, 0
      %v3336 = vsel %vm1685, %v2375, 0
      %v3339 = vsel %vm1685, %v2376, 0
      %v3342 = vsel %vm1685, %v2377, 0
      %v3345 = vsel %vm1685, %v2378, 0
      %v3348 = vsel %vm1685, %v2379, 0
      %v3351 = vsel %vm1685, %v2380, 0
      %v3354 = vsel %vm1685, %v2381, 0
      %3356 = vmatprep.subr.mxu0 0.0
      %3357 = vmatpush1.msra.mxu0 0.0
      %3358 = vmatprep.subr.mxu0 0.0
      %3359 = vmatpush1.msra.mxu0 0.0
      %3360 = vmatprep.subr.mxu0 0.0
      %3361 = vmatpush1.msra.mxu0 0.0
      %3362 = vmatprep.subr.mxu0 0.0
      %3363 = vmatpush1.msra.mxu0 0.0
      %3364 = vmatprep.subr.mxu0 0.0
      %3365 = vmatpush1.msra.mxu0 0.0
      %3366 = vmatprep.subr.mxu0 0.0
      %3367 = vmatpush1.msra.mxu0 0.0
      %3368 = vmatprep.subr.mxu0 0.0
      %3369 = vmatpush1.msra.mxu0 0.0
      %3370 = vmatprep.subr.mxu0 0.0
      %3371 = vmatpush1.msra.mxu0 0.0
      %3372 = vmatprep.subr.mxu0 0.0
      %3373 = vmatpush1.msra.mxu0 %v3323
      %3374 = vmatprep.subr.mxu0 0.0
      %3375 = vmatpush1.msra.mxu0 %v3321
      %3376 = vmatprep.subr.mxu0 0.0
      %3377 = vmatpush1.msra.mxu0 %v3319
      %3378 = vmatprep.subr.mxu0 0.0
      %3379 = vmatpush1.msra.mxu0 %v3317
      %3380 = vmatprep.subr.mxu0 0.0
      %3381 = vmatpush1.msra.mxu0 %v3315
      %3382 = vmatprep.subr.mxu0 0.0
      %3383 = vmatpush1.msra.mxu0 %v3313
      %3384 = vmatprep.subr.mxu0 0.0
      %3385 = vmatpush1.msra.mxu0 %v3311
      %3386 = vmatprep.subr.mxu0 0.0
      %3387 = vmatpush1.msra.mxu0 %v3309
      %3388 = vmatprep.subr.mxu0 0.0
      %3389 = vmatpush2.msra.mxu0 0.0
      %3390 = vmatprep.subr.mxu0 0.0
      %3391 = vmatpush2.msra.mxu0 0.0
      %3392 = vmatprep.subr.mxu0 0.0
      %3393 = vmatpush2.msra.mxu0 0.0
      %3394 = vmatprep.subr.mxu0 0.0
      %3395 = vmatpush2.msra.mxu0 0.0
      %3396 = vmatprep.subr.mxu0 0.0
      %3397 = vmatpush2.msra.mxu0 0.0
      %3398 = vmatprep.subr.mxu0 0.0
      %3399 = vmatpush2.msra.mxu0 0.0
      %3400 = vmatprep.subr.mxu0 0.0
      %3401 = vmatpush2.msra.mxu0 0.0
      %3402 = vmatprep.subr.mxu0 0.0
      %3403 = vmatpush2.msra.mxu0 0.0
      %3404 = vmatprep.subr.mxu0 0.0
      %3405 = vmatpush2.msra.mxu0 0.0
      %3406 = vmatprep.subr.mxu0 0.0
      %3407 = vmatpush2.msra.mxu0 0.0
      %3408 = vmatprep.subr.mxu0 0.0
      %3409 = vmatpush2.msra.mxu0 0.0
      %3410 = vmatprep.subr.mxu0 0.0
      %3411 = vmatpush2.msra.mxu0 0.0
      %3412 = vmatprep.subr.mxu0 0.0
      %3413 = vmatpush2.msra.mxu0 0.0
      %3414 = vmatprep.subr.mxu0 0.0
      %3415 = vmatpush2.msra.mxu0 0.0
      %3416 = vmatprep.subr.mxu0 0.0
      %3417 = vmatpush2.msra.mxu0 0.0
      %3418 = vmatprep.subr.mxu0 0.0
      %3419 = vmatpush2.msra.mxu0 0.0
      %3420 = vmatprep.mubr.f32.mxu0 0.0
      %3421 = vmatmul.mubr.f32.gmra.mxu0 %v3333
      %v3422 = vpop.f32.mrf.mxu0
      %v3423 = vadd.f32 0.0, %v3422
      %v3424 = vpop.f32.mrf.mxu0
      %3425 = vmatprep.mubr.f32.mxu0 0.0
      %3426 = vmatmul.mubr.f32.gmra.mxu0 %v3336
      %v3427 = vpop.f32.mrf.mxu0
      %v3428 = vadd.f32 0.0, %v3427
      %v3429 = vpop.f32.mrf.mxu0
      %3430 = vmatprep.mubr.f32.mxu0 0.0
      %3431 = vmatmul.mubr.f32.gmra.mxu0 %v3339
      %v3432 = vpop.f32.mrf.mxu0
      %v3433 = vadd.f32 0.0, %v3432
      %v3434 = vpop.f32.mrf.mxu0
      %3435 = vmatprep.mubr.f32.mxu0 0.0
      %3436 = vmatmul.mubr.f32.gmra.mxu0 %v3342
      %v3437 = vpop.f32.mrf.mxu0
      %v3438 = vadd.f32 0.0, %v3437
      %v3439 = vpop.f32.mrf.mxu0
      %3440 = vmatprep.mubr.f32.mxu0 0.0
      %3441 = vmatmul.mubr.f32.gmra.mxu0 %v3345
      %v3442 = vpop.f32.mrf.mxu0
      %v3443 = vadd.f32 0.0, %v3442
      %v3444 = vpop.f32.mrf.mxu0
      %3445 = vmatprep.mubr.f32.mxu0 0.0
      %3446 = vmatmul.mubr.f32.gmra.mxu0 %v3348
      %v3447 = vpop.f32.mrf.mxu0
      %v3448 = vadd.f32 0.0, %v3447
      %v3449 = vpop.f32.mrf.mxu0
      %3450 = vmatprep.mubr.f32.mxu0 0.0
      %3451 = vmatmul.mubr.f32.gmra.mxu0 %v3351
      %v3452 = vpop.f32.mrf.mxu0
      %v3453 = vadd.f32 0.0, %v3452
      %v3454 = vpop.f32.mrf.mxu0
      %3455 = vmatprep.mubr.f32.mxu0 0.0
      %3456 = vmatmul.mubr.f32.gmra.mxu0 %v3354
      %v3457 = vpop.f32.mrf.mxu0
      %v3458 = vadd.f32 0.0, %v3457
      %v3459 = vpop.f32.mrf.mxu0
      %3460 = vdwg.mxu0
      %3461 = vrot.lane.b32.xlu0 %v445, 64
      %v3462 = vpop.permute.xlu0 %3461
      %3463 = vrot.lane.b32.xlu0 %v447, 64
      %v3464 = vpop.permute.xlu0 %3463
      %3465 = vrot.lane.b32.xlu0 %v449, 64
      %v3466 = vpop.permute.xlu0 %3465
      %3467 = vrot.lane.b32.xlu0 %v451, 64
      %v3468 = vpop.permute.xlu0 %3467
      %3469 = vrot.lane.b32.xlu0 %v453, 64
      %v3470 = vpop.permute.xlu0 %3469
      %3471 = vrot.lane.b32.xlu0 %v455, 64
      %v3472 = vpop.permute.xlu0 %3471
      %3473 = vrot.lane.b32.xlu0 %v457, 64
      %v3474 = vpop.permute.xlu0 %3473
      %3475 = vrot.lane.b32.xlu0 %v459, 64
      %v3476 = vpop.permute.xlu0 %3475
      %v3486 = vsel %vm1685, %v2382, 0
      %v3489 = vsel %vm1685, %v2383, 0
      %v3492 = vsel %vm1685, %v2384, 0
      %v3495 = vsel %vm1685, %v2385, 0
      %v3498 = vsel %vm1685, %v2386, 0
      %v3501 = vsel %vm1685, %v2387, 0
      %v3504 = vsel %vm1685, %v2388, 0
      %v3507 = vsel %vm1685, %v2389, 0
      %3509 = vmatprep.subr.mxu0 0.0
      %3510 = vmatpush1.msra.mxu0 0.0
      %3511 = vmatprep.subr.mxu0 0.0
      %3512 = vmatpush1.msra.mxu0 0.0
      %3513 = vmatprep.subr.mxu0 0.0
      %3514 = vmatpush1.msra.mxu0 0.0
      %3515 = vmatprep.subr.mxu0 0.0
      %3516 = vmatpush1.msra.mxu0 0.0
      %3517 = vmatprep.subr.mxu0 0.0
      %3518 = vmatpush1.msra.mxu0 0.0
      %3519 = vmatprep.subr.mxu0 0.0
      %3520 = vmatpush1.msra.mxu0 0.0
      %3521 = vmatprep.subr.mxu0 0.0
      %3522 = vmatpush1.msra.mxu0 0.0
      %3523 = vmatprep.subr.mxu0 0.0
      %3524 = vmatpush1.msra.mxu0 0.0
      %3525 = vmatprep.subr.mxu0 0.0
      %3526 = vmatpush1.msra.mxu0 %v3476
      %3527 = vmatprep.subr.mxu0 0.0
      %3528 = vmatpush1.msra.mxu0 %v3474
      %3529 = vmatprep.subr.mxu0 0.0
      %3530 = vmatpush1.msra.mxu0 %v3472
      %3531 = vmatprep.subr.mxu0 0.0
      %3532 = vmatpush1.msra.mxu0 %v3470
      %3533 = vmatprep.subr.mxu0 0.0
      %3534 = vmatpush1.msra.mxu0 %v3468
      %3535 = vmatprep.subr.mxu0 0.0
      %3536 = vmatpush1.msra.mxu0 %v3466
      %3537 = vmatprep.subr.mxu0 0.0
      %3538 = vmatpush1.msra.mxu0 %v3464
      %3539 = vmatprep.subr.mxu0 0.0
      %3540 = vmatpush1.msra.mxu0 %v3462
      %3541 = vmatprep.subr.mxu0 0.0
      %3542 = vmatpush2.msra.mxu0 0.0
      %3543 = vmatprep.subr.mxu0 0.0
      %3544 = vmatpush2.msra.mxu0 0.0
      %3545 = vmatprep.subr.mxu0 0.0
      %3546 = vmatpush2.msra.mxu0 0.0
      %3547 = vmatprep.subr.mxu0 0.0
      %3548 = vmatpush2.msra.mxu0 0.0
      %3549 = vmatprep.subr.mxu0 0.0
      %3550 = vmatpush2.msra.mxu0 0.0
      %3551 = vmatprep.subr.mxu0 0.0
      %3552 = vmatpush2.msra.mxu0 0.0
      %3553 = vmatprep.subr.mxu0 0.0
      %3554 = vmatpush2.msra.mxu0 0.0
      %3555 = vmatprep.subr.mxu0 0.0
      %3556 = vmatpush2.msra.mxu0 0.0
      %3557 = vmatprep.subr.mxu0 0.0
      %3558 = vmatpush2.msra.mxu0 0.0
      %3559 = vmatprep.subr.mxu0 0.0
      %3560 = vmatpush2.msra.mxu0 0.0
      %3561 = vmatprep.subr.mxu0 0.0
      %3562 = vmatpush2.msra.mxu0 0.0
      %3563 = vmatprep.subr.mxu0 0.0
      %3564 = vmatpush2.msra.mxu0 0.0
      %3565 = vmatprep.subr.mxu0 0.0
      %3566 = vmatpush2.msra.mxu0 0.0
      %3567 = vmatprep.subr.mxu0 0.0
      %3568 = vmatpush2.msra.mxu0 0.0
      %3569 = vmatprep.subr.mxu0 0.0
      %3570 = vmatpush2.msra.mxu0 0.0
      %3571 = vmatprep.subr.mxu0 0.0
      %3572 = vmatpush2.msra.mxu0 0.0
      %3573 = vmatprep.mubr.f32.mxu0 0.0
      %3574 = vmatmul.mubr.f32.gmra.mxu0 %v3486
      %v3575 = vpop.f32.mrf.mxu0
      %v3576 = vadd.f32 0.0, %v3575
      %v3577 = vpop.f32.mrf.mxu0
      %3578 = vmatprep.mubr.f32.mxu0 0.0
      %3579 = vmatmul.mubr.f32.gmra.mxu0 %v3489
      %v3580 = vpop.f32.mrf.mxu0
      %v3581 = vadd.f32 0.0, %v3580
      %v3582 = vpop.f32.mrf.mxu0
      %3583 = vmatprep.mubr.f32.mxu0 0.0
      %3584 = vmatmul.mubr.f32.gmra.mxu0 %v3492
      %v3585 = vpop.f32.mrf.mxu0
      %v3586 = vadd.f32 0.0, %v3585
      %v3587 = vpop.f32.mrf.mxu0
      %3588 = vmatprep.mubr.f32.mxu0 0.0
      %3589 = vmatmul.mubr.f32.gmra.mxu0 %v3495
      %v3590 = vpop.f32.mrf.mxu0
      %v3591 = vadd.f32 0.0, %v3590
      %v3592 = vpop.f32.mrf.mxu0
      %3593 = vmatprep.mubr.f32.mxu0 0.0
      %3594 = vmatmul.mubr.f32.gmra.mxu0 %v3498
      %v3595 = vpop.f32.mrf.mxu0
      %v3596 = vadd.f32 0.0, %v3595
      %v3597 = vpop.f32.mrf.mxu0
      %3598 = vmatprep.mubr.f32.mxu0 0.0
      %3599 = vmatmul.mubr.f32.gmra.mxu0 %v3501
      %v3600 = vpop.f32.mrf.mxu0
      %v3601 = vadd.f32 0.0, %v3600
      %v3602 = vpop.f32.mrf.mxu0
      %3603 = vmatprep.mubr.f32.mxu0 0.0
      %3604 = vmatmul.mubr.f32.gmra.mxu0 %v3504
      %v3605 = vpop.f32.mrf.mxu0
      %v3606 = vadd.f32 0.0, %v3605
      %v3607 = vpop.f32.mrf.mxu0
      %3608 = vmatprep.mubr.f32.mxu0 0.0
      %3609 = vmatmul.mubr.f32.gmra.mxu0 %v3507
      %v3610 = vpop.f32.mrf.mxu0
      %v3611 = vadd.f32 0.0, %v3610
      %v3612 = vpop.f32.mrf.mxu0
      %3613 = vdwg.mxu0
      %v3614 = vld [vmem:[%s2] sm:$0xf]
      %v3615 = vld [vmem:[%s2 + $0x4] sm:$0xf]
      %v3616 = vld [vmem:[%s2 + $0x8] sm:$0xf]
      %v3617 = vld [vmem:[%s2 + $0xc] sm:$0xf]
      %v3618 = vld [vmem:[%s2 + $0x10] sm:$0xf]
      %v3619 = vld [vmem:[%s2 + $0x14] sm:$0xf]
      %v3620 = vld [vmem:[%s2 + $0x18] sm:$0xf]
      %v3621 = vld [vmem:[%s2 + $0x1c] sm:$0xf]
      %v3623 = vsel %vm476, %v2505, 0
      %v3626 = vsel %vm476, %v2510, 0
      %v3629 = vsel %vm476, %v2515, 0
      %v3632 = vsel %vm476, %v2520, 0
      %v3635 = vsel %vm476, %v2525, 0
      %v3638 = vsel %vm476, %v2530, 0
      %v3641 = vsel %vm476, %v2535, 0
      %v3644 = vsel %vm476, %v2540, 0
      %vm3646 = vcmask 1043456
      %v3648 = vsel %vm3646, %v3614, 0
      %3650 = vmatprep.subr.mxu0 0.0
      %3651 = vmatpush1.msra.mxu0 0.0
      %3652 = vmatprep.subr.mxu0 0.0
      %3653 = vmatpush1.msra.mxu0 0.0
      %3654 = vmatprep.subr.mxu0 0.0
      %3655 = vmatpush1.msra.mxu0 0.0
      %3656 = vmatprep.subr.mxu0 0.0
      %3657 = vmatpush1.msra.mxu0 0.0
      %3658 = vmatprep.subr.mxu0 0.0
      %3659 = vmatpush1.msra.mxu0 0.0
      %3660 = vmatprep.subr.mxu0 0.0
      %3661 = vmatpush1.msra.mxu0 0.0
      %3662 = vmatprep.subr.mxu0 0.0
      %3663 = vmatpush1.msra.mxu0 0.0
      %3664 = vmatprep.subr.mxu0 0.0
      %3665 = vmatpush1.msra.mxu0 0.0
      %3666 = vmatprep.subr.mxu0 0.0
      %3667 = vmatpush1.msra.mxu0 0.0
      %3668 = vmatprep.subr.mxu0 0.0
      %3669 = vmatpush1.msra.mxu0 0.0
      %3670 = vmatprep.subr.mxu0 0.0
      %3671 = vmatpush1.msra.mxu0 0.0
      %3672 = vmatprep.subr.mxu0 0.0
      %3673 = vmatpush1.msra.mxu0 0.0
      %3674 = vmatprep.subr.mxu0 0.0
      %3675 = vmatpush1.msra.mxu0 0.0
      %3676 = vmatprep.subr.mxu0 0.0
      %3677 = vmatpush1.msra.mxu0 0.0
      %3678 = vmatprep.subr.mxu0 0.0
      %3679 = vmatpush1.msra.mxu0 0.0
      %3680 = vmatprep.subr.mxu0 0.0
      %3681 = vmatpush1.msra.mxu0 %v3648
      %3682 = vmatprep.subr.mxu0 0.0
      %3683 = vmatpush2.msra.mxu0 0.0
      %3684 = vmatprep.subr.mxu0 0.0
      %3685 = vmatpush2.msra.mxu0 0.0
      %3686 = vmatprep.subr.mxu0 0.0
      %3687 = vmatpush2.msra.mxu0 0.0
      %3688 = vmatprep.subr.mxu0 0.0
      %3689 = vmatpush2.msra.mxu0 0.0
      %3690 = vmatprep.subr.mxu0 0.0
      %3691 = vmatpush2.msra.mxu0 0.0
      %3692 = vmatprep.subr.mxu0 0.0
      %3693 = vmatpush2.msra.mxu0 0.0
      %3694 = vmatprep.subr.mxu0 0.0
      %3695 = vmatpush2.msra.mxu0 0.0
      %3696 = vmatprep.subr.mxu0 0.0
      %3697 = vmatpush2.msra.mxu0 0.0
      %3698 = vmatprep.subr.mxu0 0.0
      %3699 = vmatpush2.msra.mxu0 0.0
      %3700 = vmatprep.subr.mxu0 0.0
      %3701 = vmatpush2.msra.mxu0 0.0
      %3702 = vmatprep.subr.mxu0 0.0
      %3703 = vmatpush2.msra.mxu0 0.0
      %3704 = vmatprep.subr.mxu0 0.0
      %3705 = vmatpush2.msra.mxu0 0.0
      %3706 = vmatprep.subr.mxu0 0.0
      %3707 = vmatpush2.msra.mxu0 0.0
      %3708 = vmatprep.subr.mxu0 0.0
      %3709 = vmatpush2.msra.mxu0 0.0
      %3710 = vmatprep.subr.mxu0 0.0
      %3711 = vmatpush2.msra.mxu0 0.0
      %3712 = vmatprep.subr.mxu0 0.0
      %3713 = vmatpush2.msra.mxu0 0.0
      %3714 = vmatprep.mubr.f32.mxu0 0.0
      %3715 = vmatmul.mubr.f32.gmra.mxu0 %v3623
      %v3716 = vpop.f32.mrf.mxu0
      %v3717 = vadd.f32 0.0, %v3716
      %v3718 = vpop.f32.mrf.mxu0
      %3719 = vmatprep.mubr.f32.mxu0 0.0
      %3720 = vmatmul.mubr.f32.gmra.mxu0 %v3626
      %v3721 = vpop.f32.mrf.mxu0
      %v3722 = vadd.f32 0.0, %v3721
      %v3723 = vpop.f32.mrf.mxu0
      %3724 = vmatprep.mubr.f32.mxu0 0.0
      %3725 = vmatmul.mubr.f32.gmra.mxu0 %v3629
      %v3726 = vpop.f32.mrf.mxu0
      %v3727 = vadd.f32 0.0, %v3726
      %v3728 = vpop.f32.mrf.mxu0
      %3729 = vmatprep.mubr.f32.mxu0 0.0
      %3730 = vmatmul.mubr.f32.gmra.mxu0 %v3632
      %v3731 = vpop.f32.mrf.mxu0
      %v3732 = vadd.f32 0.0, %v3731
      %v3733 = vpop.f32.mrf.mxu0
      %3734 = vmatprep.mubr.f32.mxu0 0.0
      %3735 = vmatmul.mubr.f32.gmra.mxu0 %v3635
      %v3736 = vpop.f32.mrf.mxu0
      %v3737 = vadd.f32 0.0, %v3736
      %v3738 = vpop.f32.mrf.mxu0
      %3739 = vmatprep.mubr.f32.mxu0 0.0
      %3740 = vmatmul.mubr.f32.gmra.mxu0 %v3638
      %v3741 = vpop.f32.mrf.mxu0
      %v3742 = vadd.f32 0.0, %v3741
      %v3743 = vpop.f32.mrf.mxu0
      %3744 = vmatprep.mubr.f32.mxu0 0.0
      %3745 = vmatmul.mubr.f32.gmra.mxu0 %v3641
      %v3746 = vpop.f32.mrf.mxu0
      %v3747 = vadd.f32 0.0, %v3746
      %v3748 = vpop.f32.mrf.mxu0
      %3749 = vmatprep.mubr.f32.mxu0 0.0
      %3750 = vmatmul.mubr.f32.gmra.mxu0 %v3644
      %v3751 = vpop.f32.mrf.mxu0
      %v3752 = vadd.f32 0.0, %v3751
      %v3753 = vpop.f32.mrf.mxu0
      %3754 = vdwg.mxu0
      %v3756 = vsel %vm476, %v2658, 0
      %v3759 = vsel %vm476, %v2663, 0
      %v3762 = vsel %vm476, %v2668, 0
      %v3765 = vsel %vm476, %v2673, 0
      %v3768 = vsel %vm476, %v2678, 0
      %v3771 = vsel %vm476, %v2683, 0
      %v3774 = vsel %vm476, %v2688, 0
      %v3777 = vsel %vm476, %v2693, 0
      %v3780 = vsel %vm3646, %v3615, 0
      %3782 = vmatprep.subr.mxu0 0.0
      %3783 = vmatpush1.msra.mxu0 0.0
      %3784 = vmatprep.subr.mxu0 0.0
      %3785 = vmatpush1.msra.mxu0 0.0
      %3786 = vmatprep.subr.mxu0 0.0
      %3787 = vmatpush1.msra.mxu0 0.0
      %3788 = vmatprep.subr.mxu0 0.0
      %3789 = vmatpush1.msra.mxu0 0.0
      %3790 = vmatprep.subr.mxu0 0.0
      %3791 = vmatpush1.msra.mxu0 0.0
      %3792 = vmatprep.subr.mxu0 0.0
      %3793 = vmatpush1.msra.mxu0 0.0
      %3794 = vmatprep.subr.mxu0 0.0
      %3795 = vmatpush1.msra.mxu0 0.0
      %3796 = vmatprep.subr.mxu0 0.0
      %3797 = vmatpush1.msra.mxu0 0.0
      %3798 = vmatprep.subr.mxu0 0.0
      %3799 = vmatpush1.msra.mxu0 0.0
      %3800 = vmatprep.subr.mxu0 0.0
      %3801 = vmatpush1.msra.mxu0 0.0
      %3802 = vmatprep.subr.mxu0 0.0
      %3803 = vmatpush1.msra.mxu0 0.0
      %3804 = vmatprep.subr.mxu0 0.0
      %3805 = vmatpush1.msra.mxu0 0.0
      %3806 = vmatprep.subr.mxu0 0.0
      %3807 = vmatpush1.msra.mxu0 0.0
      %3808 = vmatprep.subr.mxu0 0.0
      %3809 = vmatpush1.msra.mxu0 0.0
      %3810 = vmatprep.subr.mxu0 0.0
      %3811 = vmatpush1.msra.mxu0 0.0
      %3812 = vmatprep.subr.mxu0 0.0
      %3813 = vmatpush1.msra.mxu0 %v3780
      %3814 = vmatprep.subr.mxu0 0.0
      %3815 = vmatpush2.msra.mxu0 0.0
      %3816 = vmatprep.subr.mxu0 0.0
      %3817 = vmatpush2.msra.mxu0 0.0
      %3818 = vmatprep.subr.mxu0 0.0
      %3819 = vmatpush2.msra.mxu0 0.0
      %3820 = vmatprep.subr.mxu0 0.0
      %3821 = vmatpush2.msra.mxu0 0.0
      %3822 = vmatprep.subr.mxu0 0.0
      %3823 = vmatpush2.msra.mxu0 0.0
      %3824 = vmatprep.subr.mxu0 0.0
      %3825 = vmatpush2.msra.mxu0 0.0
      %3826 = vmatprep.subr.mxu0 0.0
      %3827 = vmatpush2.msra.mxu0 0.0
      %3828 = vmatprep.subr.mxu0 0.0
      %3829 = vmatpush2.msra.mxu0 0.0
      %3830 = vmatprep.subr.mxu0 0.0
      %3831 = vmatpush2.msra.mxu0 0.0
      %3832 = vmatprep.subr.mxu0 0.0
      %3833 = vmatpush2.msra.mxu0 0.0
      %3834 = vmatprep.subr.mxu0 0.0
      %3835 = vmatpush2.msra.mxu0 0.0
      %3836 = vmatprep.subr.mxu0 0.0
      %3837 = vmatpush2.msra.mxu0 0.0
      %3838 = vmatprep.subr.mxu0 0.0
      %3839 = vmatpush2.msra.mxu0 0.0
      %3840 = vmatprep.subr.mxu0 0.0
      %3841 = vmatpush2.msra.mxu0 0.0
      %3842 = vmatprep.subr.mxu0 0.0
      %3843 = vmatpush2.msra.mxu0 0.0
      %3844 = vmatprep.subr.mxu0 0.0
      %3845 = vmatpush2.msra.mxu0 0.0
      %3846 = vmatprep.mubr.f32.mxu0 0.0
      %3847 = vmatmul.mubr.f32.gmra.mxu0 %v3756
      %v3848 = vpop.f32.mrf.mxu0
      %v3849 = vadd.f32 0.0, %v3848
      %v3850 = vpop.f32.mrf.mxu0
      %3851 = vmatprep.mubr.f32.mxu0 0.0
      %3852 = vmatmul.mubr.f32.gmra.mxu0 %v3759
      %v3853 = vpop.f32.mrf.mxu0
      %v3854 = vadd.f32 0.0, %v3853
      %v3855 = vpop.f32.mrf.mxu0
      %3856 = vmatprep.mubr.f32.mxu0 0.0
      %3857 = vmatmul.mubr.f32.gmra.mxu0 %v3762
      %v3858 = vpop.f32.mrf.mxu0
      %v3859 = vadd.f32 0.0, %v3858
      %v3860 = vpop.f32.mrf.mxu0
      %3861 = vmatprep.mubr.f32.mxu0 0.0
      %3862 = vmatmul.mubr.f32.gmra.mxu0 %v3765
      %v3863 = vpop.f32.mrf.mxu0
      %v3864 = vadd.f32 0.0, %v3863
      %v3865 = vpop.f32.mrf.mxu0
      %3866 = vmatprep.mubr.f32.mxu0 0.0
      %3867 = vmatmul.mubr.f32.gmra.mxu0 %v3768
      %v3868 = vpop.f32.mrf.mxu0
      %v3869 = vadd.f32 0.0, %v3868
      %v3870 = vpop.f32.mrf.mxu0
      %3871 = vmatprep.mubr.f32.mxu0 0.0
      %3872 = vmatmul.mubr.f32.gmra.mxu0 %v3771
      %v3873 = vpop.f32.mrf.mxu0
      %v3874 = vadd.f32 0.0, %v3873
      %v3875 = vpop.f32.mrf.mxu0
      %3876 = vmatprep.mubr.f32.mxu0 0.0
      %3877 = vmatmul.mubr.f32.gmra.mxu0 %v3774
      %v3878 = vpop.f32.mrf.mxu0
      %v3879 = vadd.f32 0.0, %v3878
      %v3880 = vpop.f32.mrf.mxu0
      %3881 = vmatprep.mubr.f32.mxu0 0.0
      %3882 = vmatmul.mubr.f32.gmra.mxu0 %v3777
      %v3883 = vpop.f32.mrf.mxu0
      %v3884 = vadd.f32 0.0, %v3883
      %v3885 = vpop.f32.mrf.mxu0
      %3886 = vdwg.mxu0
      %v3888 = vsel %vm476, %v2811, 0
      %v3891 = vsel %vm476, %v2816, 0
      %v3894 = vsel %vm476, %v2821, 0
      %v3897 = vsel %vm476, %v2826, 0
      %v3900 = vsel %vm476, %v2831, 0
      %v3903 = vsel %vm476, %v2836, 0
      %v3906 = vsel %vm476, %v2841, 0
      %v3909 = vsel %vm476, %v2846, 0
      %v3912 = vsel %vm3646, %v3616, 0
      %3914 = vmatprep.subr.mxu0 0.0
      %3915 = vmatpush1.msra.mxu0 0.0
      %3916 = vmatprep.subr.mxu0 0.0
      %3917 = vmatpush1.msra.mxu0 0.0
      %3918 = vmatprep.subr.mxu0 0.0
      %3919 = vmatpush1.msra.mxu0 0.0
      %3920 = vmatprep.subr.mxu0 0.0
      %3921 = vmatpush1.msra.mxu0 0.0
      %3922 = vmatprep.subr.mxu0 0.0
      %3923 = vmatpush1.msra.mxu0 0.0
      %3924 = vmatprep.subr.mxu0 0.0
      %3925 = vmatpush1.msra.mxu0 0.0
      %3926 = vmatprep.subr.mxu0 0.0
      %3927 = vmatpush1.msra.mxu0 0.0
      %3928 = vmatprep.subr.mxu0 0.0
      %3929 = vmatpush1.msra.mxu0 0.0
      %3930 = vmatprep.subr.mxu0 0.0
      %3931 = vmatpush1.msra.mxu0 0.0
      %3932 = vmatprep.subr.mxu0 0.0
      %3933 = vmatpush1.msra.mxu0 0.0
      %3934 = vmatprep.subr.mxu0 0.0
      %3935 = vmatpush1.msra.mxu0 0.0
      %3936 = vmatprep.subr.mxu0 0.0
      %3937 = vmatpush1.msra.mxu0 0.0
      %3938 = vmatprep.subr.mxu0 0.0
      %3939 = vmatpush1.msra.mxu0 0.0
      %3940 = vmatprep.subr.mxu0 0.0
      %3941 = vmatpush1.msra.mxu0 0.0
      %3942 = vmatprep.subr.mxu0 0.0
      %3943 = vmatpush1.msra.mxu0 0.0
      %3944 = vmatprep.subr.mxu0 0.0
      %3945 = vmatpush1.msra.mxu0 %v3912
      %3946 = vmatprep.subr.mxu0 0.0
      %3947 = vmatpush2.msra.mxu0 0.0
      %3948 = vmatprep.subr.mxu0 0.0
      %3949 = vmatpush2.msra.mxu0 0.0
      %3950 = vmatprep.subr.mxu0 0.0
      %3951 = vmatpush2.msra.mxu0 0.0
      %3952 = vmatprep.subr.mxu0 0.0
      %3953 = vmatpush2.msra.mxu0 0.0
      %3954 = vmatprep.subr.mxu0 0.0
      %3955 = vmatpush2.msra.mxu0 0.0
      %3956 = vmatprep.subr.mxu0 0.0
      %3957 = vmatpush2.msra.mxu0 0.0
      %3958 = vmatprep.subr.mxu0 0.0
      %3959 = vmatpush2.msra.mxu0 0.0
      %3960 = vmatprep.subr.mxu0 0.0
      %3961 = vmatpush2.msra.mxu0 0.0
      %3962 = vmatprep.subr.mxu0 0.0
      %3963 = vmatpush2.msra.mxu0 0.0
      %3964 = vmatprep.subr.mxu0 0.0
      %3965 = vmatpush2.msra.mxu0 0.0
      %3966 = vmatprep.subr.mxu0 0.0
      %3967 = vmatpush2.msra.mxu0 0.0
      %3968 = vmatprep.subr.mxu0 0.0
      %3969 = vmatpush2.msra.mxu0 0.0
      %3970 = vmatprep.subr.mxu0 0.0
      %3971 = vmatpush2.msra.mxu0 0.0
      %3972 = vmatprep.subr.mxu0 0.0
      %3973 = vmatpush2.msra.mxu0 0.0
      %3974 = vmatprep.subr.mxu0 0.0
      %3975 = vmatpush2.msra.mxu0 0.0
      %3976 = vmatprep.subr.mxu0 0.0
      %3977 = vmatpush2.msra.mxu0 0.0
      %3978 = vmatprep.mubr.f32.mxu0 0.0
      %3979 = vmatmul.mubr.f32.gmra.mxu0 %v3888
      %v3980 = vpop.f32.mrf.mxu0
      %v3981 = vadd.f32 0.0, %v3980
      %v3982 = vpop.f32.mrf.mxu0
      %3983 = vmatprep.mubr.f32.mxu0 0.0
      %3984 = vmatmul.mubr.f32.gmra.mxu0 %v3891
      %v3985 = vpop.f32.mrf.mxu0
      %v3986 = vadd.f32 0.0, %v3985
      %v3987 = vpop.f32.mrf.mxu0
      %3988 = vmatprep.mubr.f32.mxu0 0.0
      %3989 = vmatmul.mubr.f32.gmra.mxu0 %v3894
      %v3990 = vpop.f32.mrf.mxu0
      %v3991 = vadd.f32 0.0, %v3990
      %v3992 = vpop.f32.mrf.mxu0
      %3993 = vmatprep.mubr.f32.mxu0 0.0
      %3994 = vmatmul.mubr.f32.gmra.mxu0 %v3897
      %v3995 = vpop.f32.mrf.mxu0
      %v3996 = vadd.f32 0.0, %v3995
      %v3997 = vpop.f32.mrf.mxu0
      %3998 = vmatprep.mubr.f32.mxu0 0.0
      %3999 = vmatmul.mubr.f32.gmra.mxu0 %v3900
      %v4000 = vpop.f32.mrf.mxu0
      %v4001 = vadd.f32 0.0, %v4000
      %v4002 = vpop.f32.mrf.mxu0
      %4003 = vmatprep.mubr.f32.mxu0 0.0
      %4004 = vmatmul.mubr.f32.gmra.mxu0 %v3903
      %v4005 = vpop.f32.mrf.mxu0
      %v4006 = vadd.f32 0.0, %v4005
      %v4007 = vpop.f32.mrf.mxu0
      %4008 = vmatprep.mubr.f32.mxu0 0.0
      %4009 = vmatmul.mubr.f32.gmra.mxu0 %v3906
      %v4010 = vpop.f32.mrf.mxu0
      %v4011 = vadd.f32 0.0, %v4010
      %v4012 = vpop.f32.mrf.mxu0
      %4013 = vmatprep.mubr.f32.mxu0 0.0
      %4014 = vmatmul.mubr.f32.gmra.mxu0 %v3909
      %v4015 = vpop.f32.mrf.mxu0
      %v4016 = vadd.f32 0.0, %v4015
      %v4017 = vpop.f32.mrf.mxu0
      %4018 = vdwg.mxu0
      %v4020 = vsel %vm476, %v2964, 0
      %v4023 = vsel %vm476, %v2969, 0
      %v4026 = vsel %vm476, %v2974, 0
      %v4029 = vsel %vm476, %v2979, 0
      %v4032 = vsel %vm476, %v2984, 0
      %v4035 = vsel %vm476, %v2989, 0
      %v4038 = vsel %vm476, %v2994, 0
      %v4041 = vsel %vm476, %v2999, 0
      %v4044 = vsel %vm3646, %v3617, 0
      %4046 = vmatprep.subr.mxu0 0.0
      %4047 = vmatpush1.msra.mxu0 0.0
      %4048 = vmatprep.subr.mxu0 0.0
      %4049 = vmatpush1.msra.mxu0 0.0
      %4050 = vmatprep.subr.mxu0 0.0
      %4051 = vmatpush1.msra.mxu0 0.0
      %4052 = vmatprep.subr.mxu0 0.0
      %4053 = vmatpush1.msra.mxu0 0.0
      %4054 = vmatprep.subr.mxu0 0.0
      %4055 = vmatpush1.msra.mxu0 0.0
      %4056 = vmatprep.subr.mxu0 0.0
      %4057 = vmatpush1.msra.mxu0 0.0
      %4058 = vmatprep.subr.mxu0 0.0
      %4059 = vmatpush1.msra.mxu0 0.0
      %4060 = vmatprep.subr.mxu0 0.0
      %4061 = vmatpush1.msra.mxu0 0.0
      %4062 = vmatprep.subr.mxu0 0.0
      %4063 = vmatpush1.msra.mxu0 0.0
      %4064 = vmatprep.subr.mxu0 0.0
      %4065 = vmatpush1.msra.mxu0 0.0
      %4066 = vmatprep.subr.mxu0 0.0
      %4067 = vmatpush1.msra.mxu0 0.0
      %4068 = vmatprep.subr.mxu0 0.0
      %4069 = vmatpush1.msra.mxu0 0.0
      %4070 = vmatprep.subr.mxu0 0.0
      %4071 = vmatpush1.msra.mxu0 0.0
      %4072 = vmatprep.subr.mxu0 0.0
      %4073 = vmatpush1.msra.mxu0 0.0
      %4074 = vmatprep.subr.mxu0 0.0
      %4075 = vmatpush1.msra.mxu0 0.0
      %4076 = vmatprep.subr.mxu0 0.0
      %4077 = vmatpush1.msra.mxu0 %v4044
      %4078 = vmatprep.subr.mxu0 0.0
      %4079 = vmatpush2.msra.mxu0 0.0
      %4080 = vmatprep.subr.mxu0 0.0
      %4081 = vmatpush2.msra.mxu0 0.0
      %4082 = vmatprep.subr.mxu0 0.0
      %4083 = vmatpush2.msra.mxu0 0.0
      %4084 = vmatprep.subr.mxu0 0.0
      %4085 = vmatpush2.msra.mxu0 0.0
      %4086 = vmatprep.subr.mxu0 0.0
      %4087 = vmatpush2.msra.mxu0 0.0
      %4088 = vmatprep.subr.mxu0 0.0
      %4089 = vmatpush2.msra.mxu0 0.0
      %4090 = vmatprep.subr.mxu0 0.0
      %4091 = vmatpush2.msra.mxu0 0.0
      %4092 = vmatprep.subr.mxu0 0.0
      %4093 = vmatpush2.msra.mxu0 0.0
      %4094 = vmatprep.subr.mxu0 0.0
      %4095 = vmatpush2.msra.mxu0 0.0
      %4096 = vmatprep.subr.mxu0 0.0
      %4097 = vmatpush2.msra.mxu0 0.0
      %4098 = vmatprep.subr.mxu0 0.0
      %4099 = vmatpush2.msra.mxu0 0.0
      %4100 = vmatprep.subr.mxu0 0.0
      %4101 = vmatpush2.msra.mxu0 0.0
      %4102 = vmatprep.subr.mxu0 0.0
      %4103 = vmatpush2.msra.mxu0 0.0
      %4104 = vmatprep.subr.mxu0 0.0
      %4105 = vmatpush2.msra.mxu0 0.0
      %4106 = vmatprep.subr.mxu0 0.0
      %4107 = vmatpush2.msra.mxu0 0.0
      %4108 = vmatprep.subr.mxu0 0.0
      %4109 = vmatpush2.msra.mxu0 0.0
      %4110 = vmatprep.mubr.f32.mxu0 0.0
      %4111 = vmatmul.mubr.f32.gmra.mxu0 %v4020
      %v4112 = vpop.f32.mrf.mxu0
      %v4113 = vadd.f32 0.0, %v4112
      %v4114 = vpop.f32.mrf.mxu0
      %4115 = vmatprep.mubr.f32.mxu0 0.0
      %4116 = vmatmul.mubr.f32.gmra.mxu0 %v4023
      %v4117 = vpop.f32.mrf.mxu0
      %v4118 = vadd.f32 0.0, %v4117
      %v4119 = vpop.f32.mrf.mxu0
      %4120 = vmatprep.mubr.f32.mxu0 0.0
      %4121 = vmatmul.mubr.f32.gmra.mxu0 %v4026
      %v4122 = vpop.f32.mrf.mxu0
      %v4123 = vadd.f32 0.0, %v4122
      %v4124 = vpop.f32.mrf.mxu0
      %4125 = vmatprep.mubr.f32.mxu0 0.0
      %4126 = vmatmul.mubr.f32.gmra.mxu0 %v4029
      %v4127 = vpop.f32.mrf.mxu0
      %v4128 = vadd.f32 0.0, %v4127
      %v4129 = vpop.f32.mrf.mxu0
      %4130 = vmatprep.mubr.f32.mxu0 0.0
      %4131 = vmatmul.mubr.f32.gmra.mxu0 %v4032
      %v4132 = vpop.f32.mrf.mxu0
      %v4133 = vadd.f32 0.0, %v4132
      %v4134 = vpop.f32.mrf.mxu0
      %4135 = vmatprep.mubr.f32.mxu0 0.0
      %4136 = vmatmul.mubr.f32.gmra.mxu0 %v4035
      %v4137 = vpop.f32.mrf.mxu0
      %v4138 = vadd.f32 0.0, %v4137
      %v4139 = vpop.f32.mrf.mxu0
      %4140 = vmatprep.mubr.f32.mxu0 0.0
      %4141 = vmatmul.mubr.f32.gmra.mxu0 %v4038
      %v4142 = vpop.f32.mrf.mxu0
      %v4143 = vadd.f32 0.0, %v4142
      %v4144 = vpop.f32.mrf.mxu0
      %4145 = vmatprep.mubr.f32.mxu0 0.0
      %4146 = vmatmul.mubr.f32.gmra.mxu0 %v4041
      %v4147 = vpop.f32.mrf.mxu0
      %v4148 = vadd.f32 0.0, %v4147
      %v4149 = vpop.f32.mrf.mxu0
      %4150 = vdwg.mxu0
      %v4152 = vsel %vm476, %v3117, 0
      %v4155 = vsel %vm476, %v3122, 0
      %v4158 = vsel %vm476, %v3127, 0
      %v4161 = vsel %vm476, %v3132, 0
      %v4164 = vsel %vm476, %v3137, 0
      %v4167 = vsel %vm476, %v3142, 0
      %v4170 = vsel %vm476, %v3147, 0
      %v4173 = vsel %vm476, %v3152, 0
      %v4176 = vsel %vm3646, %v3618, 0
      %4178 = vmatprep.subr.mxu0 0.0
      %4179 = vmatpush1.msra.mxu0 0.0
      %4180 = vmatprep.subr.mxu0 0.0
      %4181 = vmatpush1.msra.mxu0 0.0
      %4182 = vmatprep.subr.mxu0 0.0
      %4183 = vmatpush1.msra.mxu0 0.0
      %4184 = vmatprep.subr.mxu0 0.0
      %4185 = vmatpush1.msra.mxu0 0.0
      %4186 = vmatprep.subr.mxu0 0.0
      %4187 = vmatpush1.msra.mxu0 0.0
      %4188 = vmatprep.subr.mxu0 0.0
      %4189 = vmatpush1.msra.mxu0 0.0
      %4190 = vmatprep.subr.mxu0 0.0
      %4191 = vmatpush1.msra.mxu0 0.0
      %4192 = vmatprep.subr.mxu0 0.0
      %4193 = vmatpush1.msra.mxu0 0.0
      %4194 = vmatprep.subr.mxu0 0.0
      %4195 = vmatpush1.msra.mxu0 0.0
      %4196 = vmatprep.subr.mxu0 0.0
      %4197 = vmatpush1.msra.mxu0 0.0
      %4198 = vmatprep.subr.mxu0 0.0
      %4199 = vmatpush1.msra.mxu0 0.0
      %4200 = vmatprep.subr.mxu0 0.0
      %4201 = vmatpush1.msra.mxu0 0.0
      %4202 = vmatprep.subr.mxu0 0.0
      %4203 = vmatpush1.msra.mxu0 0.0
      %4204 = vmatprep.subr.mxu0 0.0
      %4205 = vmatpush1.msra.mxu0 0.0
      %4206 = vmatprep.subr.mxu0 0.0
      %4207 = vmatpush1.msra.mxu0 0.0
      %4208 = vmatprep.subr.mxu0 0.0
      %4209 = vmatpush1.msra.mxu0 %v4176
      %4210 = vmatprep.subr.mxu0 0.0
      %4211 = vmatpush2.msra.mxu0 0.0
      %4212 = vmatprep.subr.mxu0 0.0
      %4213 = vmatpush2.msra.mxu0 0.0
      %4214 = vmatprep.subr.mxu0 0.0
      %4215 = vmatpush2.msra.mxu0 0.0
      %4216 = vmatprep.subr.mxu0 0.0
      %4217 = vmatpush2.msra.mxu0 0.0
      %4218 = vmatprep.subr.mxu0 0.0
      %4219 = vmatpush2.msra.mxu0 0.0
      %4220 = vmatprep.subr.mxu0 0.0
      %4221 = vmatpush2.msra.mxu0 0.0
      %4222 = vmatprep.subr.mxu0 0.0
      %4223 = vmatpush2.msra.mxu0 0.0
      %4224 = vmatprep.subr.mxu0 0.0
      %4225 = vmatpush2.msra.mxu0 0.0
      %4226 = vmatprep.subr.mxu0 0.0
      %4227 = vmatpush2.msra.mxu0 0.0
      %4228 = vmatprep.subr.mxu0 0.0
      %4229 = vmatpush2.msra.mxu0 0.0
      %4230 = vmatprep.subr.mxu0 0.0
      %4231 = vmatpush2.msra.mxu0 0.0
      %4232 = vmatprep.subr.mxu0 0.0
      %4233 = vmatpush2.msra.mxu0 0.0
      %4234 = vmatprep.subr.mxu0 0.0
      %4235 = vmatpush2.msra.mxu0 0.0
      %4236 = vmatprep.subr.mxu0 0.0
      %4237 = vmatpush2.msra.mxu0 0.0
      %4238 = vmatprep.subr.mxu0 0.0
      %4239 = vmatpush2.msra.mxu0 0.0
      %4240 = vmatprep.subr.mxu0 0.0
      %4241 = vmatpush2.msra.mxu0 0.0
      %4242 = vmatprep.mubr.f32.mxu0 0.0
      %4243 = vmatmul.mubr.f32.gmra.mxu0 %v4152
      %v4244 = vpop.f32.mrf.mxu0
      %v4245 = vadd.f32 0.0, %v4244
      %v4246 = vpop.f32.mrf.mxu0
      %4247 = vmatprep.mubr.f32.mxu0 0.0
      %4248 = vmatmul.mubr.f32.gmra.mxu0 %v4155
      %v4249 = vpop.f32.mrf.mxu0
      %v4250 = vadd.f32 0.0, %v4249
      %v4251 = vpop.f32.mrf.mxu0
      %4252 = vmatprep.mubr.f32.mxu0 0.0
      %4253 = vmatmul.mubr.f32.gmra.mxu0 %v4158
      %v4254 = vpop.f32.mrf.mxu0
      %v4255 = vadd.f32 0.0, %v4254
      %v4256 = vpop.f32.mrf.mxu0
      %4257 = vmatprep.mubr.f32.mxu0 0.0
      %4258 = vmatmul.mubr.f32.gmra.mxu0 %v4161
      %v4259 = vpop.f32.mrf.mxu0
      %v4260 = vadd.f32 0.0, %v4259
      %v4261 = vpop.f32.mrf.mxu0
      %4262 = vmatprep.mubr.f32.mxu0 0.0
      %4263 = vmatmul.mubr.f32.gmra.mxu0 %v4164
      %v4264 = vpop.f32.mrf.mxu0
      %v4265 = vadd.f32 0.0, %v4264
      %v4266 = vpop.f32.mrf.mxu0
      %4267 = vmatprep.mubr.f32.mxu0 0.0
      %4268 = vmatmul.mubr.f32.gmra.mxu0 %v4167
      %v4269 = vpop.f32.mrf.mxu0
      %v4270 = vadd.f32 0.0, %v4269
      %v4271 = vpop.f32.mrf.mxu0
      %4272 = vmatprep.mubr.f32.mxu0 0.0
      %4273 = vmatmul.mubr.f32.gmra.mxu0 %v4170
      %v4274 = vpop.f32.mrf.mxu0
      %v4275 = vadd.f32 0.0, %v4274
      %v4276 = vpop.f32.mrf.mxu0
      %4277 = vmatprep.mubr.f32.mxu0 0.0
      %4278 = vmatmul.mubr.f32.gmra.mxu0 %v4173
      %v4279 = vpop.f32.mrf.mxu0
      %v4280 = vadd.f32 0.0, %v4279
      %v4281 = vpop.f32.mrf.mxu0
      %4282 = vdwg.mxu0
      %v4284 = vsel %vm476, %v3270, 0
      %v4287 = vsel %vm476, %v3275, 0
      %v4290 = vsel %vm476, %v3280, 0
      %v4293 = vsel %vm476, %v3285, 0
      %v4296 = vsel %vm476, %v3290, 0
      %v4299 = vsel %vm476, %v3295, 0
      %v4302 = vsel %vm476, %v3300, 0
      %v4305 = vsel %vm476, %v3305, 0
      %v4308 = vsel %vm3646, %v3619, 0
      %4310 = vmatprep.subr.mxu0 0.0
      %4311 = vmatpush1.msra.mxu0 0.0
      %4312 = vmatprep.subr.mxu0 0.0
      %4313 = vmatpush1.msra.mxu0 0.0
      %4314 = vmatprep.subr.mxu0 0.0
      %4315 = vmatpush1.msra.mxu0 0.0
      %4316 = vmatprep.subr.mxu0 0.0
      %4317 = vmatpush1.msra.mxu0 0.0
      %4318 = vmatprep.subr.mxu0 0.0
      %4319 = vmatpush1.msra.mxu0 0.0
      %4320 = vmatprep.subr.mxu0 0.0
      %4321 = vmatpush1.msra.mxu0 0.0
      %4322 = vmatprep.subr.mxu0 0.0
      %4323 = vmatpush1.msra.mxu0 0.0
      %4324 = vmatprep.subr.mxu0 0.0
      %4325 = vmatpush1.msra.mxu0 0.0
      %4326 = vmatprep.subr.mxu0 0.0
      %4327 = vmatpush1.msra.mxu0 0.0
      %4328 = vmatprep.subr.mxu0 0.0
      %4329 = vmatpush1.msra.mxu0 0.0
      %4330 = vmatprep.subr.mxu0 0.0
      %4331 = vmatpush1.msra.mxu0 0.0
      %4332 = vmatprep.subr.mxu0 0.0
      %4333 = vmatpush1.msra.mxu0 0.0
      %4334 = vmatprep.subr.mxu0 0.0
      %4335 = vmatpush1.msra.mxu0 0.0
      %4336 = vmatprep.subr.mxu0 0.0
      %4337 = vmatpush1.msra.mxu0 0.0
      %4338 = vmatprep.subr.mxu0 0.0
      %4339 = vmatpush1.msra.mxu0 0.0
      %4340 = vmatprep.subr.mxu0 0.0
      %4341 = vmatpush1.msra.mxu0 %v4308
      %4342 = vmatprep.subr.mxu0 0.0
      %4343 = vmatpush2.msra.mxu0 0.0
      %4344 = vmatprep.subr.mxu0 0.0
      %4345 = vmatpush2.msra.mxu0 0.0
      %4346 = vmatprep.subr.mxu0 0.0
      %4347 = vmatpush2.msra.mxu0 0.0
      %4348 = vmatprep.subr.mxu0 0.0
      %4349 = vmatpush2.msra.mxu0 0.0
      %4350 = vmatprep.subr.mxu0 0.0
      %4351 = vmatpush2.msra.mxu0 0.0
      %4352 = vmatprep.subr.mxu0 0.0
      %4353 = vmatpush2.msra.mxu0 0.0
      %4354 = vmatprep.subr.mxu0 0.0
      %4355 = vmatpush2.msra.mxu0 0.0
      %4356 = vmatprep.subr.mxu0 0.0
      %4357 = vmatpush2.msra.mxu0 0.0
      %4358 = vmatprep.subr.mxu0 0.0
      %4359 = vmatpush2.msra.mxu0 0.0
      %4360 = vmatprep.subr.mxu0 0.0
      %4361 = vmatpush2.msra.mxu0 0.0
      %4362 = vmatprep.subr.mxu0 0.0
      %4363 = vmatpush2.msra.mxu0 0.0
      %4364 = vmatprep.subr.mxu0 0.0
      %4365 = vmatpush2.msra.mxu0 0.0
      %4366 = vmatprep.subr.mxu0 0.0
      %4367 = vmatpush2.msra.mxu0 0.0
      %4368 = vmatprep.subr.mxu0 0.0
      %4369 = vmatpush2.msra.mxu0 0.0
      %4370 = vmatprep.subr.mxu0 0.0
      %4371 = vmatpush2.msra.mxu0 0.0
      %4372 = vmatprep.subr.mxu0 0.0
      %4373 = vmatpush2.msra.mxu0 0.0
      %4374 = vmatprep.mubr.f32.mxu0 0.0
      %4375 = vmatmul.mubr.f32.gmra.mxu0 %v4284
      %v4376 = vpop.f32.mrf.mxu0
      %v4377 = vadd.f32 0.0, %v4376
      %v4378 = vpop.f32.mrf.mxu0
      %4379 = vmatprep.mubr.f32.mxu0 0.0
      %4380 = vmatmul.mubr.f32.gmra.mxu0 %v4287
      %v4381 = vpop.f32.mrf.mxu0
      %v4382 = vadd.f32 0.0, %v4381
      %v4383 = vpop.f32.mrf.mxu0
      %4384 = vmatprep.mubr.f32.mxu0 0.0
      %4385 = vmatmul.mubr.f32.gmra.mxu0 %v4290
      %v4386 = vpop.f32.mrf.mxu0
      %v4387 = vadd.f32 0.0, %v4386
      %v4388 = vpop.f32.mrf.mxu0
      %4389 = vmatprep.mubr.f32.mxu0 0.0
      %4390 = vmatmul.mubr.f32.gmra.mxu0 %v4293
      %v4391 = vpop.f32.mrf.mxu0
      %v4392 = vadd.f32 0.0, %v4391
      %v4393 = vpop.f32.mrf.mxu0
      %4394 = vmatprep.mubr.f32.mxu0 0.0
      %4395 = vmatmul.mubr.f32.gmra.mxu0 %v4296
      %v4396 = vpop.f32.mrf.mxu0
      %v4397 = vadd.f32 0.0, %v4396
      %v4398 = vpop.f32.mrf.mxu0
      %4399 = vmatprep.mubr.f32.mxu0 0.0
      %4400 = vmatmul.mubr.f32.gmra.mxu0 %v4299
      %v4401 = vpop.f32.mrf.mxu0
      %v4402 = vadd.f32 0.0, %v4401
      %v4403 = vpop.f32.mrf.mxu0
      %4404 = vmatprep.mubr.f32.mxu0 0.0
      %4405 = vmatmul.mubr.f32.gmra.mxu0 %v4302
      %v4406 = vpop.f32.mrf.mxu0
      %v4407 = vadd.f32 0.0, %v4406
      %v4408 = vpop.f32.mrf.mxu0
      %4409 = vmatprep.mubr.f32.mxu0 0.0
      %4410 = vmatmul.mubr.f32.gmra.mxu0 %v4305
      %v4411 = vpop.f32.mrf.mxu0
      %v4412 = vadd.f32 0.0, %v4411
      %v4413 = vpop.f32.mrf.mxu0
      %4414 = vdwg.mxu0
      %v4416 = vsel %vm476, %v3423, 0
      %v4419 = vsel %vm476, %v3428, 0
      %v4422 = vsel %vm476, %v3433, 0
      %v4425 = vsel %vm476, %v3438, 0
      %v4428 = vsel %vm476, %v3443, 0
      %v4431 = vsel %vm476, %v3448, 0
      %v4434 = vsel %vm476, %v3453, 0
      %v4437 = vsel %vm476, %v3458, 0
      %v4440 = vsel %vm3646, %v3620, 0
      %4442 = vmatprep.subr.mxu0 0.0
      %4443 = vmatpush1.msra.mxu0 0.0
      %4444 = vmatprep.subr.mxu0 0.0
      %4445 = vmatpush1.msra.mxu0 0.0
      %4446 = vmatprep.subr.mxu0 0.0
      %4447 = vmatpush1.msra.mxu0 0.0
      %4448 = vmatprep.subr.mxu0 0.0
      %4449 = vmatpush1.msra.mxu0 0.0
      %4450 = vmatprep.subr.mxu0 0.0
      %4451 = vmatpush1.msra.mxu0 0.0
      %4452 = vmatprep.subr.mxu0 0.0
      %4453 = vmatpush1.msra.mxu0 0.0
      %4454 = vmatprep.subr.mxu0 0.0
      %4455 = vmatpush1.msra.mxu0 0.0
      %4456 = vmatprep.subr.mxu0 0.0
      %4457 = vmatpush1.msra.mxu0 0.0
      %4458 = vmatprep.subr.mxu0 0.0
      %4459 = vmatpush1.msra.mxu0 0.0
      %4460 = vmatprep.subr.mxu0 0.0
      %4461 = vmatpush1.msra.mxu0 0.0
      %4462 = vmatprep.subr.mxu0 0.0
      %4463 = vmatpush1.msra.mxu0 0.0
      %4464 = vmatprep.subr.mxu0 0.0
      %4465 = vmatpush1.msra.mxu0 0.0
      %4466 = vmatprep.subr.mxu0 0.0
      %4467 = vmatpush1.msra.mxu0 0.0
      %4468 = vmatprep.subr.mxu0 0.0
      %4469 = vmatpush1.msra.mxu0 0.0
      %4470 = vmatprep.subr.mxu0 0.0
      %4471 = vmatpush1.msra.mxu0 0.0
      %4472 = vmatprep.subr.mxu0 0.0
      %4473 = vmatpush1.msra.mxu0 %v4440
      %4474 = vmatprep.subr.mxu0 0.0
      %4475 = vmatpush2.msra.mxu0 0.0
      %4476 = vmatprep.subr.mxu0 0.0
      %4477 = vmatpush2.msra.mxu0 0.0
      %4478 = vmatprep.subr.mxu0 0.0
      %4479 = vmatpush2.msra.mxu0 0.0
      %4480 = vmatprep.subr.mxu0 0.0
      %4481 = vmatpush2.msra.mxu0 0.0
      %4482 = vmatprep.subr.mxu0 0.0
      %4483 = vmatpush2.msra.mxu0 0.0
      %4484 = vmatprep.subr.mxu0 0.0
      %4485 = vmatpush2.msra.mxu0 0.0
      %4486 = vmatprep.subr.mxu0 0.0
      %4487 = vmatpush2.msra.mxu0 0.0
      %4488 = vmatprep.subr.mxu0 0.0
      %4489 = vmatpush2.msra.mxu0 0.0
      %4490 = vmatprep.subr.mxu0 0.0
      %4491 = vmatpush2.msra.mxu0 0.0
      %4492 = vmatprep.subr.mxu0 0.0
      %4493 = vmatpush2.msra.mxu0 0.0
      %4494 = vmatprep.subr.mxu0 0.0
      %4495 = vmatpush2.msra.mxu0 0.0
      %4496 = vmatprep.subr.mxu0 0.0
      %4497 = vmatpush2.msra.mxu0 0.0
      %4498 = vmatprep.subr.mxu0 0.0
      %4499 = vmatpush2.msra.mxu0 0.0
      %4500 = vmatprep.subr.mxu0 0.0
      %4501 = vmatpush2.msra.mxu0 0.0
      %4502 = vmatprep.subr.mxu0 0.0
      %4503 = vmatpush2.msra.mxu0 0.0
      %4504 = vmatprep.subr.mxu0 0.0
      %4505 = vmatpush2.msra.mxu0 0.0
      %4506 = vmatprep.mubr.f32.mxu0 0.0
      %4507 = vmatmul.mubr.f32.gmra.mxu0 %v4416
      %v4508 = vpop.f32.mrf.mxu0
      %v4509 = vadd.f32 0.0, %v4508
      %v4510 = vpop.f32.mrf.mxu0
      %4511 = vmatprep.mubr.f32.mxu0 0.0
      %4512 = vmatmul.mubr.f32.gmra.mxu0 %v4419
      %v4513 = vpop.f32.mrf.mxu0
      %v4514 = vadd.f32 0.0, %v4513
      %v4515 = vpop.f32.mrf.mxu0
      %4516 = vmatprep.mubr.f32.mxu0 0.0
      %4517 = vmatmul.mubr.f32.gmra.mxu0 %v4422
      %v4518 = vpop.f32.mrf.mxu0
      %v4519 = vadd.f32 0.0, %v4518
      %v4520 = vpop.f32.mrf.mxu0
      %4521 = vmatprep.mubr.f32.mxu0 0.0
      %4522 = vmatmul.mubr.f32.gmra.mxu0 %v4425
      %v4523 = vpop.f32.mrf.mxu0
      %v4524 = vadd.f32 0.0, %v4523
      %v4525 = vpop.f32.mrf.mxu0
      %4526 = vmatprep.mubr.f32.mxu0 0.0
      %4527 = vmatmul.mubr.f32.gmra.mxu0 %v4428
      %v4528 = vpop.f32.mrf.mxu0
      %v4529 = vadd.f32 0.0, %v4528
      %v4530 = vpop.f32.mrf.mxu0
      %4531 = vmatprep.mubr.f32.mxu0 0.0
      %4532 = vmatmul.mubr.f32.gmra.mxu0 %v4431
      %v4533 = vpop.f32.mrf.mxu0
      %v4534 = vadd.f32 0.0, %v4533
      %v4535 = vpop.f32.mrf.mxu0
      %4536 = vmatprep.mubr.f32.mxu0 0.0
      %4537 = vmatmul.mubr.f32.gmra.mxu0 %v4434
      %v4538 = vpop.f32.mrf.mxu0
      %v4539 = vadd.f32 0.0, %v4538
      %v4540 = vpop.f32.mrf.mxu0
      %4541 = vmatprep.mubr.f32.mxu0 0.0
      %4542 = vmatmul.mubr.f32.gmra.mxu0 %v4437
      %v4543 = vpop.f32.mrf.mxu0
      %v4544 = vadd.f32 0.0, %v4543
      %v4545 = vpop.f32.mrf.mxu0
      %4546 = vdwg.mxu0
      %v4548 = vsel %vm476, %v3576, 0
      %v4551 = vsel %vm476, %v3581, 0
      %v4554 = vsel %vm476, %v3586, 0
      %v4557 = vsel %vm476, %v3591, 0
      %v4560 = vsel %vm476, %v3596, 0
      %v4563 = vsel %vm476, %v3601, 0
      %v4566 = vsel %vm476, %v3606, 0
      %v4569 = vsel %vm476, %v3611, 0
      %v4572 = vsel %vm3646, %v3621, 0
      %4574 = vmatprep.subr.mxu0 0.0
      %4575 = vmatpush1.msra.mxu0 0.0
      %4576 = vmatprep.subr.mxu0 0.0
      %4577 = vmatpush1.msra.mxu0 0.0
      %4578 = vmatprep.subr.mxu0 0.0
      %4579 = vmatpush1.msra.mxu0 0.0
      %4580 = vmatprep.subr.mxu0 0.0
      %4581 = vmatpush1.msra.mxu0 0.0
      %4582 = vmatprep.subr.mxu0 0.0
      %4583 = vmatpush1.msra.mxu0 0.0
      %4584 = vmatprep.subr.mxu0 0.0
      %4585 = vmatpush1.msra.mxu0 0.0
      %4586 = vmatprep.subr.mxu0 0.0
      %4587 = vmatpush1.msra.mxu0 0.0
      %4588 = vmatprep.subr.mxu0 0.0
      %4589 = vmatpush1.msra.mxu0 0.0
      %4590 = vmatprep.subr.mxu0 0.0
      %4591 = vmatpush1.msra.mxu0 0.0
      %4592 = vmatprep.subr.mxu0 0.0
      %4593 = vmatpush1.msra.mxu0 0.0
      %4594 = vmatprep.subr.mxu0 0.0
      %4595 = vmatpush1.msra.mxu0 0.0
      %4596 = vmatprep.subr.mxu0 0.0
      %4597 = vmatpush1.msra.mxu0 0.0
      %4598 = vmatprep.subr.mxu0 0.0
      %4599 = vmatpush1.msra.mxu0 0.0
      %4600 = vmatprep.subr.mxu0 0.0
      %4601 = vmatpush1.msra.mxu0 0.0
      %4602 = vmatprep.subr.mxu0 0.0
      %4603 = vmatpush1.msra.mxu0 0.0
      %4604 = vmatprep.subr.mxu0 0.0
      %4605 = vmatpush1.msra.mxu0 %v4572
      %4606 = vmatprep.subr.mxu0 0.0
      %4607 = vmatpush2.msra.mxu0 0.0
      %4608 = vmatprep.subr.mxu0 0.0
      %4609 = vmatpush2.msra.mxu0 0.0
      %4610 = vmatprep.subr.mxu0 0.0
      %4611 = vmatpush2.msra.mxu0 0.0
      %4612 = vmatprep.subr.mxu0 0.0
      %4613 = vmatpush2.msra.mxu0 0.0
      %4614 = vmatprep.subr.mxu0 0.0
      %4615 = vmatpush2.msra.mxu0 0.0
      %4616 = vmatprep.subr.mxu0 0.0
      %4617 = vmatpush2.msra.mxu0 0.0
      %4618 = vmatprep.subr.mxu0 0.0
      %4619 = vmatpush2.msra.mxu0 0.0
      %4620 = vmatprep.subr.mxu0 0.0
      %4621 = vmatpush2.msra.mxu0 0.0
      %4622 = vmatprep.subr.mxu0 0.0
      %4623 = vmatpush2.msra.mxu0 0.0
      %4624 = vmatprep.subr.mxu0 0.0
      %4625 = vmatpush2.msra.mxu0 0.0
      %4626 = vmatprep.subr.mxu0 0.0
      %4627 = vmatpush2.msra.mxu0 0.0
      %4628 = vmatprep.subr.mxu0 0.0
      %4629 = vmatpush2.msra.mxu0 0.0
      %4630 = vmatprep.subr.mxu0 0.0
      %4631 = vmatpush2.msra.mxu0 0.0
      %4632 = vmatprep.subr.mxu0 0.0
      %4633 = vmatpush2.msra.mxu0 0.0
      %4634 = vmatprep.subr.mxu0 0.0
      %4635 = vmatpush2.msra.mxu0 0.0
      %4636 = vmatprep.subr.mxu0 0.0
      %4637 = vmatpush2.msra.mxu0 0.0
      %4638 = vmatprep.mubr.f32.mxu0 0.0
      %4639 = vmatmul.mubr.f32.gmra.mxu0 %v4548
      %v4640 = vpop.f32.mrf.mxu0
      %v4641 = vadd.f32 0.0, %v4640
      %v4642 = vpop.f32.mrf.mxu0
      %4643 = vmatprep.mubr.f32.mxu0 0.0
      %4644 = vmatmul.mubr.f32.gmra.mxu0 %v4551
      %v4645 = vpop.f32.mrf.mxu0
      %v4646 = vadd.f32 0.0, %v4645
      %v4647 = vpop.f32.mrf.mxu0
      %4648 = vmatprep.mubr.f32.mxu0 0.0
      %4649 = vmatmul.mubr.f32.gmra.mxu0 %v4554
      %v4650 = vpop.f32.mrf.mxu0
      %v4651 = vadd.f32 0.0, %v4650
      %v4652 = vpop.f32.mrf.mxu0
      %4653 = vmatprep.mubr.f32.mxu0 0.0
      %4654 = vmatmul.mubr.f32.gmra.mxu0 %v4557
      %v4655 = vpop.f32.mrf.mxu0
      %v4656 = vadd.f32 0.0, %v4655
      %v4657 = vpop.f32.mrf.mxu0
      %4658 = vmatprep.mubr.f32.mxu0 0.0
      %4659 = vmatmul.mubr.f32.gmra.mxu0 %v4560
      %v4660 = vpop.f32.mrf.mxu0
      %v4661 = vadd.f32 0.0, %v4660
      %v4662 = vpop.f32.mrf.mxu0
      %4663 = vmatprep.mubr.f32.mxu0 0.0
      %4664 = vmatmul.mubr.f32.gmra.mxu0 %v4563
      %v4665 = vpop.f32.mrf.mxu0
      %v4666 = vadd.f32 0.0, %v4665
      %v4667 = vpop.f32.mrf.mxu0
      %4668 = vmatprep.mubr.f32.mxu0 0.0
      %4669 = vmatmul.mubr.f32.gmra.mxu0 %v4566
      %v4670 = vpop.f32.mrf.mxu0
      %v4671 = vadd.f32 0.0, %v4670
      %v4672 = vpop.f32.mrf.mxu0
      %4673 = vmatprep.mubr.f32.mxu0 0.0
      %4674 = vmatmul.mubr.f32.gmra.mxu0 %v4569
      %v4675 = vpop.f32.mrf.mxu0
      %v4676 = vadd.f32 0.0, %v4675
      %v4677 = vpop.f32.mrf.mxu0
      %4678 = vdwg.mxu0
      %v4679 = vsel %vm210, %v3717, 0.0
      %v4680 = vsel %vm210, %v3849, 0.0
      %v4681 = vadd.f32 %v4679, %v4680
      %v4682 = vsel %vm210, %v3981, 0.0
      %v4683 = vadd.f32 %v4681, %v4682
      %v4684 = vsel %vm210, %v4113, 0.0
      %v4685 = vadd.f32 %v4683, %v4684
      %v4686 = vsel %vm210, %v4245, 0.0
      %v4687 = vadd.f32 %v4685, %v4686
      %v4688 = vsel %vm210, %v4377, 0.0
      %v4689 = vadd.f32 %v4687, %v4688
      %v4690 = vsel %vm210, %v4509, 0.0
      %v4691 = vadd.f32 %v4689, %v4690
      %v4692 = vsel %vm210, %v4641, 0.0
      %v4693 = vadd.f32 %v4691, %v4692
      %v4694 = vsel %vm210, %v3722, 0.0
      %v4695 = vsel %vm210, %v3854, 0.0
      %v4696 = vadd.f32 %v4694, %v4695
      %v4697 = vsel %vm210, %v3986, 0.0
      %v4698 = vadd.f32 %v4696, %v4697
      %v4699 = vsel %vm210, %v4118, 0.0
      %v4700 = vadd.f32 %v4698, %v4699
      %v4701 = vsel %vm210, %v4250, 0.0
      %v4702 = vadd.f32 %v4700, %v4701
      %v4703 = vsel %vm210, %v4382, 0.0
      %v4704 = vadd.f32 %v4702, %v4703
      %v4705 = vsel %vm210, %v4514, 0.0
      %v4706 = vadd.f32 %v4704, %v4705
      %v4707 = vsel %vm210, %v4646, 0.0
      %v4708 = vadd.f32 %v4706, %v4707
      %v4709 = vsel %vm210, %v3727, 0.0
      %v4710 = vsel %vm210, %v3859, 0.0
      %v4711 = vadd.f32 %v4709, %v4710
      %v4712 = vsel %vm210, %v3991, 0.0
      %v4713 = vadd.f32 %v4711, %v4712
      %v4714 = vsel %vm210, %v4123, 0.0
      %v4715 = vadd.f32 %v4713, %v4714
      %v4716 = vsel %vm210, %v4255, 0.0
      %v4717 = vadd.f32 %v4715, %v4716
      %v4718 = vsel %vm210, %v4387, 0.0
      %v4719 = vadd.f32 %v4717, %v4718
      %v4720 = vsel %vm210, %v4519, 0.0
      %v4721 = vadd.f32 %v4719, %v4720
      %v4722 = vsel %vm210, %v4651, 0.0
      %v4723 = vadd.f32 %v4721, %v4722
      %v4724 = vsel %vm210, %v3732, 0.0
      %v4725 = vsel %vm210, %v3864, 0.0
      %v4726 = vadd.f32 %v4724, %v4725
      %v4727 = vsel %vm210, %v3996, 0.0
      %v4728 = vadd.f32 %v4726, %v4727
      %v4729 = vsel %vm210, %v4128, 0.0
      %v4730 = vadd.f32 %v4728, %v4729
      %v4731 = vsel %vm210, %v4260, 0.0
      %v4732 = vadd.f32 %v4730, %v4731
      %v4733 = vsel %vm210, %v4392, 0.0
      %v4734 = vadd.f32 %v4732, %v4733
      %v4735 = vsel %vm210, %v4524, 0.0
      %v4736 = vadd.f32 %v4734, %v4735
      %v4737 = vsel %vm210, %v4656, 0.0
      %v4738 = vadd.f32 %v4736, %v4737
      %v4739 = vsel %vm210, %v3737, 0.0
      %v4740 = vsel %vm210, %v3869, 0.0
      %v4741 = vadd.f32 %v4739, %v4740
      %v4742 = vsel %vm210, %v4001, 0.0
      %v4743 = vadd.f32 %v4741, %v4742
      %v4744 = vsel %vm210, %v4133, 0.0
      %v4745 = vadd.f32 %v4743, %v4744
      %v4746 = vsel %vm210, %v4265, 0.0
      %v4747 = vadd.f32 %v4745, %v4746
      %v4748 = vsel %vm210, %v4397, 0.0
      %v4749 = vadd.f32 %v4747, %v4748
      %v4750 = vsel %vm210, %v4529, 0.0
      %v4751 = vadd.f32 %v4749, %v4750
      %v4752 = vsel %vm210, %v4661, 0.0
      %v4753 = vadd.f32 %v4751, %v4752
      %v4754 = vsel %vm210, %v3742, 0.0
      %v4755 = vsel %vm210, %v3874, 0.0
      %v4756 = vadd.f32 %v4754, %v4755
      %v4757 = vsel %vm210, %v4006, 0.0
      %v4758 = vadd.f32 %v4756, %v4757
      %v4759 = vsel %vm210, %v4138, 0.0
      %v4760 = vadd.f32 %v4758, %v4759
      %v4761 = vsel %vm210, %v4270, 0.0
      %v4762 = vadd.f32 %v4760, %v4761
      %v4763 = vsel %vm210, %v4402, 0.0
      %v4764 = vadd.f32 %v4762, %v4763
      %v4765 = vsel %vm210, %v4534, 0.0
      %v4766 = vadd.f32 %v4764, %v4765
      %v4767 = vsel %vm210, %v4666, 0.0
      %v4768 = vadd.f32 %v4766, %v4767
      %v4769 = vsel %vm210, %v3747, 0.0
      %v4770 = vsel %vm210, %v3879, 0.0
      %v4771 = vadd.f32 %v4769, %v4770
      %v4772 = vsel %vm210, %v4011, 0.0
      %v4773 = vadd.f32 %v4771, %v4772
      %v4774 = vsel %vm210, %v4143, 0.0
      %v4775 = vadd.f32 %v4773, %v4774
      %v4776 = vsel %vm210, %v4275, 0.0
      %v4777 = vadd.f32 %v4775, %v4776
      %v4778 = vsel %vm210, %v4407, 0.0
      %v4779 = vadd.f32 %v4777, %v4778
      %v4780 = vsel %vm210, %v4539, 0.0
      %v4781 = vadd.f32 %v4779, %v4780
      %v4782 = vsel %vm210, %v4671, 0.0
      %v4783 = vadd.f32 %v4781, %v4782
      %v4784 = vsel %vm210, %v3752, 0.0
      %v4785 = vsel %vm210, %v3884, 0.0
      %v4786 = vadd.f32 %v4784, %v4785
      %v4787 = vsel %vm210, %v4016, 0.0
      %v4788 = vadd.f32 %v4786, %v4787
      %v4789 = vsel %vm210, %v4148, 0.0
      %v4790 = vadd.f32 %v4788, %v4789
      %v4791 = vsel %vm210, %v4280, 0.0
      %v4792 = vadd.f32 %v4790, %v4791
      %v4793 = vsel %vm210, %v4412, 0.0
      %v4794 = vadd.f32 %v4792, %v4793
      %v4795 = vsel %vm210, %v4544, 0.0
      %v4796 = vadd.f32 %v4794, %v4795
      %v4797 = vsel %vm210, %v4676, 0.0
      %v4798 = vadd.f32 %v4796, %v4797
      %v4799 = vld [vmem:[%s3] sm:$0x1]
      %v4801 = vlaneseq
      %v4802 = vshrl.u32 %v4801, 7
      %v4803 = vsub.s32 0, %v4802
      %v4804 = vrot.slane %v4799, %v4803
      %v4806 = vadd.f32 %v4693, %v4804
      %v4807 = vadd.f32 %v4708, %v4804
      %v4808 = vadd.f32 %v4723, %v4804
      %v4809 = vadd.f32 %v4738, %v4804
      %v4810 = vadd.f32 %v4753, %v4804
      %v4811 = vadd.f32 %v4768, %v4804
      %v4812 = vadd.f32 %v4783, %v4804
      %v4813 = vadd.f32 %v4798, %v4804
      %4814 = vst.msk [vmem:[%s197] sm:$0xff] %vm210, %v4806
      %4815 = vst.msk [vmem:[%s197 + $0x8] sm:$0xff] %vm210, %v4807
      %4816 = vst.msk [vmem:[%s197 + $0x10] sm:$0xff] %vm210, %v4808
      %4817 = vst.msk [vmem:[%s197 + $0x18] sm:$0xff] %vm210, %v4809
      %4818 = vst.msk [vmem:[%s197 + $0x20] sm:$0xff] %vm210, %v4810
      %4819 = vst.msk [vmem:[%s197 + $0x28] sm:$0xff] %vm210, %v4811
      %4820 = vst.msk [vmem:[%s197 + $0x30] sm:$0xff] %vm210, %v4812
      %4821 = vst.msk [vmem:[%s197 + $0x38] sm:$0xff] %vm210, %v4813
      %p4822 = scmp.lt.s32.totalorder %s15, 1
      %s4823 = scalar_select %p4822, %s15, 1
      %s4824 = smul.addr %s4823, 8
      %s4825 = smul.addr %s4824, 8
      %s4826 = scalar_lea.vmem %s4, %s4825
      // Predicated region
      $region37: #{tpu_custom_call.1} parent=35 // pred_check
        %p4827 = pneg %p122
      $region38: #{tpu_custom_call.1} parent=35 // pred_check_branch
        %4829 = sbr.rel (%p4827) target = $region40
      $region39: #{tpu_custom_call.1} parent=35 // pred_region
        _
      $region40: #{tpu_custom_call.1} parent=35 // pred_fallthru
        _
    $region36: #{tpu_custom_call.1} parent=5 // pred_fallthru
      _
    %p4830 = scmp.le.s32.totalorder 2, %s10
    // Predicated region
    $region41: #{tpu_custom_call.1} parent=5 // pred_check
      %p4831 = pneg %p4830
    $region42: #{tpu_custom_call.1} parent=5 // pred_check_branch
      %4833 = sbr.rel (%p4831) target = $region44
    $region43: #{tpu_custom_call.1} parent=5 // pred_region
      %s4834 = ssub.s32 %s10, 2
      // Predicated region
      $region45: #{tpu_custom_call.1} parent=43 // pred_check
        %p4835 = pneg %p128
      $region46: #{tpu_custom_call.1} parent=43 // pred_check_branch
        %4837 = sbr.rel (%p4835) target = $region48
      $region47: #{tpu_custom_call.1} parent=43 // pred_region
        %p4838 = scmp.lt.s32.totalorder %s16, 1
        %s4839 = scalar_select %p4838, %s16, 1
        %s4840 = smul.addr %s4839, 8
        %s4841 = smul.addr %s4840, 8
        %s4842 = scalar_lea.vmem %s4, %s4841
      $region48: #{tpu_custom_call.1} parent=43 // pred_fallthru
        _
    $region44: #{tpu_custom_call.1} parent=5 // pred_fallthru
      _
  $region6: #{tpu_custom_call.1} parent=0 // loop_footer
    %s14 = sadd.s32 1, %s10
  $region7: #{tpu_custom_call.1} parent=0 // loop_footer_branch
    %9 = sbr.rel target = $region3
  $region8: #{tpu_custom_call.1} parent=0 // loop_exit
    _

</llo_original>
